<compile_context>
chip_gen: v7x
topology: tpu7x:2x2x1
jax: 0.10.0
libtpu: 0.0.40
codegen_flags: <defaults>
</compile_context>

<pallas_src>
import functools

import numpy as np

import jax
import jax.numpy as jnp
from jax.experimental import pallas as pl
from jax.experimental.pallas import tpu as pltpu


def _round_up(x, m):
    return ((x + m - 1) // m) * m


# -----------------------------------------------------------------------------
# Kernel 1: fused conv1(3x3, Cin=1)+BN+ReLU + conv2(3x3)+BN+ReLU.
# Input is transposed to (time, mel), zero padded, and pre-sliced into halo'd
# time chunks.  Both convolutions are banded 2-D matmuls (structure baked into
# the weights host-side), so the kernel only issues lane-dense VPU passes and
# MXU dots, and the output is written time-major and lane-dense.
# -----------------------------------------------------------------------------
def _fused_conv_kernel(xh_ref, g_ref, b1_ref, h_ref, b2_ref, out_ref, *,
                       n_mels, cf, c2, mt, tct, t_true):
    # xh_ref : (1, 1, tct+4, M+4) f32   halo'd (time, mel) input chunk
    # g_ref  : (3, M+4, (M+2)*Cf) bf16  banded conv1 weights (one per kw tap)
    # b1_ref : (1, (M+2)*Cf)      f32   mel-tiled conv1 bias (0 at mel borders)
    # h_ref  : (3, (mt+2)*Cf, mt*C2) bf16  banded conv2 weights per kw tap
    # b2_ref : (1, mt*C2)         f32
    # out_ref: (tct, M*C2)        bf16  lane-dense, time-major output block
    j = pl.program_id(1)
    ta = tct + 2
    me = n_mels + 2

    xl = xh_ref[0, 0].astype(jnp.bfloat16)              # (tct+4, M+4)

    # ---- conv1 + BN + ReLU: 3 banded MXU matmuls over the padded-mel axis ----
    acc1 = jnp.zeros((ta, me * cf), jnp.float32)
    for kw in range(3):
        acc1 += jnp.dot(xl[kw:kw + ta, :], g_ref[kw],
                        preferred_element_type=jnp.float32)
    y1 = jnp.maximum(acc1 + b1_ref[...], 0.0)

    # Zero rows outside the true time range (this reproduces conv2's zero
    # padding of conv1's output in time; mel borders are zeroed via G / b1).
    row = jax.lax.broadcasted_iota(jnp.int32, (ta, 1), 0) + j * tct
    y1 = jnp.where((row >= 1) & (row <= t_true), y1, 0.0)
    y1 = y1.astype(jnp.bfloat16)

    # ---- conv2 + BN + ReLU: banded MXU matmuls per mel tile (K=(mt+2)*Cf) ----
    n_tiles = n_mels // mt
    wd = (mt + 2) * cf
    for mi in range(n_tiles):
        col0 = mi * mt * cf
        acc2 = jnp.zeros((tct, mt * c2), jnp.float32)
        for kw in range(3):
            acc2 += jnp.dot(y1[kw:kw + tct, col0:col0 + wd], h_ref[kw],
                            preferred_element_type=jnp.float32)
        y2 = jnp.maximum(acc2 + b2_ref[...], 0.0)
        out_ref[:, mi * mt * c2:(mi + 1) * mt * c2] = y2.astype(out_ref.dtype)


def fused_conv(xh, g, b1_t, h, b2_t, *, n_mels, c2, mt, t_true):
    # xh: (B, nct, tct+4, M+4) f32 -> (nct*tct, B * n_mels * c2) bf16
    bsz, nct, tp, mp4 = xh.shape
    tct = tp - 4
    cf = g.shape[2] // (n_mels + 2)
    t_conv = nct * tct
    d_out = n_mels * c2
    kernel = functools.partial(_fused_conv_kernel, n_mels=n_mels, cf=cf,
                               c2=c2, mt=mt, tct=tct, t_true=t_true)
    return pl.pallas_call(
        kernel,
        out_shape=jax.ShapeDtypeStruct((t_conv, bsz * d_out), jnp.bfloat16),
        grid=(bsz, nct),
        in_specs=[
            pl.BlockSpec((1, 1, tp, mp4), lambda b, j: (b, j, 0, 0)),
            pl.BlockSpec(g.shape, lambda b, j: (0, 0, 0)),
            pl.BlockSpec(b1_t.shape, lambda b, j: (0, 0)),
            pl.BlockSpec(h.shape, lambda b, j: (0, 0, 0)),
            pl.BlockSpec(b2_t.shape, lambda b, j: (0, 0)),
        ],
        out_specs=pl.BlockSpec((tct, d_out), lambda b, j: (j, b)),
        compiler_params=pltpu.CompilerParams(
            dimension_semantics=("parallel", "parallel")),
    )(xh, g, b1_t, h, b2_t)


# -----------------------------------------------------------------------------
# Kernel 2: tiled matmul + bias (LSTM input projections).  bf16 MXU operands,
# f32 accumulator scratch; operands are padded to tile multiples so arbitrary
# shapes never create giant single blocks or 1-wide grids.
# -----------------------------------------------------------------------------
def _matmul_bias_kernel(x_ref, w_ref, b_ref, o_ref, acc_ref):
    @pl.when(pl.program_id(2) == 0)
    def _():
        acc_ref[...] = jnp.zeros_like(acc_ref)

    acc_ref[...] += jnp.dot(x_ref[...].astype(jnp.bfloat16),
                            w_ref[...].astype(jnp.bfloat16),
                            preferred_element_type=jnp.float32)

    @pl.when(pl.program_id(2) == pl.num_programs(2) - 1)
    def _():
        o_ref[...] = (acc_ref[...] + b_ref[...]).astype(o_ref.dtype)


def matmul_bias(x, w, b, out_dtype=jnp.bfloat16, tm=256, tn=256, tk=512):
    # x: (M, K), w: (K, N) bf16, b: (1, N) f32 -> (M, N) out_dtype
    m, k = x.shape
    _, n = w.shape
    tm = min(tm, _round_up(m, 8))
    tk = min(tk, _round_up(k, 128))
    tn = min(tn, _round_up(n, 128))
    mp, kp, np_ = _round_up(m, tm), _round_up(k, tk), _round_up(n, tn)
    if (mp, kp) != (m, k):
        x = jnp.pad(x, ((0, mp - m), (0, kp - k)))
    if (kp, np_) != (k, n):
        w = jnp.pad(w, ((0, kp - k), (0, np_ - n)))
    if np_ != n:
        b = jnp.pad(b, ((0, 0), (0, np_ - n)))
    grid = (mp // tm, np_ // tn, kp // tk)
    flops = 2 * mp * np_ * kp
    bytes_accessed = int(mp * kp * x.dtype.itemsize + kp * np_ * 2
                         + mp * np_ * jnp.dtype(out_dtype).itemsize + np_ * 4)
    out = pl.pallas_call(
        _matmul_bias_kernel,
        out_shape=jax.ShapeDtypeStruct((mp, np_), out_dtype),
        grid=grid,
        in_specs=[
            pl.BlockSpec((tm, tk), lambda i, j, kk: (i, kk)),
            pl.BlockSpec((tk, tn), lambda i, j, kk: (kk, j)),
            pl.BlockSpec((1, tn), lambda i, j, kk: (0, j)),
        ],
        out_specs=pl.BlockSpec((tm, tn), lambda i, j, kk: (i, j)),
        scratch_shapes=[pltpu.VMEM((tm, tn), jnp.float32)],
        compiler_params=pltpu.CompilerParams(
            dimension_semantics=("parallel", "parallel", "arbitrary")),
        cost_estimate=pl.CostEstimate(flops=flops, transcendentals=0,
                                      bytes_accessed=bytes_accessed),
    )(x, w, b)
    if (mp, np_) != (m, n):
        out = out[:m, :n]
    return out


# -----------------------------------------------------------------------------
# Kernel 3: bidirectional LSTM recurrence, both directions fused in one loop
# body.  Input projections (x@W_ih + biases) are precomputed (bf16); only the
# (B,H)@(H,4H) recurrent dots + gate math stay serial.  The forward direction
# walks time chunks 0..nc-1, the backward direction walks them (and the steps
# inside each chunk) in reverse via index maps; h/c persist in VMEM scratch.
# Gate order: i, f, g, o (PyTorch).
# -----------------------------------------------------------------------------
def bilstm_recurrence_kernel(gf_ref, gb_ref, whh_ref, of_ref, ob_ref,
                             h_scr, c_scr):
    @pl.when(pl.program_id(0) == 0)
    def _():
        h_scr[...] = jnp.zeros_like(h_scr)
        c_scr[...] = jnp.zeros_like(c_scr)

    tc = gf_ref.shape[0]
    hid = whh_ref.shape[1]
    whh_f = whh_ref[0]                                   # (H, 4H) bf16
    whh_b = whh_ref[1]

    def sig(z):                                          # 1 EUP op per element
        return 0.5 * jnp.tanh(0.5 * z) + 0.5

    def cell(pre, c_prev):
        i_g = sig(pre[:, 0 * hid:1 * hid])
        f_g = sig(pre[:, 1 * hid:2 * hid])
        g_g = jnp.tanh(pre[:, 2 * hid:3 * hid])
        o_g = sig(pre[:, 3 * hid:4 * hid])
        c_new = f_g * c_prev + i_g * g_g
        h_new = o_g * jnp.tanh(c_new)
        return h_new, c_new

    def step(t, carry):
        h_f, c_f, h_b, c_b = carry
        tb = tc - 1 - t
        pre_f = gf_ref[t].astype(jnp.float32) + jnp.dot(
            h_f.astype(jnp.bfloat16), whh_f, preferred_element_type=jnp.float32)
        pre_b = gb_ref[tb].astype(jnp.float32) + jnp.dot(
            h_b.astype(jnp.bfloat16), whh_b, preferred_element_type=jnp.float32)
        h_f, c_f = cell(pre_f, c_f)
        h_b, c_b = cell(pre_b, c_b)
        of_ref[t] = h_f.astype(of_ref.dtype)
        ob_ref[tb] = h_b.astype(ob_ref.dtype)
        return h_f, c_f, h_b, c_b

    init = (h_scr[0], c_scr[0], h_scr[1], c_scr[1])
    h_f, c_f, h_b, c_b = jax.lax.fori_loop(0, tc, step, init)
    h_scr[0] = h_f
    c_scr[0] = c_f
    h_scr[1] = h_b
    c_scr[1] = c_b


def bilstm_layer(gates, whh, tc):
    # gates: (T_r, B, 8H) bf16 (fwd in [:4H], bwd in [4H:]); whh: (2, H, 4H)
    # returns (out_fwd, out_bwd), each (T_r, B, H) bf16.
    t_r, bsz, eight_h = gates.shape
    hid = eight_h // 8
    nc = t_r // tc
    flops = 16 * t_r * bsz * hid * hid
    trans = 10 * t_r * bsz * hid
    bytes_accessed = int(gates.size * 2 + whh.size * 2 + 2 * t_r * bsz * hid * 2)
    return pl.pallas_call(
        bilstm_recurrence_kernel,
        out_shape=(jax.ShapeDtypeStruct((t_r, bsz, hid), jnp.bfloat16),
                   jax.ShapeDtypeStruct((t_r, bsz, hid), jnp.bfloat16)),
        grid=(nc,),
        in_specs=[
            pl.BlockSpec((tc, bsz, 4 * hid), lambda j: (j, 0, 0)),
            pl.BlockSpec((tc, bsz, 4 * hid), lambda j: (nc - 1 - j, 0, 1)),
            pl.BlockSpec((2, hid, 4 * hid), lambda j: (0, 0, 0)),
        ],
        out_specs=(
            pl.BlockSpec((tc, bsz, hid), lambda j: (j, 0, 0)),
            pl.BlockSpec((tc, bsz, hid), lambda j: (nc - 1 - j, 0, 0)),
        ),
        scratch_shapes=[pltpu.VMEM((2, bsz, hid), jnp.float32),
                        pltpu.VMEM((2, bsz, hid), jnp.float32)],
        compiler_params=pltpu.CompilerParams(
            dimension_semantics=("arbitrary",)),
        cost_estimate=pl.CostEstimate(flops=flops, transcendentals=trans,
                                      bytes_accessed=bytes_accessed),
    )(gates, gates, whh)


# -----------------------------------------------------------------------------
# Kernel 4: final Linear fused with the (T,B,out)->(B,out,T) transpose.
# Writes (B, out, T) blocks directly (T in lanes).
# -----------------------------------------------------------------------------
def _fc_transpose_kernel(x_ref, w_ref, b_ref, o_ref):
    # x_ref: (tcf, B, 2H) bf16; w_ref: (out, 2H) bf16; b_ref: (out, 1) f32
    # o_ref: (B, out, tcf) f32
    bsz = x_ref.shape[1]
    w = w_ref[...]
    bias = b_ref[...]
    for bi in range(bsz):
        xb = x_ref[:, bi, :]                          # (tcf, 2H)
        yt = jax.lax.dot_general(                     # (out, tcf)
            w, xb, dimension_numbers=(((1,), (1,)), ((), ())),
            preferred_element_type=jnp.float32)
        o_ref[bi] = yt + bias


def fc_transpose(seq, w, b):
    # seq: (T, B, 2H) bf16, w: (out, 2H) bf16, b: (out, 1) f32 -> (B, out, T)
    t_len, bsz, d = seq.shape
    out = w.shape[0]
    tcf = t_len if t_len <= 128 else 128
    t_f = _round_up(t_len, tcf)
    if t_f != t_len:
        seq = jnp.pad(seq, ((0, t_f - t_len), (0, 0), (0, 0)))
    res = pl.pallas_call(
        _fc_transpose_kernel,
        out_shape=jax.ShapeDtypeStruct((bsz, out, t_f), jnp.float32),
        grid=(t_f // tcf,),
        in_specs=[
            pl.BlockSpec((tcf, bsz, d), lambda j: (j, 0, 0)),
            pl.BlockSpec((out, d), lambda j: (0, 0)),
            pl.BlockSpec((out, 1), lambda j: (0, 0)),
        ],
        out_specs=pl.BlockSpec((bsz, out, tcf), lambda j: (0, 0, j)),
        compiler_params=pltpu.CompilerParams(
            dimension_semantics=("parallel",)),
    )(seq, w, b)
    if t_f != t_len:
        res = res[:, :, :t_len]
    return res


# -----------------------------------------------------------------------------
# Parameter initialization (deterministic, synthetic, PyTorch layouts)
# -----------------------------------------------------------------------------
def init_params(key, n_mels, conv_filters, hidden, num_layers, output_size):
    keys = iter(jax.random.split(key, 64))
    p = {}

    def rnd(shape, scale=0.1):
        return (scale * jax.random.normal(next(keys), shape)).astype(jnp.float32)

    p["conv1_w"] = rnd((conv_filters, 1, 3, 3))
    p["conv1_b"] = rnd((conv_filters,))
    p["bn1_gamma"] = 1.0 + rnd((conv_filters,), 0.05)
    p["bn1_beta"] = rnd((conv_filters,), 0.05)
    c2 = conv_filters * 2
    p["conv2_w"] = rnd((c2, conv_filters, 3, 3))
    p["conv2_b"] = rnd((c2,))
    p["bn2_gamma"] = 1.0 + rnd((c2,), 0.05)
    p["bn2_beta"] = rnd((c2,), 0.05)

    lstm_in = n_mels * c2
    for layer in range(num_layers):
        d_in = lstm_in if layer == 0 else 2 * hidden
        for direction in ("fwd", "bwd"):
            pre = f"lstm_l{layer}_{direction}"
            p[pre + "_wih"] = rnd((4 * hidden, d_in))
            p[pre + "_whh"] = rnd((4 * hidden, hidden))
            p[pre + "_bih"] = rnd((4 * hidden,))
            p[pre + "_bhh"] = rnd((4 * hidden,))

    p["fc_w"] = rnd((output_size, 2 * hidden))
    p["fc_b"] = rnd((output_size,))
    return p


def fold_bn(conv_w, conv_b, gamma, beta, eps=1e-5):
    # eval-mode BN with running_mean=0, running_var=1, folded into conv.
    scale = gamma / jnp.sqrt(1.0 + eps)                          # (Cout,)
    w = conv_w * scale[:, None, None, None]
    b = conv_b * scale + beta
    return w, b


def _pick_mel_tile(n_mels, cf, c2):
    for mt in range(1, n_mels + 1):
        if n_mels % mt == 0 and (mt * cf) % 128 == 0 and mt * c2 >= 512:
            return mt
    return n_mels


def _conv1_banded(w1f, b1f, n_mels):
    # w1f: (Cf, 1, 3, 3) folded conv1 weights.
    # Returns G (3, M+4, (M+2)*Cf) bf16 and the mel-tiled bias (1, (M+2)*Cf).
    cf = w1f.shape[0]
    me, mp4 = n_mels + 2, n_mels + 4
    w1t = jnp.transpose(w1f[:, 0], (1, 2, 0))                    # (kh, kw, c)
    s = np.zeros((mp4, me, 3), np.float32)
    for m in range(1, me - 1):           # mel-border outputs stay exactly zero
        for kh in range(3):
            s[m + kh, m, kh] = 1.0
    g = jnp.einsum("pmh,hwc->wpmc", jnp.asarray(s), w1t)
    g = g.reshape(3, mp4, me * cf).astype(jnp.bfloat16)
    mel_ok = np.zeros((me, cf), np.float32)
    mel_ok[1:me - 1, :] = 1.0
    b1_t = (jnp.tile(b1f, (me,)).reshape(me, cf) * jnp.asarray(mel_ok))
    b1_t = b1_t.reshape(1, me * cf).astype(jnp.float32)
    return g, b1_t


def _conv2_banded(w2f, b2f, mt):
    # w2f: (C2, Cf, 3, 3) folded conv2 weights.
    # Returns H (3, (mt+2)*Cf, mt*C2) bf16 and tiled bias (1, mt*C2).
    c2, cf = w2f.shape[0], w2f.shape[1]
    w2t = jnp.transpose(w2f, (2, 3, 1, 0))                       # (kh, kw, ci, co)
    s = np.zeros((mt + 2, mt, 3), np.float32)
    for m in range(mt):
        for kh in range(3):
            s[m + kh, m, kh] = 1.0
    h = jnp.einsum("qmh,hwio->wqimo", jnp.asarray(s), w2t)
    h = h.reshape(3, (mt + 2) * cf, mt * c2).astype(jnp.bfloat16)
    b2_t = jnp.tile(b2f, (mt,)).reshape(1, mt * c2).astype(jnp.float32)
    return h, b2_t


def prepare_params(p, n_mels, conv_filters, hidden, num_layers, output_size):
    """Fold BN, build banded conv weights, cast matmul weights to bf16."""
    cf = conv_filters
    c2 = 2 * cf
    w1, b1 = fold_bn(p["conv1_w"], p["conv1_b"], p["bn1_gamma"], p["bn1_beta"])
    w2, b2 = fold_bn(p["conv2_w"], p["conv2_b"], p["bn2_gamma"], p["bn2_beta"])
    mt = _pick_mel_tile(n_mels, cf, c2)

    prep = {}
    prep["conv1_g"], prep["conv1_b"] = _conv1_banded(w1, b1, n_mels)
    prep["conv2_h"], prep["conv2_b"] = _conv2_banded(w2, b2, mt)

    for layer in range(num_layers):
        wih_f = p[f"lstm_l{layer}_fwd_wih"]
        wih_b = p[f"lstm_l{layer}_bwd_wih"]
        if layer == 0:
            # Conv kernel emits features ordered m*C2 + c; PyTorch's flatten is
            # c*n_mels + m.  Permute W_ih columns so the math is identical.
            def reorder(w):
                return (w.reshape(4 * hidden, c2, n_mels)
                        .transpose(0, 2, 1)
                        .reshape(4 * hidden, c2 * n_mels))
            wih_f, wih_b = reorder(wih_f), reorder(wih_b)
        wih_cat = jnp.concatenate([wih_f, wih_b], axis=0)          # (8H, D)
        prep[f"l{layer}_wih"] = jnp.transpose(wih_cat).astype(jnp.bfloat16)
        bias_cat = jnp.concatenate([
            p[f"lstm_l{layer}_fwd_bih"] + p[f"lstm_l{layer}_fwd_bhh"],
            p[f"lstm_l{layer}_bwd_bih"] + p[f"lstm_l{layer}_bwd_bhh"]], axis=0)
        prep[f"l{layer}_b"] = bias_cat.reshape(1, 8 * hidden)      # f32
        whh = jnp.stack([jnp.transpose(p[f"lstm_l{layer}_fwd_whh"]),
                         jnp.transpose(p[f"lstm_l{layer}_bwd_whh"])], axis=0)
        prep[f"l{layer}_whh"] = whh.astype(jnp.bfloat16)           # (2, H, 4H)

    prep["fc_w"] = p["fc_w"].astype(jnp.bfloat16)                  # (out, 2H)
    prep["fc_b"] = p["fc_b"].reshape(output_size, 1)               # (out, 1) f32
    return prep


# -----------------------------------------------------------------------------
# Full forward pass
# -----------------------------------------------------------------------------
@functools.partial(jax.jit, static_argnames=("num_layers",))
def vocal_separation_hybrid_forward(x, prep, *, num_layers):
    # x: (B, n_mels, T) float32 -> (B, output_size, T) float32
    bsz, n_mels, t_len = x.shape
    me = n_mels + 2
    cf = prep["conv1_g"].shape[2] // me
    mt = prep["conv2_h"].shape[1] // cf - 2
    c2 = prep["conv2_b"].shape[1] // mt
    d0 = n_mels * c2
    hidden = prep["l0_whh"].shape[1]
    assert hidden % 128 == 0, "hidden_size must be a multiple of 128"
    assert d0 % 128 == 0, "n_mels * 2*conv_filters must be a multiple of 128"

    # ---- fused conv stack: (B, T, M), zero-pad, halo'd time chunks ----
    xt = jnp.transpose(x, (0, 2, 1))                     # (B, T, M)
    tct = t_len if t_len <= 128 else 128
    t_conv = _round_up(t_len, tct)
    if t_conv != t_len:
        xt = jnp.pad(xt, ((0, 0), (0, t_conv - t_len), (0, 0)))
    xp = jnp.pad(xt, ((0, 0), (2, 2), (2, 2)))           # (B, t_conv+4, M+4)
    nct = t_conv // tct
    if nct == 1:
        xh = xp[:, None]
    else:
        xh = jnp.stack(
            [xp[:, j * tct: j * tct + tct + 4, :] for j in range(nct)], axis=1)
    feat = fused_conv(xh, prep["conv1_g"], prep["conv1_b"],
                      prep["conv2_h"], prep["conv2_b"],
                      n_mels=n_mels, c2=c2, mt=mt, t_true=t_len)
    # feat: (t_conv, B * d0) bf16, time-major -> free reshapes below.
    seq_tb = feat[:t_len].reshape(t_len, bsz, d0)
    seq2d = seq_tb.reshape(t_len * bsz, d0)

    # ---- bidirectional multi-layer LSTM ----
    tc = t_len if t_len <= 128 else 128
    t_r = _round_up(t_len, tc)
    for layer in range(num_layers):
        gates = matmul_bias(seq2d, prep[f"l{layer}_wih"], prep[f"l{layer}_b"],
                            out_dtype=jnp.bfloat16)       # (T*B, 8H) bf16
        gates = gates.reshape(t_len, bsz, 8 * hidden)
        if t_r != t_len:
            # Zero gate rows keep h=c=0 exactly, so the backward direction is
            # unaffected by time padding; padded forward outputs are sliced off.
            gates = jnp.pad(gates, ((0, t_r - t_len), (0, 0), (0, 0)))
        out_f, out_b = bilstm_layer(gates, prep[f"l{layer}_whh"], tc)
        seq_tb = jnp.concatenate([out_f[:t_len], out_b[:t_len]], axis=-1)
        seq2d = seq_tb.reshape(t_len * bsz, 2 * hidden)

    # ---- final Linear fused with the output transpose ----
    return fc_transpose(seq_tb, prep["fc_w"], prep["fc_b"])   # (B, out, T)


if __name__ == "__main__":
    # Small, forward-consistent shapes (hidden a multiple of 128 and
    # n_mels * 2*conv_filters a multiple of 128, as at real model sizes).
    B = 2
    N_MELS = 16
    TIME = 8
    CONV_FILTERS = 8           # conv2 channels = 16 -> LSTM input = 256
    HIDDEN = 128
    NUM_LAYERS = 2
    OUTPUT_SIZE = 128

    key = jax.random.PRNGKey(0)
    k_x, k_p = jax.random.split(key)
    x = jax.random.normal(k_x, (B, N_MELS, TIME), dtype=jnp.float32)
    params = init_params(k_p, N_MELS, CONV_FILTERS, HIDDEN, NUM_LAYERS,
                         OUTPUT_SIZE)
    prep = prepare_params(params, N_MELS, CONV_FILTERS, HIDDEN, NUM_LAYERS,
                          OUTPUT_SIZE)

    out = vocal_separation_hybrid_forward(x, prep, num_layers=NUM_LAYERS)
    out = jax.block_until_ready(out)

    assert out.shape == (B, OUTPUT_SIZE, TIME), out.shape
    assert bool(jnp.all(jnp.isfinite(out)))
    print("KERNEL_OK")
</pallas_src>

<mosaic_0001>
module attributes {stable_mosaic.version = 11 : i64} {
  func.func @_matmul_bias_kernel(%arg0: i32, %arg1: i32, %arg2: i32, %arg3: memref<16x256xbf16, #tpu.memory_space<vmem>>, %arg4: memref<256x256xbf16, #tpu.memory_space<vmem>>, %arg5: memref<1x256xf32, #tpu.memory_space<vmem>>, %arg6: memref<16x256xbf16, #tpu.memory_space<vmem>>, %arg7: memref<16x256xf32, #tpu.memory_space<vmem>>) attributes {dimension_semantics = [#tpu.dimension_semantics<parallel>, #tpu.dimension_semantics<parallel>, #tpu.dimension_semantics<arbitrary>], iteration_bounds = array<i64: 1, 4, 1>, scalar_prefetch = 0 : i64, scratch_operands = 1 : i64, tpu.core_type = #tpu.core_type<tc>, window_params = [{transform_indices = @transform_0, window_bounds = array<i64: 16, 256>}, {transform_indices = @transform_1, window_bounds = array<i64: 256, 256>}, {transform_indices = @transform_2, window_bounds = array<i64: 1, 256>}, {transform_indices = @transform_3, window_bounds = array<i64: 16, 256>}]} {
    %c0_i32 = arith.constant 0 : i32
    %0 = arith.cmpi eq, %arg2, %c0_i32 : i32
    %1 = arith.extui %0 : i1 to i32
    %c0_i32_0 = arith.constant 0 : i32
    %2 = arith.cmpi ne, %1, %c0_i32_0 : i32
    scf.if %2 {
      %cst_10 = arith.constant 0.000000e+00 : f32
      %12 = vector.broadcast %cst_10 : f32 to vector<16x256xf32>
      %c0_11 = arith.constant 0 : index
      %c0_12 = arith.constant 0 : index
      %13 = vector.load %arg7[%c0_11, %c0_12] : memref<16x256xf32, #tpu.memory_space<vmem>>, vector<16x256xf32>
      tpu.vector_store %arg7[%c0_11, %c0_12], %12 {strides = array<i32>} : memref<16x256xf32, #tpu.memory_space<vmem>>, vector<16x256xf32>,
    } else {
    }
    %c0 = arith.constant 0 : index
    %c0_1 = arith.constant 0 : index
    %3 = vector.load %arg7[%c0, %c0_1] : memref<16x256xf32, #tpu.memory_space<vmem>>, vector<16x256xf32>
    %c0_2 = arith.constant 0 : index
    %c0_3 = arith.constant 0 : index
    %4 = vector.load %arg3[%c0_2, %c0_3] : memref<16x256xbf16, #tpu.memory_space<vmem>>, vector<16x256xbf16>
    %c0_4 = arith.constant 0 : index
    %c0_5 = arith.constant 0 : index
    %5 = vector.load %arg4[%c0_4, %c0_5] : memref<256x256xbf16, #tpu.memory_space<vmem>>, vector<256x256xbf16>
    %cst = arith.constant dense<0.000000e+00> : vector<16x256xf32>
    %6 = tpu.matmul %4, %5, %cst {dimension_numbers = #tpu.dot_dimension_numbers<[1], [0], [0], [1], [0, 0, 1, 1], [], []>} : vector<16x256xbf16>, vector<256x256xbf16>, vector<16x256xf32> -> vector<16x256xf32>
    %7 = arith.addf %3, %6 : vector<16x256xf32>
    %c0_6 = arith.constant 0 : index
    %c0_7 = arith.constant 0 : index
    %8 = vector.load %arg7[%c0_6, %c0_7] : memref<16x256xf32, #tpu.memory_space<vmem>>, vector<16x256xf32>
    tpu.vector_store %arg7[%c0_6, %c0_7], %7 {strides = array<i32>} : memref<16x256xf32, #tpu.memory_space<vmem>>, vector<16x256xf32>,
    %c0_i32_8 = arith.constant 0 : i32
    %9 = arith.cmpi eq, %arg2, %c0_i32_8 : i32
    %10 = arith.extui %9 : i1 to i32
    %c0_i32_9 = arith.constant 0 : i32
    %11 = arith.cmpi ne, %10, %c0_i32_9 : i32
    scf.if %11 {
      %c0_10 = arith.constant 0 : index
      %c0_11 = arith.constant 0 : index
      %12 = vector.load %arg7[%c0_10, %c0_11] : memref<16x256xf32, #tpu.memory_space<vmem>>, vector<16x256xf32>
      %c0_12 = arith.constant 0 : index
      %c0_13 = arith.constant 0 : index
      %13 = vector.load %arg5[%c0_12, %c0_13] : memref<1x256xf32, #tpu.memory_space<vmem>>, vector<1x256xf32>
      %14 = vector.broadcast %13 : vector<1x256xf32> to vector<16x256xf32>
      %15 = arith.addf %12, %14 : vector<16x256xf32>
      %16 = arith.truncf %15 : vector<16x256xf32> to vector<16x256xbf16>
      %c0_14 = arith.constant 0 : index
      %c0_15 = arith.constant 0 : index
      %17 = vector.load %arg6[%c0_14, %c0_15] : memref<16x256xbf16, #tpu.memory_space<vmem>>, vector<16x256xbf16>
      tpu.vector_store %arg6[%c0_14, %c0_15], %16 {strides = array<i32>} : memref<16x256xbf16, #tpu.memory_space<vmem>>, vector<16x256xbf16>,
    } else {
    }
    return
  }
  func.func @transform_0(%arg0: i32, %arg1: i32, %arg2: i32) -> (i32, i32) {
    %c0_i32 = arith.constant 0 : i32
    return %arg0, %arg2 : i32, i32
  }
  func.func @transform_1(%arg0: i32, %arg1: i32, %arg2: i32) -> (i32, i32) {
    %c0_i32 = arith.constant 0 : i32
    return %arg2, %arg1 : i32, i32
  }
  func.func @transform_2(%arg0: i32, %arg1: i32, %arg2: i32) -> (i32, i32) {
    %c0_i32 = arith.constant 0 : i32
    %c0_i32_0 = arith.constant 0 : i32
    return %c0_i32, %arg1 : i32, i32
  }
  func.func @transform_3(%arg0: i32, %arg1: i32, %arg2: i32) -> (i32, i32) {
    %c0_i32 = arith.constant 0 : i32
    return %arg0, %arg1 : i32, i32
  }
}

module attributes {stable_mosaic.version = 11 : i64} {
  func.func @_fused_conv_kernel(%arg0: i32, %arg1: i32, %arg2: memref<1x1x12x20xf32, #tpu.memory_space<vmem>>, %arg3: memref<3x20x144xbf16, #tpu.memory_space<vmem>>, %arg4: memref<1x144xf32, #tpu.memory_space<vmem>>, %arg5: memref<3x144x256xbf16, #tpu.memory_space<vmem>>, %arg6: memref<1x256xf32, #tpu.memory_space<vmem>>, %arg7: memref<8x256xbf16, #tpu.memory_space<vmem>>) attributes {dimension_semantics = [#tpu.dimension_semantics<parallel>, #tpu.dimension_semantics<parallel>], iteration_bounds = array<i64: 2, 1>, scalar_prefetch = 0 : i64, scratch_operands = 0 : i64, tpu.core_type = #tpu.core_type<tc>, window_params = [{transform_indices = @transform_0, window_bounds = array<i64: 1, 1, 12, 20>}, {pipeline_mode = #tpu.pipeline_mode<synchronous>, transform_indices = @transform_1, window_bounds = array<i64: 3, 20, 144>}, {pipeline_mode = #tpu.pipeline_mode<synchronous>, transform_indices = @transform_2, window_bounds = array<i64: 1, 144>}, {pipeline_mode = #tpu.pipeline_mode<synchronous>, transform_indices = @transform_3, window_bounds = array<i64: 3, 144, 256>}, {pipeline_mode = #tpu.pipeline_mode<synchronous>, transform_indices = @transform_4, window_bounds = array<i64: 1, 256>}, {transform_indices = @transform_5, window_bounds = array<i64: 8, 256>}]} {
    %c0 = arith.constant 0 : index
    %c0_0 = arith.constant 0 : index
    %c0_1 = arith.constant 0 : index
    %c0_2 = arith.constant 0 : index
    %0 = vector.load %arg2[%c0, %c0_0, %c0_1, %c0_2] : memref<1x1x12x20xf32, #tpu.memory_space<vmem>>, vector<1x1x12x20xf32>
    %1 = vector.shape_cast %0 : vector<1x1x12x20xf32> to vector<12x20xf32>
    %2 = arith.truncf %1 : vector<12x20xf32> to vector<12x20xbf16>
    %cst = arith.constant 0.000000e+00 : f32
    %3 = vector.broadcast %cst : f32 to vector<10x144xf32>
    %4 = vector.extract_strided_slice %2 {offsets = [0, 0], sizes = [10, 20], strides = [1, 1]} : vector<12x20xbf16> to vector<10x20xbf16>
    %c0_3 = arith.constant 0 : index
    %c0_4 = arith.constant 0 : index
    %c0_5 = arith.constant 0 : index
    %5 = vector.load %arg3[%c0_3, %c0_4, %c0_5] : memref<3x20x144xbf16, #tpu.memory_space<vmem>>, vector<1x20x144xbf16>
    %6 = vector.shape_cast %5 : vector<1x20x144xbf16> to vector<20x144xbf16>
    %cst_6 = arith.constant dense<0.000000e+00> : vector<10x144xf32>
    %7 = tpu.matmul %4, %6, %cst_6 {dimension_numbers = #tpu.dot_dimension_numbers<[1], [0], [0], [1], [0, 0, 1, 1], [], []>} : vector<10x20xbf16>, vector<20x144xbf16>, vector<10x144xf32> -> vector<10x144xf32>
    %8 = arith.addf %3, %7 : vector<10x144xf32>
    %9 = vector.extract_strided_slice %2 {offsets = [1, 0], sizes = [10, 20], strides = [1, 1]} : vector<12x20xbf16> to vector<10x20xbf16>
    %c1 = arith.constant 1 : index
    %c0_7 = arith.constant 0 : index
    %c0_8 = arith.constant 0 : index
    %10 = vector.load %arg3[%c1, %c0_7, %c0_8] : memref<3x20x144xbf16, #tpu.memory_space<vmem>>, vector<1x20x144xbf16>
    %11 = vector.shape_cast %10 : vector<1x20x144xbf16> to vector<20x144xbf16>
    %cst_9 = arith.constant dense<0.000000e+00> : vector<10x144xf32>
    %12 = tpu.matmul %9, %11, %cst_9 {dimension_numbers = #tpu.dot_dimension_numbers<[1], [0], [0], [1], [0, 0, 1, 1], [], []>} : vector<10x20xbf16>, vector<20x144xbf16>, vector<10x144xf32> -> vector<10x144xf32>
    %13 = arith.addf %8, %12 : vector<10x144xf32>
    %14 = vector.extract_strided_slice %2 {offsets = [2, 0], sizes = [10, 20], strides = [1, 1]} : vector<12x20xbf16> to vector<10x20xbf16>
    %c2 = arith.constant 2 : index
    %c0_10 = arith.constant 0 : index
    %c0_11 = arith.constant 0 : index
    %15 = vector.load %arg3[%c2, %c0_10, %c0_11] : memref<3x20x144xbf16, #tpu.memory_space<vmem>>, vector<1x20x144xbf16>
    %16 = vector.shape_cast %15 : vector<1x20x144xbf16> to vector<20x144xbf16>
    %cst_12 = arith.constant dense<0.000000e+00> : vector<10x144xf32>
    %17 = tpu.matmul %14, %16, %cst_12 {dimension_numbers = #tpu.dot_dimension_numbers<[1], [0], [0], [1], [0, 0, 1, 1], [], []>} : vector<10x20xbf16>, vector<20x144xbf16>, vector<10x144xf32> -> vector<10x144xf32>
    %18 = arith.addf %13, %17 : vector<10x144xf32>
    %c0_13 = arith.constant 0 : index
    %c0_14 = arith.constant 0 : index
    %19 = vector.load %arg4[%c0_13, %c0_14] : memref<1x144xf32, #tpu.memory_space<vmem>>, vector<1x144xf32>
    %20 = vector.broadcast %19 : vector<1x144xf32> to vector<10x144xf32>
    %21 = arith.addf %18, %20 : vector<10x144xf32>
    %cst_15 = arith.constant 0.000000e+00 : f32
    %22 = vector.broadcast %cst_15 : f32 to vector<10x144xf32>
    %23 = arith.maximumf %21, %22 : vector<10x144xf32>
    %24 = tpu.iota {dimensions = array<i32: 0>} : vector<10x1xi32>
    %c8_i32 = arith.constant 8 : i32
    %25 = arith.muli %arg1, %c8_i32 : i32
    %26 = vector.broadcast %25 : i32 to vector<10x1xi32>
    %27 = arith.addi %24, %26 : vector<10x1xi32>
    %c1_i32 = arith.constant 1 : i32
    %28 = vector.broadcast %c1_i32 : i32 to vector<10x1xi32>
    %29 = arith.cmpi sge, %27, %28 : vector<10x1xi32>
    %c8_i32_16 = arith.constant 8 : i32
    %30 = vector.broadcast %c8_i32_16 : i32 to vector<10x1xi32>
    %31 = arith.cmpi sle, %27, %30 : vector<10x1xi32>
    %32 = arith.andi %29, %31 : vector<10x1xi1>
    %cst_17 = arith.constant 0.000000e+00 : f32
    %33 = vector.shape_cast %32 : vector<10x1xi1> to vector<10x1xi1>
    %34 = vector.broadcast %33 : vector<10x1xi1> to vector<10x144xi1>
    %35 = vector.broadcast %cst_17 : f32 to vector<10x144xf32>
    %36 = arith.select %34, %23, %35 : vector<10x144xi1>, vector<10x144xf32>
    %37 = arith.truncf %36 : vector<10x144xf32> to vector<10x144xbf16>
    %cst_18 = arith.constant 0.000000e+00 : f32
    %38 = vector.broadcast %cst_18 : f32 to vector<8x256xf32>
    %39 = vector.extract_strided_slice %37 {offsets = [0, 0], sizes = [8, 144], strides = [1, 1]} : vector<10x144xbf16> to vector<8x144xbf16>
    %c0_19 = arith.constant 0 : index
    %c0_20 = arith.constant 0 : index
    %c0_21 = arith.constant 0 : index
    %40 = vector.load %arg5[%c0_19, %c0_20, %c0_21] : memref<3x144x256xbf16, #tpu.memory_space<vmem>>, vector<1x144x256xbf16>
    %41 = vector.shape_cast %40 : vector<1x144x256xbf16> to vector<144x256xbf16>
    %cst_22 = arith.constant dense<0.000000e+00> : vector<8x256xf32>
    %42 = tpu.matmul %39, %41, %cst_22 {dimension_numbers = #tpu.dot_dimension_numbers<[1], [0], [0], [1], [0, 0, 1, 1], [], []>} : vector<8x144xbf16>, vector<144x256xbf16>, vector<8x256xf32> -> vector<8x256xf32>
    %43 = arith.addf %38, %42 : vector<8x256xf32>
    %44 = vector.extract_strided_slice %37 {offsets = [1, 0], sizes = [8, 144], strides = [1, 1]} : vector<10x144xbf16> to vector<8x144xbf16>
    %c1_23 = arith.constant 1 : index
    %c0_24 = arith.constant 0 : index
    %c0_25 = arith.constant 0 : index
    %45 = vector.load %arg5[%c1_23, %c0_24, %c0_25] : memref<3x144x256xbf16, #tpu.memory_space<vmem>>, vector<1x144x256xbf16>
    %46 = vector.shape_cast %45 : vector<1x144x256xbf16> to vector<144x256xbf16>
    %cst_26 = arith.constant dense<0.000000e+00> : vector<8x256xf32>
    %47 = tpu.matmul %44, %46, %cst_26 {dimension_numbers = #tpu.dot_dimension_numbers<[1], [0], [0], [1], [0, 0, 1, 1], [], []>} : vector<8x144xbf16>, vector<144x256xbf16>, vector<8x256xf32> -> vector<8x256xf32>
    %48 = arith.addf %43, %47 : vector<8x256xf32>
    %49 = vector.extract_strided_slice %37 {offsets = [2, 0], sizes = [8, 144], strides = [1, 1]} : vector<10x144xbf16> to vector<8x144xbf16>
    %c2_27 = arith.constant 2 : index
    %c0_28 = arith.constant 0 : index
    %c0_29 = arith.constant 0 : index
    %50 = vector.load %arg5[%c2_27, %c0_28, %c0_29] : memref<3x144x256xbf16, #tpu.memory_space<vmem>>, vector<1x144x256xbf16>
    %51 = vector.shape_cast %50 : vector<1x144x256xbf16> to vector<144x256xbf16>
    %cst_30 = arith.constant dense<0.000000e+00> : vector<8x256xf32>
    %52 = tpu.matmul %49, %51, %cst_30 {dimension_numbers = #tpu.dot_dimension_numbers<[1], [0], [0], [1], [0, 0, 1, 1], [], []>} : vector<8x144xbf16>, vector<144x256xbf16>, vector<8x256xf32> -> vector<8x256xf32>
    %53 = arith.addf %48, %52 : vector<8x256xf32>
    %c0_31 = arith.constant 0 : index
    %c0_32 = arith.constant 0 : index
    %54 = vector.load %arg6[%c0_31, %c0_32] : memref<1x256xf32, #tpu.memory_space<vmem>>, vector<1x256xf32>
    %55 = vector.broadcast %54 : vector<1x256xf32> to vector<8x256xf32>
    %56 = arith.addf %53, %55 : vector<8x256xf32>
    %cst_33 = arith.constant 0.000000e+00 : f32
    %57 = vector.broadcast %cst_33 : f32 to vector<8x256xf32>
    %58 = arith.maximumf %56, %57 : vector<8x256xf32>
    %59 = arith.truncf %58 : vector<8x256xf32> to vector<8x256xbf16>
    %c0_34 = arith.constant 0 : index
    %c0_35 = arith.constant 0 : index
    %60 = vector.load %arg7[%c0_34, %c0_35] : memref<8x256xbf16, #tpu.memory_space<vmem>>, vector<8x256xbf16>
    tpu.vector_store %arg7[%c0_34, %c0_35], %59 {strides = array<i32>} : memref<8x256xbf16, #tpu.memory_space<vmem>>, vector<8x256xbf16>,
    return
  }
  func.func @transform_0(%arg0: i32, %arg1: i32) -> (i32, i32, i32, i32) {
    %c0_i32 = arith.constant 0 : i32
    %c0_i32_0 = arith.constant 0 : i32
    %c0_i32_1 = arith.constant 0 : i32
    return %arg0, %arg1, %c0_i32, %c0_i32_0 : i32, i32, i32, i32
  }
  func.func @transform_1(%arg0: i32, %arg1: i32) -> (i32, i32, i32) {
    %c0_i32 = arith.constant 0 : i32
    %c0_i32_0 = arith.constant 0 : i32
    %c0_i32_1 = arith.constant 0 : i32
    %c0_i32_2 = arith.constant 0 : i32
    return %c0_i32, %c0_i32_0, %c0_i32_1 : i32, i32, i32
  }
  func.func @transform_2(%arg0: i32, %arg1: i32) -> (i32, i32) {
    %c0_i32 = arith.constant 0 : i32
    %c0_i32_0 = arith.constant 0 : i32
    %c0_i32_1 = arith.constant 0 : i32
    return %c0_i32, %c0_i32_0 : i32, i32
  }
  func.func @transform_3(%arg0: i32, %arg1: i32) -> (i32, i32, i32) {
    %c0_i32 = arith.constant 0 : i32
    %c0_i32_0 = arith.constant 0 : i32
    %c0_i32_1 = arith.constant 0 : i32
    %c0_i32_2 = arith.constant 0 : i32
    return %c0_i32, %c0_i32_0, %c0_i32_1 : i32, i32, i32
  }
  func.func @transform_4(%arg0: i32, %arg1: i32) -> (i32, i32) {
    %c0_i32 = arith.constant 0 : i32
    %c0_i32_0 = arith.constant 0 : i32
    %c0_i32_1 = arith.constant 0 : i32
    return %c0_i32, %c0_i32_0 : i32, i32
  }
  func.func @transform_5(%arg0: i32, %arg1: i32) -> (i32, i32) {
    %c0_i32 = arith.constant 0 : i32
    return %arg1, %arg0 : i32, i32
  }
}

module attributes {stable_mosaic.version = 11 : i64} {
  func.func @bilstm_recurrence_kernel(%arg0: i32, %arg1: memref<8x2x512xbf16, #tpu.memory_space<vmem>>, %arg2: memref<8x2x512xbf16, #tpu.memory_space<vmem>>, %arg3: memref<2x128x512xbf16, #tpu.memory_space<vmem>>, %arg4: memref<8x2x128xbf16, #tpu.memory_space<vmem>>, %arg5: memref<8x2x128xbf16, #tpu.memory_space<vmem>>, %arg6: memref<2x2x128xf32, #tpu.memory_space<vmem>>, %arg7: memref<2x2x128xf32, #tpu.memory_space<vmem>>) attributes {dimension_semantics = [#tpu.dimension_semantics<arbitrary>], iteration_bounds = array<i64: 1>, scalar_prefetch = 0 : i64, scratch_operands = 2 : i64, tpu.core_type = #tpu.core_type<tc>, window_params = [{transform_indices = @transform_0, window_bounds = array<i64: 8, 2, 512>}, {transform_indices = @transform_1, window_bounds = array<i64: 8, 2, 512>}, {pipeline_mode = #tpu.pipeline_mode<synchronous>, transform_indices = @transform_2, window_bounds = array<i64: 2, 128, 512>}, {transform_indices = @transform_3, window_bounds = array<i64: 8, 2, 128>}, {transform_indices = @transform_4, window_bounds = array<i64: 8, 2, 128>}]} {
    %c0_i32 = arith.constant 0 : i32
    %0 = arith.cmpi eq, %arg0, %c0_i32 : i32
    %1 = arith.extui %0 : i1 to i32
    %c0_i32_0 = arith.constant 0 : i32
    %2 = arith.cmpi ne, %1, %c0_i32_0 : i32
    scf.if %2 {
      %cst = arith.constant 0.000000e+00 : f32
      %29 = vector.broadcast %cst : f32 to vector<2x2x128xf32>
      %c0_31 = arith.constant 0 : index
      %c0_32 = arith.constant 0 : index
      %c0_33 = arith.constant 0 : index
      %30 = vector.load %arg6[%c0_31, %c0_32, %c0_33] : memref<2x2x128xf32, #tpu.memory_space<vmem>>, vector<2x2x128xf32>
      tpu.vector_store %arg6[%c0_31, %c0_32, %c0_33], %29 {strides = array<i32>} : memref<2x2x128xf32, #tpu.memory_space<vmem>>, vector<2x2x128xf32>,
      %cst_34 = arith.constant 0.000000e+00 : f32
      %31 = vector.broadcast %cst_34 : f32 to vector<2x2x128xf32>
      %c0_35 = arith.constant 0 : index
      %c0_36 = arith.constant 0 : index
      %c0_37 = arith.constant 0 : index
      %32 = vector.load %arg7[%c0_35, %c0_36, %c0_37] : memref<2x2x128xf32, #tpu.memory_space<vmem>>, vector<2x2x128xf32>
      tpu.vector_store %arg7[%c0_35, %c0_36, %c0_37], %31 {strides = array<i32>} : memref<2x2x128xf32, #tpu.memory_space<vmem>>, vector<2x2x128xf32>,
    } else {
    }
    %c0 = arith.constant 0 : index
    %c0_1 = arith.constant 0 : index
    %c0_2 = arith.constant 0 : index
    %3 = vector.load %arg3[%c0, %c0_1, %c0_2] : memref<2x128x512xbf16, #tpu.memory_space<vmem>>, vector<1x128x512xbf16>
    %4 = vector.shape_cast %3 : vector<1x128x512xbf16> to vector<128x512xbf16>
    %c1 = arith.constant 1 : index
    %c0_3 = arith.constant 0 : index
    %c0_4 = arith.constant 0 : index
    %5 = vector.load %arg3[%c1, %c0_3, %c0_4] : memref<2x128x512xbf16, #tpu.memory_space<vmem>>, vector<1x128x512xbf16>
    %6 = vector.shape_cast %5 : vector<1x128x512xbf16> to vector<128x512xbf16>
    %c0_5 = arith.constant 0 : index
    %c0_6 = arith.constant 0 : index
    %c0_7 = arith.constant 0 : index
    %7 = vector.load %arg6[%c0_5, %c0_6, %c0_7] : memref<2x2x128xf32, #tpu.memory_space<vmem>>, vector<1x2x128xf32>
    %8 = vector.shape_cast %7 : vector<1x2x128xf32> to vector<2x128xf32>
    %c0_8 = arith.constant 0 : index
    %c0_9 = arith.constant 0 : index
    %c0_10 = arith.constant 0 : index
    %9 = vector.load %arg7[%c0_8, %c0_9, %c0_10] : memref<2x2x128xf32, #tpu.memory_space<vmem>>, vector<1x2x128xf32>
    %10 = vector.shape_cast %9 : vector<1x2x128xf32> to vector<2x128xf32>
    %c1_11 = arith.constant 1 : index
    %c0_12 = arith.constant 0 : index
    %c0_13 = arith.constant 0 : index
    %11 = vector.load %arg6[%c1_11, %c0_12, %c0_13] : memref<2x2x128xf32, #tpu.memory_space<vmem>>, vector<1x2x128xf32>
    %12 = vector.shape_cast %11 : vector<1x2x128xf32> to vector<2x128xf32>
    %c1_14 = arith.constant 1 : index
    %c0_15 = arith.constant 0 : index
    %c0_16 = arith.constant 0 : index
    %13 = vector.load %arg7[%c1_14, %c0_15, %c0_16] : memref<2x2x128xf32, #tpu.memory_space<vmem>>, vector<1x2x128xf32>
    %14 = vector.shape_cast %13 : vector<1x2x128xf32> to vector<2x128xf32>
    %c0_i32_17 = arith.constant 0 : i32
    %c8_i32 = arith.constant 8 : i32
    %15 = arith.addi %c0_i32_17, %c8_i32 : i32
    %c1_i32 = arith.constant 1 : i32
    %16:4 = scf.for %arg8 = %c0_i32_17 to %15 step %c1_i32 iter_args(%arg9 = %8, %arg10 = %10, %arg11 = %12, %arg12 = %14) -> (vector<2x128xf32>, vector<2x128xf32>, vector<2x128xf32>, vector<2x128xf32>)  : i32 {
      %c7_i32 = arith.constant 7 : i32
      %29 = arith.subi %c7_i32, %arg8 : i32
      %30 = arith.index_cast %arg8 : i32 to index
      %c0_31 = arith.constant 0 : index
      %c0_32 = arith.constant 0 : index
      %31 = vector.load %arg1[%30, %c0_31, %c0_32] : memref<8x2x512xbf16, #tpu.memory_space<vmem>>, vector<1x2x512xbf16>
      %32 = vector.shape_cast %31 : vector<1x2x512xbf16> to vector<2x512xbf16>
      %33 = arith.extf %32 : vector<2x512xbf16> to vector<2x512xf32>
      %34 = arith.truncf %arg9 : vector<2x128xf32> to vector<2x128xbf16>
      %cst = arith.constant dense<0.000000e+00> : vector<2x512xf32>
      %35 = tpu.matmul %34, %4, %cst {dimension_numbers = #tpu.dot_dimension_numbers<[1], [0], [0], [1], [0, 0, 1, 1], [], []>} : vector<2x128xbf16>, vector<128x512xbf16>, vector<2x512xf32> -> vector<2x512xf32>
      %36 = arith.addf %33, %35 : vector<2x512xf32>
      %37 = arith.index_cast %29 : i32 to index
      %c0_33 = arith.constant 0 : index
      %c0_34 = arith.constant 0 : index
      %38 = vector.load %arg2[%37, %c0_33, %c0_34] : memref<8x2x512xbf16, #tpu.memory_space<vmem>>, vector<1x2x512xbf16>
      %39 = vector.shape_cast %38 : vector<1x2x512xbf16> to vector<2x512xbf16>
      %40 = arith.extf %39 : vector<2x512xbf16> to vector<2x512xf32>
      %41 = arith.truncf %arg11 : vector<2x128xf32> to vector<2x128xbf16>
      %cst_35 = arith.constant dense<0.000000e+00> : vector<2x512xf32>
      %42 = tpu.matmul %41, %6, %cst_35 {dimension_numbers = #tpu.dot_dimension_numbers<[1], [0], [0], [1], [0, 0, 1, 1], [], []>} : vector<2x128xbf16>, vector<128x512xbf16>, vector<2x512xf32> -> vector<2x512xf32>
      %43 = arith.addf %40, %42 : vector<2x512xf32>
      %44 = vector.extract_strided_slice %36 {offsets = [0, 0], sizes = [2, 128], strides = [1, 1]} : vector<2x512xf32> to vector<2x128xf32>
      %cst_36 = arith.constant 5.000000e-01 : f32
      %45 = vector.broadcast %cst_36 : f32 to vector<2x128xf32>
      %46 = arith.mulf %45, %44 : vector<2x128xf32>
      %47 = math.tanh %46 : vector<2x128xf32>
      %cst_37 = arith.constant 5.000000e-01 : f32
      %48 = vector.broadcast %cst_37 : f32 to vector<2x128xf32>
      %49 = arith.mulf %48, %47 : vector<2x128xf32>
      %cst_38 = arith.constant 5.000000e-01 : f32
      %50 = vector.broadcast %cst_38 : f32 to vector<2x128xf32>
      %51 = arith.addf %49, %50 : vector<2x128xf32>
      %52 = vector.extract_strided_slice %36 {offsets = [0, 128], sizes = [2, 128], strides = [1, 1]} : vector<2x512xf32> to vector<2x128xf32>
      %cst_39 = arith.constant 5.000000e-01 : f32
      %53 = vector.broadcast %cst_39 : f32 to vector<2x128xf32>
      %54 = arith.mulf %53, %52 : vector<2x128xf32>
      %55 = math.tanh %54 : vector<2x128xf32>
      %cst_40 = arith.constant 5.000000e-01 : f32
      %56 = vector.broadcast %cst_40 : f32 to vector<2x128xf32>
      %57 = arith.mulf %56, %55 : vector<2x128xf32>
      %cst_41 = arith.constant 5.000000e-01 : f32
      %58 = vector.broadcast %cst_41 : f32 to vector<2x128xf32>
      %59 = arith.addf %57, %58 : vector<2x128xf32>
      %60 = vector.extract_strided_slice %36 {offsets = [0, 256], sizes = [2, 128], strides = [1, 1]} : vector<2x512xf32> to vector<2x128xf32>
      %61 = math.tanh %60 : vector<2x128xf32>
      %62 = vector.extract_strided_slice %36 {offsets = [0, 384], sizes = [2, 128], strides = [1, 1]} : vector<2x512xf32> to vector<2x128xf32>
      %cst_42 = arith.constant 5.000000e-01 : f32
      %63 = vector.broadcast %cst_42 : f32 to vector<2x128xf32>
      %64 = arith.mulf %63, %62 : vector<2x128xf32>
      %65 = math.tanh %64 : vector<2x128xf32>
      %cst_43 = arith.constant 5.000000e-01 : f32
      %66 = vector.broadcast %cst_43 : f32 to vector<2x128xf32>
      %67 = arith.mulf %66, %65 : vector<2x128xf32>
      %cst_44 = arith.constant 5.000000e-01 : f32
      %68 = vector.broadcast %cst_44 : f32 to vector<2x128xf32>
      %69 = arith.addf %67, %68 : vector<2x128xf32>
      %70 = arith.mulf %59, %arg10 : vector<2x128xf32>
      %71 = arith.mulf %51, %61 : vector<2x128xf32>
      %72 = arith.addf %70, %71 : vector<2x128xf32>
      %73 = math.tanh %72 : vector<2x128xf32>
      %74 = arith.mulf %69, %73 : vector<2x128xf32>
      %75 = vector.extract_strided_slice %43 {offsets = [0, 0], sizes = [2, 128], strides = [1, 1]} : vector<2x512xf32> to vector<2x128xf32>
      %cst_45 = arith.constant 5.000000e-01 : f32
      %76 = vector.broadcast %cst_45 : f32 to vector<2x128xf32>
      %77 = arith.mulf %76, %75 : vector<2x128xf32>
      %78 = math.tanh %77 : vector<2x128xf32>
      %cst_46 = arith.constant 5.000000e-01 : f32
      %79 = vector.broadcast %cst_46 : f32 to vector<2x128xf32>
      %80 = arith.mulf %79, %78 : vector<2x128xf32>
      %cst_47 = arith.constant 5.000000e-01 : f32
      %81 = vector.broadcast %cst_47 : f32 to vector<2x128xf32>
      %82 = arith.addf %80, %81 : vector<2x128xf32>
      %83 = vector.extract_strided_slice %43 {offsets = [0, 128], sizes = [2, 128], strides = [1, 1]} : vector<2x512xf32> to vector<2x128xf32>
      %cst_48 = arith.constant 5.000000e-01 : f32
      %84 = vector.broadcast %cst_48 : f32 to vector<2x128xf32>
      %85 = arith.mulf %84, %83 : vector<2x128xf32>
      %86 = math.tanh %85 : vector<2x128xf32>
      %cst_49 = arith.constant 5.000000e-01 : f32
      %87 = vector.broadcast %cst_49 : f32 to vector<2x128xf32>
      %88 = arith.mulf %87, %86 : vector<2x128xf32>
      %cst_50 = arith.constant 5.000000e-01 : f32
      %89 = vector.broadcast %cst_50 : f32 to vector<2x128xf32>
      %90 = arith.addf %88, %89 : vector<2x128xf32>
      %91 = vector.extract_strided_slice %43 {offsets = [0, 256], sizes = [2, 128], strides = [1, 1]} : vector<2x512xf32> to vector<2x128xf32>
      %92 = math.tanh %91 : vector<2x128xf32>
      %93 = vector.extract_strided_slice %43 {offsets = [0, 384], sizes = [2, 128], strides = [1, 1]} : vector<2x512xf32> to vector<2x128xf32>
      %cst_51 = arith.constant 5.000000e-01 : f32
      %94 = vector.broadcast %cst_51 : f32 to vector<2x128xf32>
      %95 = arith.mulf %94, %93 : vector<2x128xf32>
      %96 = math.tanh %95 : vector<2x128xf32>
      %cst_52 = arith.constant 5.000000e-01 : f32
      %97 = vector.broadcast %cst_52 : f32 to vector<2x128xf32>
      %98 = arith.mulf %97, %96 : vector<2x128xf32>
      %cst_53 = arith.constant 5.000000e-01 : f32
      %99 = vector.broadcast %cst_53 : f32 to vector<2x128xf32>
      %100 = arith.addf %98, %99 : vector<2x128xf32>
      %101 = arith.mulf %90, %arg12 : vector<2x128xf32>
      %102 = arith.mulf %82, %92 : vector<2x128xf32>
      %103 = arith.addf %101, %102 : vector<2x128xf32>
      %104 = math.tanh %103 : vector<2x128xf32>
      %105 = arith.mulf %100, %104 : vector<2x128xf32>
      %106 = arith.truncf %74 : vector<2x128xf32> to vector<2x128xbf16>
      %107 = arith.index_cast %arg8 : i32 to index
      %c0_54 = arith.constant 0 : index
      %c0_55 = arith.constant 0 : index
      %108 = vector.load %arg4[%107, %c0_54, %c0_55] : memref<8x2x128xbf16, #tpu.memory_space<vmem>>, vector<1x2x128xbf16>
      %109 = vector.shape_cast %108 : vector<1x2x128xbf16> to vector<2x128xbf16>
      %110 = vector.shape_cast %106 : vector<2x128xbf16> to vector<1x2x128xbf16>
      tpu.vector_store %arg4[%107, %c0_54, %c0_55], %110 {strides = array<i32>} : memref<8x2x128xbf16, #tpu.memory_space<vmem>>, vector<1x2x128xbf16>,
      %111 = arith.truncf %105 : vector<2x128xf32> to vector<2x128xbf16>
      %112 = arith.index_cast %29 : i32 to index
      %c0_56 = arith.constant 0 : index
      %c0_57 = arith.constant 0 : index
      %113 = vector.load %arg5[%112, %c0_56, %c0_57] : memref<8x2x128xbf16, #tpu.memory_space<vmem>>, vector<1x2x128xbf16>
      %114 = vector.shape_cast %113 : vector<1x2x128xbf16> to vector<2x128xbf16>
      %115 = vector.shape_cast %111 : vector<2x128xbf16> to vector<1x2x128xbf16>
      tpu.vector_store %arg5[%112, %c0_56, %c0_57], %115 {strides = array<i32>} : memref<8x2x128xbf16, #tpu.memory_space<vmem>>, vector<1x2x128xbf16>,
      scf.yield %74, %72, %105, %103 : vector<2x128xf32>, vector<2x128xf32>, vector<2x128xf32>, vector<2x128xf32>
    }
    %c8_i32_18 = arith.constant 8 : i32
    %c0_19 = arith.constant 0 : index
    %c0_20 = arith.constant 0 : index
    %c0_21 = arith.constant 0 : index
    %17 = vector.load %arg6[%c0_19, %c0_20, %c0_21] : memref<2x2x128xf32, #tpu.memory_space<vmem>>, vector<1x2x128xf32>
    %18 = vector.shape_cast %17 : vector<1x2x128xf32> to vector<2x128xf32>
    %19 = vector.shape_cast %16#0 : vector<2x128xf32> to vector<1x2x128xf32>
    tpu.vector_store %arg6[%c0_19, %c0_20, %c0_21], %19 {strides = array<i32>} : memref<2x2x128xf32, #tpu.memory_space<vmem>>, vector<1x2x128xf32>,
    %c0_22 = arith.constant 0 : index
    %c0_23 = arith.constant 0 : index
    %c0_24 = arith.constant 0 : index
    %20 = vector.load %arg7[%c0_22, %c0_23, %c0_24] : memref<2x2x128xf32, #tpu.memory_space<vmem>>, vector<1x2x128xf32>
    %21 = vector.shape_cast %20 : vector<1x2x128xf32> to vector<2x128xf32>
    %22 = vector.shape_cast %16#1 : vector<2x128xf32> to vector<1x2x128xf32>
    tpu.vector_store %arg7[%c0_22, %c0_23, %c0_24], %22 {strides = array<i32>} : memref<2x2x128xf32, #tpu.memory_space<vmem>>, vector<1x2x128xf32>,
    %c1_25 = arith.constant 1 : index
    %c0_26 = arith.constant 0 : index
    %c0_27 = arith.constant 0 : index
    %23 = vector.load %arg6[%c1_25, %c0_26, %c0_27] : memref<2x2x128xf32, #tpu.memory_space<vmem>>, vector<1x2x128xf32>
    %24 = vector.shape_cast %23 : vector<1x2x128xf32> to vector<2x128xf32>
    %25 = vector.shape_cast %16#2 : vector<2x128xf32> to vector<1x2x128xf32>
    tpu.vector_store %arg6[%c1_25, %c0_26, %c0_27], %25 {strides = array<i32>} : memref<2x2x128xf32, #tpu.memory_space<vmem>>, vector<1x2x128xf32>,
    %c1_28 = arith.constant 1 : index
    %c0_29 = arith.constant 0 : index
    %c0_30 = arith.constant 0 : index
    %26 = vector.load %arg7[%c1_28, %c0_29, %c0_30] : memref<2x2x128xf32, #tpu.memory_space<vmem>>, vector<1x2x128xf32>
    %27 = vector.shape_cast %26 : vector<1x2x128xf32> to vector<2x128xf32>
    %28 = vector.shape_cast %16#3 : vector<2x128xf32> to vector<1x2x128xf32>
    tpu.vector_store %arg7[%c1_28, %c0_29, %c0_30], %28 {strides = array<i32>} : memref<2x2x128xf32, #tpu.memory_space<vmem>>, vector<1x2x128xf32>,
    return
  }
  func.func @transform_0(%arg0: i32) -> (i32, i32, i32) {
    %c0_i32 = arith.constant 0 : i32
    %c0_i32_0 = arith.constant 0 : i32
    %c0_i32_1 = arith.constant 0 : i32
    return %arg0, %c0_i32, %c0_i32_0 : i32, i32, i32
  }
  func.func @transform_1(%arg0: i32) -> (i32, i32, i32) {
    %c0_i32 = arith.constant 0 : i32
    %0 = arith.subi %c0_i32, %arg0 : i32
    %c0_i32_0 = arith.constant 0 : i32
    %c1_i32 = arith.constant 1 : i32
    %c0_i32_1 = arith.constant 0 : i32
    return %0, %c0_i32_0, %c1_i32 : i32, i32, i32
  }
  func.func @transform_2(%arg0: i32) -> (i32, i32, i32) {
    %c0_i32 = arith.constant 0 : i32
    %c0_i32_0 = arith.constant 0 : i32
    %c0_i32_1 = arith.constant 0 : i32
    %c0_i32_2 = arith.constant 0 : i32
    return %c0_i32, %c0_i32_0, %c0_i32_1 : i32, i32, i32
  }
  func.func @transform_3(%arg0: i32) -> (i32, i32, i32) {
    %c0_i32 = arith.constant 0 : i32
    %c0_i32_0 = arith.constant 0 : i32
    %c0_i32_1 = arith.constant 0 : i32
    return %arg0, %c0_i32, %c0_i32_0 : i32, i32, i32
  }
  func.func @transform_4(%arg0: i32) -> (i32, i32, i32) {
    %c0_i32 = arith.constant 0 : i32
    %0 = arith.subi %c0_i32, %arg0 : i32
    %c0_i32_0 = arith.constant 0 : i32
    %c0_i32_1 = arith.constant 0 : i32
    %c0_i32_2 = arith.constant 0 : i32
    return %0, %c0_i32_0, %c0_i32_1 : i32, i32, i32
  }
}

module attributes {stable_mosaic.version = 11 : i64} {
  func.func @_matmul_bias_kernel(%arg0: i32, %arg1: i32, %arg2: i32, %arg3: memref<16x256xbf16, #tpu.memory_space<vmem>>, %arg4: memref<256x256xbf16, #tpu.memory_space<vmem>>, %arg5: memref<1x256xf32, #tpu.memory_space<vmem>>, %arg6: memref<16x256xbf16, #tpu.memory_space<vmem>>, %arg7: memref<16x256xf32, #tpu.memory_space<vmem>>) attributes {dimension_semantics = [#tpu.dimension_semantics<parallel>, #tpu.dimension_semantics<parallel>, #tpu.dimension_semantics<arbitrary>], iteration_bounds = array<i64: 1, 4, 1>, scalar_prefetch = 0 : i64, scratch_operands = 1 : i64, tpu.core_type = #tpu.core_type<tc>, window_params = [{transform_indices = @transform_0, window_bounds = array<i64: 16, 256>}, {transform_indices = @transform_1, window_bounds = array<i64: 256, 256>}, {transform_indices = @transform_2, window_bounds = array<i64: 1, 256>}, {transform_indices = @transform_3, window_bounds = array<i64: 16, 256>}]} {
    %c0_i32 = arith.constant 0 : i32
    %0 = arith.cmpi eq, %arg2, %c0_i32 : i32
    %1 = arith.extui %0 : i1 to i32
    %c0_i32_0 = arith.constant 0 : i32
    %2 = arith.cmpi ne, %1, %c0_i32_0 : i32
    scf.if %2 {
      %cst_10 = arith.constant 0.000000e+00 : f32
      %12 = vector.broadcast %cst_10 : f32 to vector<16x256xf32>
      %c0_11 = arith.constant 0 : index
      %c0_12 = arith.constant 0 : index
      %13 = vector.load %arg7[%c0_11, %c0_12] : memref<16x256xf32, #tpu.memory_space<vmem>>, vector<16x256xf32>
      tpu.vector_store %arg7[%c0_11, %c0_12], %12 {strides = array<i32>} : memref<16x256xf32, #tpu.memory_space<vmem>>, vector<16x256xf32>,
    } else {
    }
    %c0 = arith.constant 0 : index
    %c0_1 = arith.constant 0 : index
    %3 = vector.load %arg7[%c0, %c0_1] : memref<16x256xf32, #tpu.memory_space<vmem>>, vector<16x256xf32>
    %c0_2 = arith.constant 0 : index
    %c0_3 = arith.constant 0 : index
    %4 = vector.load %arg3[%c0_2, %c0_3] : memref<16x256xbf16, #tpu.memory_space<vmem>>, vector<16x256xbf16>
    %c0_4 = arith.constant 0 : index
    %c0_5 = arith.constant 0 : index
    %5 = vector.load %arg4[%c0_4, %c0_5] : memref<256x256xbf16, #tpu.memory_space<vmem>>, vector<256x256xbf16>
    %cst = arith.constant dense<0.000000e+00> : vector<16x256xf32>
    %6 = tpu.matmul %4, %5, %cst {dimension_numbers = #tpu.dot_dimension_numbers<[1], [0], [0], [1], [0, 0, 1, 1], [], []>} : vector<16x256xbf16>, vector<256x256xbf16>, vector<16x256xf32> -> vector<16x256xf32>
    %7 = arith.addf %3, %6 : vector<16x256xf32>
    %c0_6 = arith.constant 0 : index
    %c0_7 = arith.constant 0 : index
    %8 = vector.load %arg7[%c0_6, %c0_7] : memref<16x256xf32, #tpu.memory_space<vmem>>, vector<16x256xf32>
    tpu.vector_store %arg7[%c0_6, %c0_7], %7 {strides = array<i32>} : memref<16x256xf32, #tpu.memory_space<vmem>>, vector<16x256xf32>,
    %c0_i32_8 = arith.constant 0 : i32
    %9 = arith.cmpi eq, %arg2, %c0_i32_8 : i32
    %10 = arith.extui %9 : i1 to i32
    %c0_i32_9 = arith.constant 0 : i32
    %11 = arith.cmpi ne, %10, %c0_i32_9 : i32
    scf.if %11 {
      %c0_10 = arith.constant 0 : index
      %c0_11 = arith.constant 0 : index
      %12 = vector.load %arg7[%c0_10, %c0_11] : memref<16x256xf32, #tpu.memory_space<vmem>>, vector<16x256xf32>
      %c0_12 = arith.constant 0 : index
      %c0_13 = arith.constant 0 : index
      %13 = vector.load %arg5[%c0_12, %c0_13] : memref<1x256xf32, #tpu.memory_space<vmem>>, vector<1x256xf32>
      %14 = vector.broadcast %13 : vector<1x256xf32> to vector<16x256xf32>
      %15 = arith.addf %12, %14 : vector<16x256xf32>
      %16 = arith.truncf %15 : vector<16x256xf32> to vector<16x256xbf16>
      %c0_14 = arith.constant 0 : index
      %c0_15 = arith.constant 0 : index
      %17 = vector.load %arg6[%c0_14, %c0_15] : memref<16x256xbf16, #tpu.memory_space<vmem>>, vector<16x256xbf16>
      tpu.vector_store %arg6[%c0_14, %c0_15], %16 {strides = array<i32>} : memref<16x256xbf16, #tpu.memory_space<vmem>>, vector<16x256xbf16>,
    } else {
    }
    return
  }
  func.func @transform_0(%arg0: i32, %arg1: i32, %arg2: i32) -> (i32, i32) {
    %c0_i32 = arith.constant 0 : i32
    return %arg0, %arg2 : i32, i32
  }
  func.func @transform_1(%arg0: i32, %arg1: i32, %arg2: i32) -> (i32, i32) {
    %c0_i32 = arith.constant 0 : i32
    return %arg2, %arg1 : i32, i32
  }
  func.func @transform_2(%arg0: i32, %arg1: i32, %arg2: i32) -> (i32, i32) {
    %c0_i32 = arith.constant 0 : i32
    %c0_i32_0 = arith.constant 0 : i32
    return %c0_i32, %arg1 : i32, i32
  }
  func.func @transform_3(%arg0: i32, %arg1: i32, %arg2: i32) -> (i32, i32) {
    %c0_i32 = arith.constant 0 : i32
    return %arg0, %arg1 : i32, i32
  }
}

module attributes {stable_mosaic.version = 11 : i64} {
  func.func @_fc_transpose_kernel(%arg0: i32, %arg1: memref<8x2x256xbf16, #tpu.memory_space<vmem>>, %arg2: memref<128x256xbf16, #tpu.memory_space<vmem>>, %arg3: memref<128x1xf32, #tpu.memory_space<vmem>>, %arg4: memref<2x128x8xf32, #tpu.memory_space<vmem>>) attributes {dimension_semantics = [#tpu.dimension_semantics<parallel>], iteration_bounds = array<i64: 1>, scalar_prefetch = 0 : i64, scratch_operands = 0 : i64, tpu.core_type = #tpu.core_type<tc>, window_params = [{transform_indices = @transform_0, window_bounds = array<i64: 8, 2, 256>}, {pipeline_mode = #tpu.pipeline_mode<synchronous>, transform_indices = @transform_1, window_bounds = array<i64: 128, 256>}, {pipeline_mode = #tpu.pipeline_mode<synchronous>, transform_indices = @transform_2, window_bounds = array<i64: 128, 1>}, {transform_indices = @transform_3, window_bounds = array<i64: 2, 128, 8>}]} {
    %c0 = arith.constant 0 : index
    %c0_0 = arith.constant 0 : index
    %0 = vector.load %arg2[%c0, %c0_0] : memref<128x256xbf16, #tpu.memory_space<vmem>>, vector<128x256xbf16>
    %c0_1 = arith.constant 0 : index
    %c0_2 = arith.constant 0 : index
    %1 = vector.load %arg3[%c0_1, %c0_2] : memref<128x1xf32, #tpu.memory_space<vmem>>, vector<128x1xf32>
    %c0_3 = arith.constant 0 : index
    %c0_4 = arith.constant 0 : index
    %c0_5 = arith.constant 0 : index
    %2 = vector.load %arg1[%c0_3, %c0_4, %c0_5] : memref<8x2x256xbf16, #tpu.memory_space<vmem>>, vector<8x1x256xbf16>
    %3 = vector.shape_cast %2 : vector<8x1x256xbf16> to vector<8x256xbf16>
    %cst = arith.constant dense<0.000000e+00> : vector<128x8xf32>
    %4 = tpu.matmul %0, %3, %cst {dimension_numbers = #tpu.dot_dimension_numbers<[1], [1], [0], [0], [0, 0, 1, 0], [], []>} : vector<128x256xbf16>, vector<8x256xbf16>, vector<128x8xf32> -> vector<128x8xf32>
    %5 = vector.broadcast %1 : vector<128x1xf32> to vector<128x8xf32>
    %6 = arith.addf %4, %5 : vector<128x8xf32>
    %c0_6 = arith.constant 0 : index
    %c0_7 = arith.constant 0 : index
    %c0_8 = arith.constant 0 : index
    %7 = vector.load %arg4[%c0_6, %c0_7, %c0_8] : memref<2x128x8xf32, #tpu.memory_space<vmem>>, vector<1x128x8xf32>
    %8 = vector.shape_cast %7 : vector<1x128x8xf32> to vector<128x8xf32>
    %9 = vector.shape_cast %6 : vector<128x8xf32> to vector<1x128x8xf32>
    tpu.vector_store %arg4[%c0_6, %c0_7, %c0_8], %9 {strides = array<i32>} : memref<2x128x8xf32, #tpu.memory_space<vmem>>, vector<1x128x8xf32>,
    %c0_9 = arith.constant 0 : index
    %c1 = arith.constant 1 : index
    %c0_10 = arith.constant 0 : index
    %10 = vector.load %arg1[%c0_9, %c1, %c0_10] : memref<8x2x256xbf16, #tpu.memory_space<vmem>>, vector<8x1x256xbf16>
    %11 = vector.shape_cast %10 : vector<8x1x256xbf16> to vector<8x256xbf16>
    %cst_11 = arith.constant dense<0.000000e+00> : vector<128x8xf32>
    %12 = tpu.matmul %0, %11, %cst_11 {dimension_numbers = #tpu.dot_dimension_numbers<[1], [1], [0], [0], [0, 0, 1, 0], [], []>} : vector<128x256xbf16>, vector<8x256xbf16>, vector<128x8xf32> -> vector<128x8xf32>
    %13 = vector.broadcast %1 : vector<128x1xf32> to vector<128x8xf32>
    %14 = arith.addf %12, %13 : vector<128x8xf32>
    %c1_12 = arith.constant 1 : index
    %c0_13 = arith.constant 0 : index
    %c0_14 = arith.constant 0 : index
    %15 = vector.load %arg4[%c1_12, %c0_13, %c0_14] : memref<2x128x8xf32, #tpu.memory_space<vmem>>, vector<1x128x8xf32>
    %16 = vector.shape_cast %15 : vector<1x128x8xf32> to vector<128x8xf32>
    %17 = vector.shape_cast %14 : vector<128x8xf32> to vector<1x128x8xf32>
    tpu.vector_store %arg4[%c1_12, %c0_13, %c0_14], %17 {strides = array<i32>} : memref<2x128x8xf32, #tpu.memory_space<vmem>>, vector<1x128x8xf32>,
    return
  }
  func.func @transform_0(%arg0: i32) -> (i32, i32, i32) {
    %c0_i32 = arith.constant 0 : i32
    %c0_i32_0 = arith.constant 0 : i32
    %c0_i32_1 = arith.constant 0 : i32
    return %arg0, %c0_i32, %c0_i32_0 : i32, i32, i32
  }
  func.func @transform_1(%arg0: i32) -> (i32, i32) {
    %c0_i32 = arith.constant 0 : i32
    %c0_i32_0 = arith.constant 0 : i32
    %c0_i32_1 = arith.constant 0 : i32
    return %c0_i32, %c0_i32_0 : i32, i32
  }
  func.func @transform_2(%arg0: i32) -> (i32, i32) {
    %c0_i32 = arith.constant 0 : i32
    %c0_i32_0 = arith.constant 0 : i32
    %c0_i32_1 = arith.constant 0 : i32
    return %c0_i32, %c0_i32_0 : i32, i32
  }
  func.func @transform_3(%arg0: i32) -> (i32, i32, i32) {
    %c0_i32 = arith.constant 0 : i32
    %c0_i32_0 = arith.constant 0 : i32
    %c0_i32_1 = arith.constant 0 : i32
    return %c0_i32, %c0_i32_0, %arg0 : i32, i32, i32
  }
}

</mosaic_0001>

<llo_original>
// kernel: vocal_separation_hybrid_forward.7
$region0: #{vocal_separation_hybrid_forward.7}
  #allocation0 [shape = 'u32[]', space=smem, size = 0x4, offset = 0x4, fixed_abs, tag = 'smem constant byte address 0x4 - core index']
  #allocation1 [shape = 'u32[144,128]{1,0:T(1,128)}', space=vmem, size = 0x12000, scoped, tag = 'internal scratch']
  #allocation2 [shape = 'f32[16,256]{1,0:T(8,128)}', space=vmem, size = 0x4000, scoped, tag = 'scratch operand']
  %s0 = inlined_call_operand.vmem [shape: bf16[16,256], index: 0, kind: input, shape index: {}]
  %s1 = inlined_call_operand.hbm [shape: bf16[256,1024], index: 1, kind: input, shape index: {}]
  %s2 = inlined_call_operand.vmem [shape: f32[1,1024], index: 2, kind: input, shape index: {}]
  %s3 = inlined_call_operand.vmem [shape: bf16[16,1024], index: 3, kind: output, shape index: {}]
  %s4 = sld [smem:[#allocation0]]
  $region91: #{vocal_separation_hybrid_forward.7} parent=0
    _
  %s6 = ssub.s32 1, %s4
  %s7 = scalar_select 0, %s6, %s4
  $region1: #{vocal_separation_hybrid_forward.7} parent=0
    #allocation3 [shape = 'u8[262144]{0}', space=vmem, size = 0x40000, scoped, tag = 'input window, operand 1']
    #allocation4 [shape = 's32[2]{0}', space=sflag, size = 0x8, scoped, tag = 'scoped memory for vocal_separation_hybrid_forward.7']
    #allocation5 [shape = 'u8[16384]{0}', space=vmem, size = 0x4000, scoped, tag = 'output window, operand 0']
    %8 = vsyncpa [#allocation4], 0
    %s9 = scalar_lea.sflag [#allocation4], 1
    %10 = vsyncpa %s9, 0
    loop: start=0, step=1, limit=6
    $region2: #{vocal_separation_hybrid_forward.7} parent=1 // loop_pre_header
      _
    $region3: #{vocal_separation_hybrid_forward.7} parent=1 // loop_header
      %s12 = sphi 0, %s16
      %p13 = scmp.ge.s32.totalorder %s12, 6
      %s19 = sphi 0, %s38
      %s20 = sphi 0, %s34
      %s21 = sphi 0, %s30
      %s22 = sphi 0, %s19
      %s23 = sphi 0, %s20
      %s24 = sphi 0, %s21
      %s25 = sphi 0, %s22
      %s26 = sphi 0, %s23
      %s27 = sphi 0, %s24
      %s43 = sphi 0, %s45
      %s46 = sphi 0, %s43
      %s47 = sphi 0, %s46
      %s63 = sphi 0, %s47
      %s71 = sphi 0, %s73
      %s74 = sphi 0, %s71
      %s75 = sphi 0, %s74
      %s91 = sphi 0, %s75
      %s97 = sphi 0, %s99
      %s100 = sphi 0, %s97
      %s101 = sphi 0, %s100
      %s117 = sphi 0, %s101
      %s125 = sphi 0, %s127
      %s128 = sphi 0, %s125
      %s129 = sphi 0, %s128
      %s145 = sphi 0, %s129
    $region4: #{vocal_separation_hybrid_forward.7} parent=1 // loop_header_branch
      %15 = sbr.rel (%p13) target = $region8
    $region5: #{vocal_separation_hybrid_forward.7} parent=1 // loop_body
      %s17 = ssub.s32 %s12, 1
      %s18 = ssub.s32 %s12, 2
      %s28 = sadd.s32 1, %s21
      %p29 = scmp.ge.s32.totalorder %s28, 1
      %s30 = scalar_select %p29, 0, %s28
      %s31 = sadd.s32 1, %s20
      %s32 = scalar_select %p29, %s31, %s20
      %p33 = scmp.ge.s32.totalorder %s32, 4
      %s34 = scalar_select %p33, 0, %s32
      %s35 = sadd.s32 1, %s19
      %s36 = scalar_select %p33, %s35, %s19
      %p37 = scmp.ge.s32.totalorder %s36, 1
      %s38 = scalar_select %p37, 0, %s36
      %s39 = ssub.s32 %s19, %s38
      %s40 = ssub.s32 %s21, %s30
      %s41 = sor.u32 %s39, %s40
      %p42 = scmp.eq.s32.totalorder %s41, 0
      %s44 = sadd.s32 %s43, 1
      %s45 = scalar_select %p42, %s43, %s44
      %p48 = pneg %p42
      %p49 = scmp.eq.s32.totalorder %s12, 3
      %p50 = por %p48, %p49
      %p51 = scmp.ne.s32.totalorder %s43, %s46
      %p52 = scmp.eq.s32.totalorder %s12, 0
      %p53 = por %p51, %p52
      %p54 = scmp.ne.s32.totalorder %s43, %s46
      %p55 = scmp.eq.s32.totalorder %s17, 3
      %p56 = por %p54, %p55
      %p57 = scmp.ne.s32.totalorder %s46, %s47
      %p58 = scmp.eq.s32.totalorder %s17, 0
      %p59 = por %p57, %p58
      %p60 = scmp.ne.s32.totalorder %s46, %s47
      %p61 = scmp.eq.s32.totalorder %s18, 3
      %p62 = por %p60, %p61
      %p64 = scmp.ne.s32.totalorder %s47, %s63
      %p65 = scmp.eq.s32.totalorder %s18, 0
      %p66 = por %p64, %p65
      %s67 = ssub.s32 %s21, %s30
      %s68 = ssub.s32 %s20, %s34
      %s69 = sor.u32 %s67, %s68
      %p70 = scmp.eq.s32.totalorder %s69, 0
      %s72 = sadd.s32 %s71, 1
      %s73 = scalar_select %p70, %s71, %s72
      %p76 = pneg %p70
      %p77 = scmp.eq.s32.totalorder %s12, 3
      %p78 = por %p76, %p77
      %p79 = scmp.ne.s32.totalorder %s71, %s74
      %p80 = scmp.eq.s32.totalorder %s12, 0
      %p81 = por %p79, %p80
      %p82 = scmp.ne.s32.totalorder %s71, %s74
      %p83 = scmp.eq.s32.totalorder %s17, 3
      %p84 = por %p82, %p83
      %p85 = scmp.ne.s32.totalorder %s74, %s75
      %p86 = scmp.eq.s32.totalorder %s17, 0
      %p87 = por %p85, %p86
      %p88 = scmp.ne.s32.totalorder %s74, %s75
      %p89 = scmp.eq.s32.totalorder %s18, 3
      %p90 = por %p88, %p89
      %p92 = scmp.ne.s32.totalorder %s75, %s91
      %p93 = scmp.eq.s32.totalorder %s18, 0
      %p94 = por %p92, %p93
      %s95 = ssub.s32 %s20, %s34
      %p96 = scmp.eq.s32.totalorder %s95, 0
      %s98 = sadd.s32 %s97, 1
      %s99 = scalar_select %p96, %s97, %s98
      %p102 = pneg %p96
      %p103 = scmp.eq.s32.totalorder %s12, 3
      %p104 = por %p102, %p103
      %p105 = scmp.ne.s32.totalorder %s97, %s100
      %p106 = scmp.eq.s32.totalorder %s12, 0
      %p107 = por %p105, %p106
      %p108 = scmp.ne.s32.totalorder %s97, %s100
      %p109 = scmp.eq.s32.totalorder %s17, 3
      %p110 = por %p108, %p109
      %p111 = scmp.ne.s32.totalorder %s100, %s101
      %p112 = scmp.eq.s32.totalorder %s17, 0
      %p113 = por %p111, %p112
      %p114 = scmp.ne.s32.totalorder %s100, %s101
      %p115 = scmp.eq.s32.totalorder %s18, 3
      %p116 = por %p114, %p115
      %p118 = scmp.ne.s32.totalorder %s101, %s117
      %p119 = scmp.eq.s32.totalorder %s18, 0
      %p120 = por %p118, %p119
      %s121 = ssub.s32 %s19, %s38
      %s122 = ssub.s32 %s20, %s34
      %s123 = sor.u32 %s121, %s122
      %p124 = scmp.eq.s32.totalorder %s123, 0
      %s126 = sadd.s32 %s125, 1
      %s127 = scalar_select %p124, %s125, %s126
      %p130 = pneg %p124
      %p131 = scmp.eq.s32.totalorder %s12, 3
      %p132 = por %p130, %p131
      %p133 = scmp.ne.s32.totalorder %s125, %s128
      %p134 = scmp.eq.s32.totalorder %s12, 0
      %p135 = por %p133, %p134
      %p136 = scmp.ne.s32.totalorder %s125, %s128
      %p137 = scmp.eq.s32.totalorder %s17, 3
      %p138 = por %p136, %p137
      %p139 = scmp.ne.s32.totalorder %s128, %s129
      %p140 = scmp.eq.s32.totalorder %s17, 0
      %p141 = por %p139, %p140
      %p142 = scmp.ne.s32.totalorder %s128, %s129
      %p143 = scmp.eq.s32.totalorder %s18, 3
      %p144 = por %p142, %p143
      %p146 = scmp.ne.s32.totalorder %s129, %s145
      %p147 = scmp.eq.s32.totalorder %s18, 0
      %p148 = por %p146, %p147
      %p149 = scmp.le.s32.totalorder 1, %s12
      %p150 = scmp.lt.s32.totalorder %s12, 5
      %p151 = pnand %p149, %p150
      %p152 = pneg %p151
      // Predicated region
      $region9: #{vocal_separation_hybrid_forward.7} parent=5 // pred_check
        _
      $region10: #{vocal_separation_hybrid_forward.7} parent=5 // pred_check_branch
        %154 = sbr.rel (%p151) target = $region12
      $region11: #{vocal_separation_hybrid_forward.7} parent=5 // pred_region
        %s155 = ssub.s32 %s12, 1
        // Predicated region
        $region13: #{vocal_separation_hybrid_forward.7} parent=11 // pred_check
          %p156 = pneg %p59
        $region14: #{vocal_separation_hybrid_forward.7} parent=11 // pred_check_branch
          %158 = sbr.rel (%p156) target = $region16
        $region15: #{vocal_separation_hybrid_forward.7} parent=11 // pred_region
          %s159 = smul.u32 2, %s22
          %s160 = smul.u32 2, %s24
          %p161 = scmp.lt.s32.totalorder %s159, 1
          %s162 = scalar_select %p161, %s159, 1
          %p163 = scmp.lt.s32.totalorder %s160, 1
          %s164 = scalar_select %p163, %s160, 1
          %s165 = smul.addr %s162, 2
          %s166 = sadd.s32 %s164, %s165
          %s167 = smul.addr %s166, 4
          %s168 = scalar_lea.vmem %s0, %s167
          %s169 = smul.u32 2, %s22
          %s170 = smul.u32 2, %s24
        $region16: #{vocal_separation_hybrid_forward.7} parent=11 // pred_fallthru
          _
      $region12: #{vocal_separation_hybrid_forward.7} parent=5 // pred_fallthru
        _
      %p171 = scmp.lt.s32.totalorder %s12, 4
      // Predicated region
      $region17: #{vocal_separation_hybrid_forward.7} parent=5 // pred_check
        %p172 = pneg %p171
      $region18: #{vocal_separation_hybrid_forward.7} parent=5 // pred_check_branch
        %174 = sbr.rel (%p172) target = $region20
      $region19: #{vocal_separation_hybrid_forward.7} parent=5 // pred_region
        // Predicated region
        $region21: #{vocal_separation_hybrid_forward.7} parent=19 // pred_check
          %p175 = pneg %p81
        $region22: #{vocal_separation_hybrid_forward.7} parent=19 // pred_check_branch
          %177 = sbr.rel (%p175) target = $region24
        $region23: #{vocal_separation_hybrid_forward.7} parent=19 // pred_region
          %s178 = sand.u32 %s71, 1
          %s179 = scalar_lea.sflag [#allocation4], %s178
          %s180 = sand.u32 %s71, 1
          %s181 = smul.addr %s180, 256
          %s182 = scalar_lea.vmem [#allocation3], %s181
          %s183 = smul.u32 32, %s21
          %s184 = smul.u32 2, %s20
          %s186 = ssub.s32 4096, 4096
          %187 = vsyncadd %s179, %s186
          %s188 = smul.addr %s183, 8
          %s189 = sadd.s32 %s184, %s188
          %s190 = smul.addr %s189, 64
          %s191 = scalar_lea.hbm %s1, %s190
          %s192 = sshll.u32 %s182, 4
          %s193 = int_to_ptr.vmem [resolvable:$true] %s192
          %198 = dma.hbm_to_vmem [thread:$0]  %s191, 4096, %s193, %s179, 512, 128, 8
        $region24: #{vocal_separation_hybrid_forward.7} parent=19 // pred_fallthru
          _
        // Predicated region
        $region25: #{vocal_separation_hybrid_forward.7} parent=19 // pred_check
          %p199 = pneg %p107
        $region26: #{vocal_separation_hybrid_forward.7} parent=19 // pred_check_branch
          %201 = sbr.rel (%p199) target = $region28
        $region27: #{vocal_separation_hybrid_forward.7} parent=19 // pred_region
          %s202 = smul.u32 2, %s20
          %p203 = scmp.lt.s32.totalorder %s202, 7
          %s204 = scalar_select %p203, %s202, 7
          %s205 = scalar_lea.vmem %s2, %s204
          %s206 = smul.u32 2, %s20
        $region28: #{vocal_separation_hybrid_forward.7} parent=19 // pred_fallthru
          _
      $region20: #{vocal_separation_hybrid_forward.7} parent=5 // pred_fallthru
        _
      %p207 = scmp.le.s32.totalorder 1, %s12
      %p208 = scmp.lt.s32.totalorder %s12, 5
      %p209 = pnand %p207, %p208
      %p210 = pneg %p209
      // Predicated region
      $region29: #{vocal_separation_hybrid_forward.7} parent=5 // pred_check
        _
      $region30: #{vocal_separation_hybrid_forward.7} parent=5 // pred_check_branch
        %212 = sbr.rel (%p209) target = $region32
      $region31: #{vocal_separation_hybrid_forward.7} parent=5 // pred_region
        %s213 = ssub.s32 %s12, 1
        %s214 = sand.u32 %s74, 1
        %s215 = scalar_lea.sflag [#allocation4], %s214
        %s216 = sand.u32 %s74, 1
        %s217 = smul.addr %s216, 256
        %s218 = scalar_lea.vmem [#allocation3], %s217
        // Predicated region
        $region33: #{vocal_separation_hybrid_forward.7} parent=31 // pred_check
          %p219 = pneg %p87
        $region34: #{vocal_separation_hybrid_forward.7} parent=31 // pred_check_branch
          %221 = sbr.rel (%p219) target = $region36
        $region35: #{vocal_separation_hybrid_forward.7} parent=31 // pred_region
          %222 = dma.done %s215, 4096
        $region36: #{vocal_separation_hybrid_forward.7} parent=31 // pred_fallthru
          _
        %s223 = smul.u32 2, %s22
        %s224 = smul.u32 2, %s24
        %p225 = scmp.lt.s32.totalorder %s223, 1
        %s226 = scalar_select %p225, %s223, 1
        %p227 = scmp.lt.s32.totalorder %s224, 1
        %s228 = scalar_select %p227, %s224, 1
        %s229 = smul.addr %s226, 2
        %s230 = sadd.s32 %s228, %s229
        %s231 = smul.addr %s230, 4
        %s232 = scalar_lea.vmem %s0, %s231
        %p233 = pneg %p59
        %p234 = pneg %p56
        %s235 = sand.u32 %s74, 1
        %s236 = scalar_lea.sflag [#allocation4], %s235
        %s237 = sand.u32 %s74, 1
        %s238 = smul.addr %s237, 256
        %s239 = scalar_lea.vmem [#allocation3], %s238
        %p240 = pneg %p87
        %p241 = pneg %p84
        %s242 = smul.u32 2, %s23
        %p243 = scmp.lt.s32.totalorder %s242, 7
        %s244 = scalar_select %p243, %s242, 7
        %s245 = scalar_lea.vmem %s2, %s244
        %p246 = pneg %p113
        %p247 = pneg %p110
        %p248 = pneg %p141
        %p249 = pneg %p138
        %s250 = sand.u32 %s128, 1
        %s251 = sand.u32 %s128, 1
        %s252 = smul.addr %s251, 16
        %s253 = scalar_lea.vmem [#allocation5], %s252
        %s254 = smul.u32 2, %s22
        %s255 = smul.u32 2, %s24
        %p256 = scmp.lt.s32.totalorder %s254, 1
        %s257 = scalar_select %p256, %s254, 1
        %p258 = scmp.lt.s32.totalorder %s255, 1
        %s259 = scalar_select %p258, %s255, 1
        %s260 = smul.addr %s257, 2
        %s261 = sadd.s32 %s259, %s260
        %s262 = smul.addr %s261, 4
        %s263 = scalar_lea.vmem %s0, %s262
        %s264 = smul.u32 2, %s22
        %s265 = smul.u32 2, %s24
        %s266 = smul.u32 32, %s24
        %s267 = smul.u32 2, %s23
        %s268 = smul.u32 2, %s23
        %p269 = scmp.lt.s32.totalorder %s268, 7
        %s270 = scalar_select %p269, %s268, 7
        %s271 = scalar_lea.vmem %s2, %s270
        %s272 = smul.u32 2, %s23
        %s273 = smul.u32 2, %s22
        %s274 = smul.u32 2, %s23
        %p275 = scmp.eq.s32.totalorder %s24, 0
        // Predicated region
        $region37: #{vocal_separation_hybrid_forward.7} parent=31 // pred_check
          %p276 = pneg %p275
        $region38: #{vocal_separation_hybrid_forward.7} parent=31 // pred_check_branch
          %278 = sbr.rel (%p276) target = $region40
        $region39: #{vocal_separation_hybrid_forward.7} parent=31 // pred_region
          %279 = vst [vmem:[#allocation2] sm:$0xff] 0.0
          %280 = vst [vmem:[#allocation2 + $0x8] sm:$0xff] 0.0
          %281 = vst [vmem:[#allocation2 + $0x10] sm:$0xff] 0.0
          %282 = vst [vmem:[#allocation2 + $0x18] sm:$0xff] 0.0
        $region40: #{vocal_separation_hybrid_forward.7} parent=31 // pred_fallthru
          _
        %v283 = vld [vmem:[#allocation2] sm:$0xff]
        %v284 = vld [vmem:[#allocation2 + $0x8] sm:$0xff]
        %v285 = vld [vmem:[#allocation2 + $0x10] sm:$0xff]
        %v286 = vld [vmem:[#allocation2 + $0x18] sm:$0xff]
        %v287 = vld [vmem:[%s263] sm:$0xff]
        %v288 = vld [vmem:[%s263 + $0x8] sm:$0xff]
        %v289 = vld [vmem:[%s218] sm:$0xff]
        %v290 = vld [vmem:[%s218 + $0x8] sm:$0xff]
        %v291 = vld [vmem:[%s218 + $0x10] sm:$0xff]
        %v292 = vld [vmem:[%s218 + $0x18] sm:$0xff]
        %v293 = vld [vmem:[%s218 + $0x20] sm:$0xff]
        %v294 = vld [vmem:[%s218 + $0x28] sm:$0xff]
        %v295 = vld [vmem:[%s218 + $0x30] sm:$0xff]
        %v296 = vld [vmem:[%s218 + $0x38] sm:$0xff]
        %v297 = vld [vmem:[%s218 + $0x40] sm:$0xff]
        %v298 = vld [vmem:[%s218 + $0x48] sm:$0xff]
        %v299 = vld [vmem:[%s218 + $0x50] sm:$0xff]
        %v300 = vld [vmem:[%s218 + $0x58] sm:$0xff]
        %v301 = vld [vmem:[%s218 + $0x60] sm:$0xff]
        %v302 = vld [vmem:[%s218 + $0x68] sm:$0xff]
        %v303 = vld [vmem:[%s218 + $0x70] sm:$0xff]
        %v304 = vld [vmem:[%s218 + $0x78] sm:$0xff]
        %v305 = vld [vmem:[%s218 + $0x80] sm:$0xff]
        %v306 = vld [vmem:[%s218 + $0x88] sm:$0xff]
        %v307 = vld [vmem:[%s218 + $0x90] sm:$0xff]
        %v308 = vld [vmem:[%s218 + $0x98] sm:$0xff]
        %v309 = vld [vmem:[%s218 + $0xa0] sm:$0xff]
        %v310 = vld [vmem:[%s218 + $0xa8] sm:$0xff]
        %v311 = vld [vmem:[%s218 + $0xb0] sm:$0xff]
        %v312 = vld [vmem:[%s218 + $0xb8] sm:$0xff]
        %v313 = vld [vmem:[%s218 + $0xc0] sm:$0xff]
        %v314 = vld [vmem:[%s218 + $0xc8] sm:$0xff]
        %v315 = vld [vmem:[%s218 + $0xd0] sm:$0xff]
        %v316 = vld [vmem:[%s218 + $0xd8] sm:$0xff]
        %v317 = vld [vmem:[%s218 + $0xe0] sm:$0xff]
        %v318 = vld [vmem:[%s218 + $0xe8] sm:$0xff]
        %v319 = vld [vmem:[%s218 + $0xf0] sm:$0xff]
        %v320 = vld [vmem:[%s218 + $0xf8] sm:$0xff]
        %v323 = vunpack.c.l.b16 %v287
        %v324 = vunpack.c.h.b16 %v287
        %v325 = vunpack.c.l.b16 %v288
        %v326 = vunpack.c.h.b16 %v288
        %v327 = vpack.c.b16 %v325, %v323
        %v328 = vpack.c.b16 %v326, %v324
        %v363 = vunpack.c.l.b16 %v289
        %v364 = vunpack.c.h.b16 %v289
        %v365 = vunpack.c.l.b16 %v290
        %v366 = vunpack.c.h.b16 %v290
        %v367 = vunpack.c.l.b16 %v291
        %v368 = vunpack.c.h.b16 %v291
        %v369 = vunpack.c.l.b16 %v292
        %v370 = vunpack.c.h.b16 %v292
        %v371 = vunpack.c.l.b16 %v293
        %v372 = vunpack.c.h.b16 %v293
        %v373 = vunpack.c.l.b16 %v294
        %v374 = vunpack.c.h.b16 %v294
        %v375 = vunpack.c.l.b16 %v295
        %v376 = vunpack.c.h.b16 %v295
        %v377 = vunpack.c.l.b16 %v296
        %v378 = vunpack.c.h.b16 %v296
        %v379 = vunpack.c.l.b16 %v297
        %v380 = vunpack.c.h.b16 %v297
        %v381 = vunpack.c.l.b16 %v298
        %v382 = vunpack.c.h.b16 %v298
        %v383 = vunpack.c.l.b16 %v299
        %v384 = vunpack.c.h.b16 %v299
        %v385 = vunpack.c.l.b16 %v300
        %v386 = vunpack.c.h.b16 %v300
        %v387 = vunpack.c.l.b16 %v301
        %v388 = vunpack.c.h.b16 %v301
        %v389 = vunpack.c.l.b16 %v302
        %v390 = vunpack.c.h.b16 %v302
        %v391 = vunpack.c.l.b16 %v303
        %v392 = vunpack.c.h.b16 %v303
        %v393 = vunpack.c.l.b16 %v304
        %v394 = vunpack.c.h.b16 %v304
        %v395 = vunpack.c.l.b16 %v305
        %v396 = vunpack.c.h.b16 %v305
        %v397 = vunpack.c.l.b16 %v306
        %v398 = vunpack.c.h.b16 %v306
        %v399 = vunpack.c.l.b16 %v307
        %v400 = vunpack.c.h.b16 %v307
        %v401 = vunpack.c.l.b16 %v308
        %v402 = vunpack.c.h.b16 %v308
        %v403 = vunpack.c.l.b16 %v309
        %v404 = vunpack.c.h.b16 %v309
        %v405 = vunpack.c.l.b16 %v310
        %v406 = vunpack.c.h.b16 %v310
        %v407 = vunpack.c.l.b16 %v311
        %v408 = vunpack.c.h.b16 %v311
        %v409 = vunpack.c.l.b16 %v312
        %v410 = vunpack.c.h.b16 %v312
        %v411 = vunpack.c.l.b16 %v313
        %v412 = vunpack.c.h.b16 %v313
        %v413 = vunpack.c.l.b16 %v314
        %v414 = vunpack.c.h.b16 %v314
        %v415 = vunpack.c.l.b16 %v315
        %v416 = vunpack.c.h.b16 %v315
        %v417 = vunpack.c.l.b16 %v316
        %v418 = vunpack.c.h.b16 %v316
        %v419 = vunpack.c.l.b16 %v317
        %v420 = vunpack.c.h.b16 %v317
        %v421 = vunpack.c.l.b16 %v318
        %v422 = vunpack.c.h.b16 %v318
        %v423 = vunpack.c.l.b16 %v319
        %v424 = vunpack.c.h.b16 %v319
        %v425 = vunpack.c.l.b16 %v320
        %v426 = vunpack.c.h.b16 %v320
        %v427 = vpack.c.b16 %v365, %v363
        %v428 = vpack.c.b16 %v366, %v364
        %v429 = vpack.c.b16 %v369, %v367
        %v430 = vpack.c.b16 %v370, %v368
        %v431 = vpack.c.b16 %v373, %v371
        %v432 = vpack.c.b16 %v374, %v372
        %v433 = vpack.c.b16 %v377, %v375
        %v434 = vpack.c.b16 %v378, %v376
        %v435 = vpack.c.b16 %v381, %v379
        %v436 = vpack.c.b16 %v382, %v380
        %v437 = vpack.c.b16 %v385, %v383
        %v438 = vpack.c.b16 %v386, %v384
        %v439 = vpack.c.b16 %v389, %v387
        %v440 = vpack.c.b16 %v390, %v388
        %v441 = vpack.c.b16 %v393, %v391
        %v442 = vpack.c.b16 %v394, %v392
        %v443 = vpack.c.b16 %v397, %v395
        %v444 = vpack.c.b16 %v398, %v396
        %v445 = vpack.c.b16 %v401, %v399
        %v446 = vpack.c.b16 %v402, %v400
        %v447 = vpack.c.b16 %v405, %v403
        %v448 = vpack.c.b16 %v406, %v404
        %v449 = vpack.c.b16 %v409, %v407
        %v450 = vpack.c.b16 %v410, %v408
        %v451 = vpack.c.b16 %v413, %v411
        %v452 = vpack.c.b16 %v414, %v412
        %v453 = vpack.c.b16 %v417, %v415
        %v454 = vpack.c.b16 %v418, %v416
        %v455 = vpack.c.b16 %v421, %v419
        %v456 = vpack.c.b16 %v422, %v420
        %v457 = vpack.c.b16 %v425, %v423
        %v458 = vpack.c.b16 %v426, %v424
        %491 = vmatprep.subr.bf16.mxu0 %v428
        %492 = vmatpush1.bf16.msra.mxu0 %v427
        %493 = vmatprep.subr.bf16.mxu0 %v430
        %494 = vmatpush1.bf16.msra.mxu0 %v429
        %495 = vmatprep.subr.bf16.mxu0 %v432
        %496 = vmatpush1.bf16.msra.mxu0 %v431
        %497 = vmatprep.subr.bf16.mxu0 %v434
        %498 = vmatpush1.bf16.msra.mxu0 %v433
        %499 = vmatprep.subr.bf16.mxu0 %v436
        %500 = vmatpush1.bf16.msra.mxu0 %v435
        %501 = vmatprep.subr.bf16.mxu0 %v438
        %502 = vmatpush1.bf16.msra.mxu0 %v437
        %503 = vmatprep.subr.bf16.mxu0 %v440
        %504 = vmatpush1.bf16.msra.mxu0 %v439
        %505 = vmatprep.subr.bf16.mxu0 %v442
        %506 = vmatpush1.bf16.msra.mxu0 %v441
        %507 = vmatprep.subr.bf16.mxu0 %v444
        %508 = vmatpush1.bf16.msra.mxu0 %v443
        %509 = vmatprep.subr.bf16.mxu0 %v446
        %510 = vmatpush1.bf16.msra.mxu0 %v445
        %511 = vmatprep.subr.bf16.mxu0 %v448
        %512 = vmatpush1.bf16.msra.mxu0 %v447
        %513 = vmatprep.subr.bf16.mxu0 %v450
        %514 = vmatpush1.bf16.msra.mxu0 %v449
        %515 = vmatprep.subr.bf16.mxu0 %v452
        %516 = vmatpush1.bf16.msra.mxu0 %v451
        %517 = vmatprep.subr.bf16.mxu0 %v454
        %518 = vmatpush1.bf16.msra.mxu0 %v453
        %519 = vmatprep.subr.bf16.mxu0 %v456
        %520 = vmatpush1.bf16.msra.mxu0 %v455
        %521 = vmatprep.subr.bf16.mxu0 %v458
        %522 = vmatpush1.bf16.msra.mxu0 %v457
        %523 = vmatprep.mubr.bf16.mxu0 %v328
        %524 = vmatmul.mubr.bf16.gmra.mrb[0].mxu0 %v327
        %v525 = vpop.f32.mrb[0].mxu0
        %v526 = vadd.f32 0.0, %v525
        %v527 = vpop.f32.mrb[0].mxu0
        %v528 = vadd.f32 0.0, %v527
        %v529 = vpop.f32.mrb[0].mxu0
        %v530 = vadd.f32 0.0, %v529
        %v531 = vpop.f32.mrb[0].mxu0
        %v532 = vadd.f32 0.0, %v531
        %533 = vdwg.mxu0
        %v534 = vadd.f32 %v283, %v526
        %v535 = vadd.f32 %v284, %v528
        %v536 = vadd.f32 %v285, %v530
        %v537 = vadd.f32 %v286, %v532
        %538 = vst [vmem:[#allocation2] sm:$0xff] %v534
        %539 = vst [vmem:[#allocation2 + $0x8] sm:$0xff] %v535
        %540 = vst [vmem:[#allocation2 + $0x10] sm:$0xff] %v536
        %541 = vst [vmem:[#allocation2 + $0x18] sm:$0xff] %v537
        // Predicated region
        $region41: #{vocal_separation_hybrid_forward.7} parent=31 // pred_check
          %p542 = pneg %p275
        $region42: #{vocal_separation_hybrid_forward.7} parent=31 // pred_check_branch
          %544 = sbr.rel (%p542) target = $region44
        $region43: #{vocal_separation_hybrid_forward.7} parent=31 // pred_region
          %v545 = vld [vmem:[#allocation2] sm:$0xff]
          %v546 = vld [vmem:[#allocation2 + $0x8] sm:$0xff]
          %v547 = vld [vmem:[#allocation2 + $0x10] sm:$0xff]
          %v548 = vld [vmem:[#allocation2 + $0x18] sm:$0xff]
          %v549 = vld [vmem:[%s271] sm:$0x3]
          %v551 = vlaneseq
          %v552 = vshrl.u32 %v551, 7
          %v553 = vsub.s32 0, %v552
          %v554 = vrot.slane %v549, %v553
          %v555 = vlaneseq
          %v556 = vshrl.u32 %v555, 7
          %v557 = vsub.s32 1, %v556
          %v558 = vrot.slane %v549, %v557
          %v561 = vadd.f32 %v545, %v554
          %v562 = vadd.f32 %v546, %v558
          %v563 = vadd.f32 %v547, %v554
          %v564 = vadd.f32 %v548, %v558
          %v565 = vpack.c.bf16 %v563, %v561
          %v566 = vpack.c.bf16 %v564, %v562
          %v569 = vunpack.c.l.b16 %v565
          %v570 = vunpack.c.l.b16 %v566
          %v571 = vunpack.c.h.b16 %v565
          %v572 = vunpack.c.h.b16 %v566
          %v573 = vpack.c.b16 %v570, %v569
          %v574 = vpack.c.b16 %v572, %v571
          %577 = vst [vmem:[%s253] sm:$0xff] %v573
          %578 = vst [vmem:[%s253 + $0x8] sm:$0xff] %v574
        $region44: #{vocal_separation_hybrid_forward.7} parent=31 // pred_fallthru
          _
        %s579 = sand.u32 %s128, 1
        %s580 = sand.u32 %s128, 1
        %s581 = smul.addr %s580, 16
        %s582 = scalar_lea.vmem [#allocation5], %s581
        // Predicated region
        $region45: #{vocal_separation_hybrid_forward.7} parent=31 // pred_check
          %p583 = pneg %p138
        $region46: #{vocal_separation_hybrid_forward.7} parent=31 // pred_check_branch
          %585 = sbr.rel (%p583) target = $region48
        $region47: #{vocal_separation_hybrid_forward.7} parent=31 // pred_region
          %s586 = smul.u32 2, %s22
          %s587 = smul.u32 2, %s23
          %s588 = smul.addr %s586, 8
          %s589 = sadd.s32 %s587, %s588
          %s590 = smul.addr %s589, 4
          %s591 = scalar_lea.vmem %s3, %s590
          // Predicated region
          $region49: #{vocal_separation_hybrid_forward.7} parent=47 // pred_check
            _
          $region50: #{vocal_separation_hybrid_forward.7} parent=47 // pred_check_branch
            %593 = sbr.rel (0) target = $region52
          $region51: #{vocal_separation_hybrid_forward.7} parent=47 // pred_region
            // Predicated region
            $region53: #{vocal_separation_hybrid_forward.7} parent=51 // pred_check
              _
            $region54: #{vocal_separation_hybrid_forward.7} parent=51 // pred_check_branch
              %595 = sbr.rel (0) target = $region56
            $region55: #{vocal_separation_hybrid_forward.7} parent=51 // pred_region
              // Predicated region
              $region68: #{vocal_separation_hybrid_forward.7} parent=55 // pred_check
                _
              $region69: #{vocal_separation_hybrid_forward.7} parent=55 // pred_check_branch
                %612 = sbr.rel (0) target = $region71
              $region70: #{vocal_separation_hybrid_forward.7} parent=55 // pred_region
                loop: start=0, step=1, limit=1
                $region72: #{vocal_separation_hybrid_forward.7} parent=70 // loop_pre_header
                  _
                $region73: #{vocal_separation_hybrid_forward.7} parent=70 // loop_header
                  %s614 = sphi 0, %s618
                  %p615 = scmp.ge.s32.totalorder %s614, 1
                  %s619 = sphi %s582, %s582
                  %s620 = sphi %s591, %s591
                $region74: #{vocal_separation_hybrid_forward.7} parent=70 // loop_header_branch
                  %617 = sbr.rel (%p615) target = $region78
                $region75: #{vocal_separation_hybrid_forward.7} parent=70 // loop_body
                  %v621 = vld [vmem:[%s619] sm:$0xff]
                  %622 = vst [vmem:[%s620] sm:$0xff] %v621
                  %v623 = vld [vmem:[%s619 + $0x8] sm:$0xff]
                  %624 = vst [vmem:[%s620 + $0x20] sm:$0xff] %v623
                $region76: #{vocal_separation_hybrid_forward.7} parent=70 // loop_footer
                  %s618 = sadd.s32 1, %s614
                $region77: #{vocal_separation_hybrid_forward.7} parent=70 // loop_footer_branch
                  %613 = sbr.rel target = $region73
                $region78: #{vocal_separation_hybrid_forward.7} parent=70 // loop_exit
                  _
              $region71: #{vocal_separation_hybrid_forward.7} parent=55 // pred_fallthru
                _
              // Predicated region
              $region79: #{vocal_separation_hybrid_forward.7} parent=55 // pred_check
                _
              $region80: #{vocal_separation_hybrid_forward.7} parent=55 // pred_check_branch
                %626 = sbr.rel target = $region82
              $region81: #{vocal_separation_hybrid_forward.7} parent=55 // pred_region
                _
              $region82: #{vocal_separation_hybrid_forward.7} parent=55 // pred_fallthru
                _
            $region56: #{vocal_separation_hybrid_forward.7} parent=51 // pred_fallthru
              _
            // Predicated region
            $region57: #{vocal_separation_hybrid_forward.7} parent=51 // pred_check
              _
            $region58: #{vocal_separation_hybrid_forward.7} parent=51 // pred_check_branch
              %597 = sbr.rel target = $region60
            $region59: #{vocal_separation_hybrid_forward.7} parent=51 // pred_region
              loop: start=0, step=1, limit=1
              $region61: #{vocal_separation_hybrid_forward.7} parent=59 // loop_pre_header
                _
              $region62: #{vocal_separation_hybrid_forward.7} parent=59 // loop_header
                %s600 = sphi 0, %s604
                %p601 = scmp.ge.s32.totalorder %s600, 1
                %s605 = sphi %s582, %s582
                %s606 = sphi %s591, %s591
              $region63: #{vocal_separation_hybrid_forward.7} parent=59 // loop_header_branch
                %603 = sbr.rel (%p601) target = $region67
              $region64: #{vocal_separation_hybrid_forward.7} parent=59 // loop_body
                %v607 = vld [vmem:[%s605] sm:$0xff]
                %608 = vst [vmem:[%s606] sm:$0xff] %v607
                %v609 = vld [vmem:[%s605 + $0x8] sm:$0xff]
                %610 = vst [vmem:[%s606 + $0x20] sm:$0xff] %v609
              $region65: #{vocal_separation_hybrid_forward.7} parent=59 // loop_footer
                %s604 = sadd.s32 1, %s600
              $region66: #{vocal_separation_hybrid_forward.7} parent=59 // loop_footer_branch
                %599 = sbr.rel target = $region62
              $region67: #{vocal_separation_hybrid_forward.7} parent=59 // loop_exit
                _
            $region60: #{vocal_separation_hybrid_forward.7} parent=51 // pred_fallthru
              _
          $region52: #{vocal_separation_hybrid_forward.7} parent=47 // pred_fallthru
            _
          %627 = vnop
        $region48: #{vocal_separation_hybrid_forward.7} parent=31 // pred_fallthru
          _
      $region32: #{vocal_separation_hybrid_forward.7} parent=5 // pred_fallthru
        _
      %p628 = scmp.le.s32.totalorder 2, %s12
      // Predicated region
      $region83: #{vocal_separation_hybrid_forward.7} parent=5 // pred_check
        %p629 = pneg %p628
      $region84: #{vocal_separation_hybrid_forward.7} parent=5 // pred_check_branch
        %631 = sbr.rel (%p629) target = $region86
      $region85: #{vocal_separation_hybrid_forward.7} parent=5 // pred_region
        %s632 = ssub.s32 %s12, 2
        // Predicated region
        $region87: #{vocal_separation_hybrid_forward.7} parent=85 // pred_check
          %p633 = pneg %p144
        $region88: #{vocal_separation_hybrid_forward.7} parent=85 // pred_check_branch
          %635 = sbr.rel (%p633) target = $region90
        $region89: #{vocal_separation_hybrid_forward.7} parent=85 // pred_region
          %s636 = sand.u32 %s129, 1
          %s637 = sand.u32 %s129, 1
          %s638 = smul.addr %s637, 16
          %s639 = scalar_lea.vmem [#allocation5], %s638
        $region90: #{vocal_separation_hybrid_forward.7} parent=85 // pred_fallthru
          _
      $region86: #{vocal_separation_hybrid_forward.7} parent=5 // pred_fallthru
        _
    $region6: #{vocal_separation_hybrid_forward.7} parent=1 // loop_footer
      %s16 = sadd.s32 1, %s12
    $region7: #{vocal_separation_hybrid_forward.7} parent=1 // loop_footer_branch
      %11 = sbr.rel target = $region3
    $region8: #{vocal_separation_hybrid_forward.7} parent=1 // loop_exit
      _
    %640 = vsyncpa [#allocation4], 1
    %s641 = scalar_lea.sflag [#allocation4], 1
    %642 = vsyncpa %s641, 1

// kernel: vocal_separation_hybrid_forward.6
$region0: #{vocal_separation_hybrid_forward.6}
  #allocation0 [shape = 'u32[]', space=smem, size = 0x4, offset = 0x4, fixed_abs, tag = 'smem constant byte address 0x4 - core index']
  #allocation1 [shape = 'u32[144,128]{1,0:T(1,128)}', space=vmem, size = 0x12000, scoped, tag = 'internal scratch']
  %s0 = inlined_call_operand.vmem [shape: f32[2,1,12,20], index: 0, kind: input, shape index: {}]
  %s1 = inlined_call_operand.hbm [shape: bf16[3,20,144], index: 1, kind: input, shape index: {}]
  %s2 = inlined_call_operand.vmem [shape: f32[1,144], index: 2, kind: input, shape index: {}]
  %s3 = inlined_call_operand.hbm [shape: bf16[3,144,256], index: 3, kind: input, shape index: {}]
  %s4 = inlined_call_operand.vmem [shape: f32[1,256], index: 4, kind: input, shape index: {}]
  %s5 = inlined_call_operand.vmem [shape: bf16[8,512], index: 5, kind: output, shape index: {}]
  %s6 = sld [smem:[#allocation0]]
  $region61: #{vocal_separation_hybrid_forward.6} parent=0
    _
  %s8 = ssub.s32 1, %s6
  %s9 = scalar_select 0, %s8, %s6
  $region1: #{vocal_separation_hybrid_forward.6} parent=0
    #allocation2 [shape = 'u8[36864]{0}', space=vmem, size = 0x9000, scoped, tag = 'input window, operand 1, single buffered']
    #allocation3 [shape = 's32[2]{0}', space=sflag, size = 0x8, scoped, tag = 'scoped memory for vocal_separation_hybrid_forward.6']
    #allocation4 [shape = 'u8[221184]{0}', space=vmem, size = 0x36000, scoped, tag = 'input window, operand 3, single buffered']
    #allocation5 [shape = 's32[1]{0}', space=sflag, size = 0x4, scoped, tag = 'scoped memory for vocal_separation_hybrid_forward.6']
    %10 = vsyncpa [#allocation3], 0
    %11 = vsyncpa [#allocation5], 0
    loop: start=0, step=1, limit=4
    $region2: #{vocal_separation_hybrid_forward.6} parent=1 // loop_pre_header
      _
    $region3: #{vocal_separation_hybrid_forward.6} parent=1 // loop_header
      %s13 = sphi 0, %s17
      %p14 = scmp.ge.s32.totalorder %s13, 4
      %s20 = sphi 0, %s32
      %s21 = sphi 0, %s28
      %s22 = sphi 0, %s20
      %s23 = sphi 0, %s21
      %s24 = sphi 0, %s22
      %s25 = sphi 0, %s23
      %s37 = sphi 0, %s39
      %s40 = sphi 0, %s37
      %s41 = sphi 0, %s40
      %s57 = sphi 0, %s41
      %s61 = sphi 0, %s61
      %s63 = sphi 0, %s61
      %s64 = sphi 0, %s63
      %s78 = sphi 0, %s64
      %s82 = sphi 0, %s82
      %s84 = sphi 0, %s82
      %s85 = sphi 0, %s84
      %s99 = sphi 0, %s85
      %s103 = sphi 0, %s103
      %s105 = sphi 0, %s103
      %s106 = sphi 0, %s105
      %s120 = sphi 0, %s106
      %s124 = sphi 0, %s124
      %s126 = sphi 0, %s124
      %s127 = sphi 0, %s126
      %s141 = sphi 0, %s127
      %s149 = sphi 0, %s151
      %s152 = sphi 0, %s149
      %s153 = sphi 0, %s152
      %s169 = sphi 0, %s153
    $region4: #{vocal_separation_hybrid_forward.6} parent=1 // loop_header_branch
      %16 = sbr.rel (%p14) target = $region8
    $region5: #{vocal_separation_hybrid_forward.6} parent=1 // loop_body
      %s18 = ssub.s32 %s13, 1
      %s19 = ssub.s32 %s13, 2
      %s26 = sadd.s32 1, %s21
      %p27 = scmp.ge.s32.totalorder %s26, 1
      %s28 = scalar_select %p27, 0, %s26
      %s29 = sadd.s32 1, %s20
      %s30 = scalar_select %p27, %s29, %s20
      %p31 = scmp.ge.s32.totalorder %s30, 2
      %s32 = scalar_select %p31, 0, %s30
      %s33 = ssub.s32 %s20, %s32
      %s34 = ssub.s32 %s21, %s28
      %s35 = sor.u32 %s33, %s34
      %p36 = scmp.eq.s32.totalorder %s35, 0
      %s38 = sadd.s32 %s37, 1
      %s39 = scalar_select %p36, %s37, %s38
      %p42 = pneg %p36
      %p43 = scmp.eq.s32.totalorder %s13, 1
      %p44 = por %p42, %p43
      %p45 = scmp.ne.s32.totalorder %s37, %s40
      %p46 = scmp.eq.s32.totalorder %s13, 0
      %p47 = por %p45, %p46
      %p48 = scmp.ne.s32.totalorder %s37, %s40
      %p49 = scmp.eq.s32.totalorder %s18, 1
      %p50 = por %p48, %p49
      %p51 = scmp.ne.s32.totalorder %s40, %s41
      %p52 = scmp.eq.s32.totalorder %s18, 0
      %p53 = por %p51, %p52
      %p54 = scmp.ne.s32.totalorder %s40, %s41
      %p55 = scmp.eq.s32.totalorder %s19, 1
      %p56 = por %p54, %p55
      %p58 = scmp.ne.s32.totalorder %s41, %s57
      %p59 = scmp.eq.s32.totalorder %s19, 0
      %p60 = por %p58, %p59
      %s62 = sadd.s32 %s61, 1
      %p65 = scmp.eq.s32.totalorder %s13, 1
      %p66 = scmp.ne.s32.totalorder %s61, %s63
      %p67 = scmp.eq.s32.totalorder %s13, 0
      %p68 = por %p66, %p67
      %p69 = scmp.ne.s32.totalorder %s61, %s63
      %p70 = scmp.eq.s32.totalorder %s18, 1
      %p71 = por %p69, %p70
      %p72 = scmp.ne.s32.totalorder %s63, %s64
      %p73 = scmp.eq.s32.totalorder %s18, 0
      %p74 = por %p72, %p73
      %p75 = scmp.ne.s32.totalorder %s63, %s64
      %p76 = scmp.eq.s32.totalorder %s19, 1
      %p77 = por %p75, %p76
      %p79 = scmp.ne.s32.totalorder %s64, %s78
      %p80 = scmp.eq.s32.totalorder %s19, 0
      %p81 = por %p79, %p80
      %s83 = sadd.s32 %s82, 1
      %p86 = scmp.eq.s32.totalorder %s13, 1
      %p87 = scmp.ne.s32.totalorder %s82, %s84
      %p88 = scmp.eq.s32.totalorder %s13, 0
      %p89 = por %p87, %p88
      %p90 = scmp.ne.s32.totalorder %s82, %s84
      %p91 = scmp.eq.s32.totalorder %s18, 1
      %p92 = por %p90, %p91
      %p93 = scmp.ne.s32.totalorder %s84, %s85
      %p94 = scmp.eq.s32.totalorder %s18, 0
      %p95 = por %p93, %p94
      %p96 = scmp.ne.s32.totalorder %s84, %s85
      %p97 = scmp.eq.s32.totalorder %s19, 1
      %p98 = por %p96, %p97
      %p100 = scmp.ne.s32.totalorder %s85, %s99
      %p101 = scmp.eq.s32.totalorder %s19, 0
      %p102 = por %p100, %p101
      %s104 = sadd.s32 %s103, 1
      %p107 = scmp.eq.s32.totalorder %s13, 1
      %p108 = scmp.ne.s32.totalorder %s103, %s105
      %p109 = scmp.eq.s32.totalorder %s13, 0
      %p110 = por %p108, %p109
      %p111 = scmp.ne.s32.totalorder %s103, %s105
      %p112 = scmp.eq.s32.totalorder %s18, 1
      %p113 = por %p111, %p112
      %p114 = scmp.ne.s32.totalorder %s105, %s106
      %p115 = scmp.eq.s32.totalorder %s18, 0
      %p116 = por %p114, %p115
      %p117 = scmp.ne.s32.totalorder %s105, %s106
      %p118 = scmp.eq.s32.totalorder %s19, 1
      %p119 = por %p117, %p118
      %p121 = scmp.ne.s32.totalorder %s106, %s120
      %p122 = scmp.eq.s32.totalorder %s19, 0
      %p123 = por %p121, %p122
      %s125 = sadd.s32 %s124, 1
      %p128 = scmp.eq.s32.totalorder %s13, 1
      %p129 = scmp.ne.s32.totalorder %s124, %s126
      %p130 = scmp.eq.s32.totalorder %s13, 0
      %p131 = por %p129, %p130
      %p132 = scmp.ne.s32.totalorder %s124, %s126
      %p133 = scmp.eq.s32.totalorder %s18, 1
      %p134 = por %p132, %p133
      %p135 = scmp.ne.s32.totalorder %s126, %s127
      %p136 = scmp.eq.s32.totalorder %s18, 0
      %p137 = por %p135, %p136
      %p138 = scmp.ne.s32.totalorder %s126, %s127
      %p139 = scmp.eq.s32.totalorder %s19, 1
      %p140 = por %p138, %p139
      %p142 = scmp.ne.s32.totalorder %s127, %s141
      %p143 = scmp.eq.s32.totalorder %s19, 0
      %p144 = por %p142, %p143
      %s145 = ssub.s32 %s21, %s28
      %s146 = ssub.s32 %s20, %s32
      %s147 = sor.u32 %s145, %s146
      %p148 = scmp.eq.s32.totalorder %s147, 0
      %s150 = sadd.s32 %s149, 1
      %s151 = scalar_select %p148, %s149, %s150
      %p154 = pneg %p148
      %p155 = scmp.eq.s32.totalorder %s13, 1
      %p156 = por %p154, %p155
      %p157 = scmp.ne.s32.totalorder %s149, %s152
      %p158 = scmp.eq.s32.totalorder %s13, 0
      %p159 = por %p157, %p158
      %p160 = scmp.ne.s32.totalorder %s149, %s152
      %p161 = scmp.eq.s32.totalorder %s18, 1
      %p162 = por %p160, %p161
      %p163 = scmp.ne.s32.totalorder %s152, %s153
      %p164 = scmp.eq.s32.totalorder %s18, 0
      %p165 = por %p163, %p164
      %p166 = scmp.ne.s32.totalorder %s152, %s153
      %p167 = scmp.eq.s32.totalorder %s19, 1
      %p168 = por %p166, %p167
      %p170 = scmp.ne.s32.totalorder %s153, %s169
      %p171 = scmp.eq.s32.totalorder %s19, 0
      %p172 = por %p170, %p171
      %p173 = scmp.le.s32.totalorder 1, %s13
      %p174 = scmp.lt.s32.totalorder %s13, 3
      %p175 = pnand %p173, %p174
      %p176 = pneg %p175
      // Predicated region
      $region9: #{vocal_separation_hybrid_forward.6} parent=5 // pred_check
        _
      $region10: #{vocal_separation_hybrid_forward.6} parent=5 // pred_check_branch
        %178 = sbr.rel (%p175) target = $region12
      $region11: #{vocal_separation_hybrid_forward.6} parent=5 // pred_region
        %s179 = ssub.s32 %s13, 1
        // Predicated region
        $region13: #{vocal_separation_hybrid_forward.6} parent=11 // pred_check
          %p180 = pneg %p74
        $region14: #{vocal_separation_hybrid_forward.6} parent=11 // pred_check_branch
          %182 = sbr.rel (%p180) target = $region16
        $region15: #{vocal_separation_hybrid_forward.6} parent=11 // pred_region
          %s184 = ssub.s32 1152, 1152
          %185 = vsyncadd [#allocation3], %s184
          %s186 = sshll.u32 [#allocation2], 4
          %s187 = int_to_ptr.vmem [resolvable:$true] %s186
          %192 = dma.hbm_to_vmem [thread:$0]  %s1, 1152, %s187, [#allocation3], 128, 128, 8
        $region16: #{vocal_separation_hybrid_forward.6} parent=11 // pred_fallthru
          _
        // Predicated region
        $region17: #{vocal_separation_hybrid_forward.6} parent=11 // pred_check
          %p193 = pneg %p95
        $region18: #{vocal_separation_hybrid_forward.6} parent=11 // pred_check_branch
          %195 = sbr.rel (%p193) target = $region20
        $region19: #{vocal_separation_hybrid_forward.6} parent=11 // pred_region
          _
        $region20: #{vocal_separation_hybrid_forward.6} parent=11 // pred_fallthru
          _
        // Predicated region
        $region21: #{vocal_separation_hybrid_forward.6} parent=11 // pred_check
          %p196 = pneg %p116
        $region22: #{vocal_separation_hybrid_forward.6} parent=11 // pred_check_branch
          %198 = sbr.rel (%p196) target = $region24
        $region23: #{vocal_separation_hybrid_forward.6} parent=11 // pred_region
          %s200 = ssub.s32 6912, 6912
          %201 = vsyncadd [#allocation5], %s200
          %s202 = sshll.u32 [#allocation4], 4
          %s203 = int_to_ptr.vmem [resolvable:$true] %s202
          %208 = dma.hbm_to_vmem [thread:$0]  %s3, 6912, %s203, [#allocation5], 128, 128, 8
        $region24: #{vocal_separation_hybrid_forward.6} parent=11 // pred_fallthru
          _
        // Predicated region
        $region25: #{vocal_separation_hybrid_forward.6} parent=11 // pred_check
          %p209 = pneg %p137
        $region26: #{vocal_separation_hybrid_forward.6} parent=11 // pred_check_branch
          %211 = sbr.rel (%p209) target = $region28
        $region27: #{vocal_separation_hybrid_forward.6} parent=11 // pred_region
          _
        $region28: #{vocal_separation_hybrid_forward.6} parent=11 // pred_fallthru
          _
      $region12: #{vocal_separation_hybrid_forward.6} parent=5 // pred_fallthru
        _
      %p212 = scmp.lt.s32.totalorder %s13, 2
      // Predicated region
      $region29: #{vocal_separation_hybrid_forward.6} parent=5 // pred_check
        %p213 = pneg %p212
      $region30: #{vocal_separation_hybrid_forward.6} parent=5 // pred_check_branch
        %215 = sbr.rel (%p213) target = $region32
      $region31: #{vocal_separation_hybrid_forward.6} parent=5 // pred_region
        // Predicated region
        $region33: #{vocal_separation_hybrid_forward.6} parent=31 // pred_check
          %p216 = pneg %p47
        $region34: #{vocal_separation_hybrid_forward.6} parent=31 // pred_check_branch
          %218 = sbr.rel (%p216) target = $region36
        $region35: #{vocal_separation_hybrid_forward.6} parent=31 // pred_region
          %p219 = scmp.lt.s32.totalorder %s20, 1
          %s220 = scalar_select %p219, %s20, 1
          %p221 = scmp.lt.s32.totalorder %s21, 0
          %s222 = scalar_select %p221, %s21, 0
          %s223 = smul.addr %s222, 2
          %s224 = smul.addr %s220, 2
          %s225 = sadd.s32 %s223, %s224
          %s226 = smul.addr %s225, 8
          %s227 = scalar_lea.vmem %s0, %s226
        $region36: #{vocal_separation_hybrid_forward.6} parent=31 // pred_fallthru
          _
      $region32: #{vocal_separation_hybrid_forward.6} parent=5 // pred_fallthru
        _
      %p228 = scmp.le.s32.totalorder 1, %s13
      %p229 = scmp.lt.s32.totalorder %s13, 3
      %p230 = pnand %p228, %p229
      %p231 = pneg %p230
      // Predicated region
      $region37: #{vocal_separation_hybrid_forward.6} parent=5 // pred_check
        _
      $region38: #{vocal_separation_hybrid_forward.6} parent=5 // pred_check_branch
        %233 = sbr.rel (%p230) target = $region40
      $region39: #{vocal_separation_hybrid_forward.6} parent=5 // pred_region
        %s234 = ssub.s32 %s13, 1
        // Predicated region
        $region41: #{vocal_separation_hybrid_forward.6} parent=39 // pred_check
          %p235 = pneg %p74
        $region42: #{vocal_separation_hybrid_forward.6} parent=39 // pred_check_branch
          %237 = sbr.rel (%p235) target = $region44
        $region43: #{vocal_separation_hybrid_forward.6} parent=39 // pred_region
          %238 = dma.done [#allocation3], 1152
        $region44: #{vocal_separation_hybrid_forward.6} parent=39 // pred_fallthru
          _
        // Predicated region
        $region45: #{vocal_separation_hybrid_forward.6} parent=39 // pred_check
          %p239 = pneg %p116
        $region46: #{vocal_separation_hybrid_forward.6} parent=39 // pred_check_branch
          %241 = sbr.rel (%p239) target = $region48
        $region47: #{vocal_separation_hybrid_forward.6} parent=39 // pred_region
          %242 = dma.done [#allocation5], 6912
        $region48: #{vocal_separation_hybrid_forward.6} parent=39 // pred_fallthru
          _
        %p243 = scmp.lt.s32.totalorder %s22, 1
        %s244 = scalar_select %p243, %s22, 1
        %p245 = scmp.lt.s32.totalorder %s23, 0
        %s246 = scalar_select %p245, %s23, 0
        %s247 = smul.addr %s246, 2
        %s248 = smul.addr %s244, 2
        %s249 = sadd.s32 %s247, %s248
        %s250 = smul.addr %s249, 8
        %s251 = scalar_lea.vmem %s0, %s250
        %p252 = pneg %p53
        %p253 = pneg %p50
        %p254 = pneg %p74
        %p255 = pneg %p71
        %p256 = pneg %p95
        %p257 = pneg %p92
        %p258 = pneg %p116
        %p259 = pneg %p113
        %p260 = pneg %p137
        %p261 = pneg %p134
        %p262 = pneg %p165
        %p263 = pneg %p162
        %s264 = smul.u32 2, %s22
        %p265 = scmp.lt.s32.totalorder %s23, 0
        %s266 = scalar_select %p265, %s23, 0
        %p267 = scmp.lt.s32.totalorder %s264, 3
        %s268 = scalar_select %p267, %s264, 3
        %s269 = smul.addr %s266, 4
        %s270 = sadd.s32 %s268, %s269
        %s271 = smul.addr %s270, 4
        %s272 = scalar_lea.vmem %s5, %s271
        %p273 = scmp.lt.s32.totalorder %s22, 1
        %s274 = scalar_select %p273, %s22, 1
        %p275 = scmp.lt.s32.totalorder %s23, 0
        %s276 = scalar_select %p275, %s23, 0
        %s277 = smul.addr %s276, 2
        %s278 = smul.addr %s274, 2
        %s279 = sadd.s32 %s277, %s278
        %s280 = smul.addr %s279, 8
        %s281 = scalar_lea.vmem %s0, %s280
        %s282 = smul.u32 2, %s22
        %p283 = scmp.lt.s32.totalorder %s23, 0
        %s284 = scalar_select %p283, %s23, 0
        %p285 = scmp.lt.s32.totalorder %s282, 3
        %s286 = scalar_select %p285, %s282, 3
        %s287 = smul.addr %s284, 4
        %s288 = sadd.s32 %s286, %s287
        %s289 = smul.addr %s288, 4
        %s290 = scalar_lea.vmem %s5, %s289
        %s291 = smul.u32 2, %s22
        %v293 = vld [vmem:[%s281] sm:$0xff]
        %v294 = vld [vmem:[%s281 + $0x8] sm:$0xf]
        %v295 = vpack.c.bf16 %v294, %v293
        %v296 = vld [vmem:[#allocation2] sm:$0xff]
        %v297 = vld [vmem:[#allocation2 + $0x8] sm:$0xff]
        %v298 = vld [vmem:[#allocation2 + $0x10] sm:$0x33]
        %s299 = scalar_lea.vmem [#allocation2], 24
        %v300 = vld [vmem:[%s299] sm:$0xff]
        %v301 = vld [vmem:[%s299 + $0x8] sm:$0xff]
        %v302 = vld [vmem:[%s299 + $0x10] sm:$0x33]
        %v304 = vshrl.u32 %v295, 16
        %v306 = vshll.u32 %v295, 16
        %v308 = vrot.slane %v306, 1
        %v309 = vor.u32 %v304, %v308
        %v313 = vunpack.c.l.b16 %v300
        %v314 = vunpack.c.h.b16 %v300
        %v315 = vunpack.c.l.b16 %v301
        %v316 = vunpack.c.h.b16 %v301
        %v317 = vunpack.c.l.b16 %v302
        %v318 = vunpack.c.h.b16 %v302
        %v319 = vpack.c.b16 %v315, %v313
        %v320 = vpack.c.b16 %v316, %v314
        %v321 = vpack.c.b16 %v317, %v317
        %v322 = vpack.c.b16 %v318, %v318
        %vm325 = vcmask 162816
        %v327 = vsel %vm325, %v309, 0
        %vm329 = vcmask 1041408
        %v331 = vsel %vm329, %v321, 0
        %v334 = vsel %vm329, %v322, 0
        %336 = vmatprep.subr.bf16.mxu0 %v320
        %337 = vmatpush1.bf16.msra.mxu0 %v319
        %338 = vmatprep.subr.bf16.mxu0 %v334
        %339 = vmatpush1.bf16.msra.mxu0 %v331
        %340 = vmatprep.subr.bf16.mxu0 0
        %341 = vmatpush1.bf16.msra.mxu0 0
        %342 = vmatprep.subr.bf16.mxu0 0
        %343 = vmatpush1.bf16.msra.mxu0 0
        %344 = vmatprep.subr.bf16.mxu0 0
        %345 = vmatpush1.bf16.msra.mxu0 0
        %346 = vmatprep.subr.bf16.mxu0 0
        %347 = vmatpush1.bf16.msra.mxu0 0
        %348 = vmatprep.subr.bf16.mxu0 0
        %349 = vmatpush1.bf16.msra.mxu0 0
        %350 = vmatprep.subr.bf16.mxu0 0
        %351 = vmatpush1.bf16.msra.mxu0 0
        %352 = vmatprep.subr.bf16.mxu0 0
        %353 = vmatpush1.bf16.msra.mxu0 0
        %354 = vmatprep.subr.bf16.mxu0 0
        %355 = vmatpush1.bf16.msra.mxu0 0
        %356 = vmatprep.subr.bf16.mxu0 0
        %357 = vmatpush1.bf16.msra.mxu0 0
        %358 = vmatprep.subr.bf16.mxu0 0
        %359 = vmatpush1.bf16.msra.mxu0 0
        %360 = vmatprep.subr.bf16.mxu0 0
        %361 = vmatpush1.bf16.msra.mxu0 0
        %362 = vmatprep.subr.bf16.mxu0 0
        %363 = vmatpush1.bf16.msra.mxu0 0
        %364 = vmatprep.subr.bf16.mxu0 0
        %365 = vmatpush1.bf16.msra.mxu0 0
        %366 = vmatprep.subr.bf16.mxu0 0
        %367 = vmatpush1.bf16.msra.mxu0 0
        %368 = vmatprep.mubr.bf16.mxu0 0
        %369 = vmatmul.mubr.bf16.gmra.mrb[0].mxu0 %v327
        %v370 = vpop.f32.mrb[0].mxu0
        %v371 = vadd.f32 0.0, %v370
        %v372 = vpop.f32.mrb[0].mxu0
        %v373 = vadd.f32 0.0, %v372
        %v374 = vpop.f32.mrb[0].mxu0
        %v375 = vadd.f32 0.0, %v374
        %v376 = vpop.f32.mrb[0].mxu0
        %v377 = vadd.f32 0.0, %v376
        %378 = vdwg.mxu0
        %v382 = vunpack.c.l.b16 %v296
        %v383 = vunpack.c.h.b16 %v296
        %v384 = vunpack.c.l.b16 %v297
        %v385 = vunpack.c.h.b16 %v297
        %v386 = vunpack.c.l.b16 %v298
        %v387 = vunpack.c.h.b16 %v298
        %v388 = vpack.c.b16 %v384, %v382
        %v389 = vpack.c.b16 %v385, %v383
        %v390 = vpack.c.b16 %v386, %v386
        %v391 = vpack.c.b16 %v387, %v387
        %v394 = vsel %vm325, %v295, 0
        %v397 = vsel %vm329, %v390, 0
        %v400 = vsel %vm329, %v391, 0
        %402 = vmatprep.subr.bf16.mxu0 %v389
        %403 = vmatpush1.bf16.msra.mxu0 %v388
        %404 = vmatprep.subr.bf16.mxu0 %v400
        %405 = vmatpush1.bf16.msra.mxu0 %v397
        %406 = vmatprep.subr.bf16.mxu0 0
        %407 = vmatpush1.bf16.msra.mxu0 0
        %408 = vmatprep.subr.bf16.mxu0 0
        %409 = vmatpush1.bf16.msra.mxu0 0
        %410 = vmatprep.subr.bf16.mxu0 0
        %411 = vmatpush1.bf16.msra.mxu0 0
        %412 = vmatprep.subr.bf16.mxu0 0
        %413 = vmatpush1.bf16.msra.mxu0 0
        %414 = vmatprep.subr.bf16.mxu0 0
        %415 = vmatpush1.bf16.msra.mxu0 0
        %416 = vmatprep.subr.bf16.mxu0 0
        %417 = vmatpush1.bf16.msra.mxu0 0
        %418 = vmatprep.subr.bf16.mxu0 0
        %419 = vmatpush1.bf16.msra.mxu0 0
        %420 = vmatprep.subr.bf16.mxu0 0
        %421 = vmatpush1.bf16.msra.mxu0 0
        %422 = vmatprep.subr.bf16.mxu0 0
        %423 = vmatpush1.bf16.msra.mxu0 0
        %424 = vmatprep.subr.bf16.mxu0 0
        %425 = vmatpush1.bf16.msra.mxu0 0
        %426 = vmatprep.subr.bf16.mxu0 0
        %427 = vmatpush1.bf16.msra.mxu0 0
        %428 = vmatprep.subr.bf16.mxu0 0
        %429 = vmatpush1.bf16.msra.mxu0 0
        %430 = vmatprep.subr.bf16.mxu0 0
        %431 = vmatpush1.bf16.msra.mxu0 0
        %432 = vmatprep.subr.bf16.mxu0 0
        %433 = vmatpush1.bf16.msra.mxu0 0
        %434 = vmatprep.mubr.bf16.mxu0 0
        %435 = vmatmul.mubr.bf16.gmra.mrb[0].mxu0 %v394
        %v436 = vpop.f32.mrb[0].mxu0
        %v437 = vadd.f32 %v371, %v436
        %v438 = vpop.f32.mrb[0].mxu0
        %v439 = vadd.f32 %v373, %v438
        %v440 = vpop.f32.mrb[0].mxu0
        %v441 = vadd.f32 %v375, %v440
        %v442 = vpop.f32.mrb[0].mxu0
        %v443 = vadd.f32 %v377, %v442
        %444 = vdwg.mxu0
        %s445 = scalar_lea.vmem [#allocation2], 48
        %v446 = vld [vmem:[%s445] sm:$0xff]
        %v447 = vld [vmem:[%s445 + $0x8] sm:$0xff]
        %v448 = vld [vmem:[%s445 + $0x10] sm:$0x33]
        %v450 = vrot.slane %v295, 1
        %v454 = vunpack.c.l.b16 %v446
        %v455 = vunpack.c.h.b16 %v446
        %v456 = vunpack.c.l.b16 %v447
        %v457 = vunpack.c.h.b16 %v447
        %v458 = vunpack.c.l.b16 %v448
        %v459 = vunpack.c.h.b16 %v448
        %v460 = vpack.c.b16 %v456, %v454
        %v461 = vpack.c.b16 %v457, %v455
        %v462 = vpack.c.b16 %v458, %v458
        %v463 = vpack.c.b16 %v459, %v459
        %v467 = vsel %vm325, %v450, 0
        %v470 = vsel %vm329, %v462, 0
        %v473 = vsel %vm329, %v463, 0
        %475 = vmatprep.subr.bf16.mxu0 %v461
        %476 = vmatpush1.bf16.msra.mxu0 %v460
        %477 = vmatprep.subr.bf16.mxu0 %v473
        %478 = vmatpush1.bf16.msra.mxu0 %v470
        %479 = vmatprep.subr.bf16.mxu0 0
        %480 = vmatpush1.bf16.msra.mxu0 0
        %481 = vmatprep.subr.bf16.mxu0 0
        %482 = vmatpush1.bf16.msra.mxu0 0
        %483 = vmatprep.subr.bf16.mxu0 0
        %484 = vmatpush1.bf16.msra.mxu0 0
        %485 = vmatprep.subr.bf16.mxu0 0
        %486 = vmatpush1.bf16.msra.mxu0 0
        %487 = vmatprep.subr.bf16.mxu0 0
        %488 = vmatpush1.bf16.msra.mxu0 0
        %489 = vmatprep.subr.bf16.mxu0 0
        %490 = vmatpush1.bf16.msra.mxu0 0
        %491 = vmatprep.subr.bf16.mxu0 0
        %492 = vmatpush1.bf16.msra.mxu0 0
        %493 = vmatprep.subr.bf16.mxu0 0
        %494 = vmatpush1.bf16.msra.mxu0 0
        %495 = vmatprep.subr.bf16.mxu0 0
        %496 = vmatpush1.bf16.msra.mxu0 0
        %497 = vmatprep.subr.bf16.mxu0 0
        %498 = vmatpush1.bf16.msra.mxu0 0
        %499 = vmatprep.subr.bf16.mxu0 0
        %500 = vmatpush1.bf16.msra.mxu0 0
        %501 = vmatprep.subr.bf16.mxu0 0
        %502 = vmatpush1.bf16.msra.mxu0 0
        %503 = vmatprep.subr.bf16.mxu0 0
        %504 = vmatpush1.bf16.msra.mxu0 0
        %505 = vmatprep.subr.bf16.mxu0 0
        %506 = vmatpush1.bf16.msra.mxu0 0
        %507 = vmatprep.mubr.bf16.mxu0 0
        %508 = vmatmul.mubr.bf16.gmra.mrb[0].mxu0 %v467
        %v509 = vpop.f32.mrb[0].mxu0
        %v510 = vadd.f32 0.0, %v509
        %v511 = vpop.f32.mrb[0].mxu0
        %v512 = vadd.f32 0.0, %v511
        %v513 = vpop.f32.mrb[0].mxu0
        %v514 = vadd.f32 0.0, %v513
        %v515 = vpop.f32.mrb[0].mxu0
        %v516 = vadd.f32 0.0, %v515
        %517 = vdwg.mxu0
        %v518 = vadd.f32 %v437, %v510
        %v519 = vadd.f32 %v439, %v512
        %v520 = vadd.f32 %v441, %v514
        %v521 = vadd.f32 %v443, %v516
        %v522 = vld [vmem:[%s2] sm:$0x3]
        %v524 = vlaneseq
        %v525 = vshrl.u32 %v524, 7
        %v526 = vsub.s32 0, %v525
        %v527 = vrot.slane %v522, %v526
        %v528 = vlaneseq
        %v529 = vshrl.u32 %v528, 7
        %v530 = vsub.s32 1, %v529
        %v531 = vrot.slane %v522, %v530
        %v534 = vadd.f32 %v518, %v527
        %v535 = vadd.f32 %v519, %v531
        %v536 = vadd.f32 %v520, %v527
        %v537 = vadd.f32 %v521, %v531
        %v538 = vmax.f32 %v534, 0.0
        %v539 = vmax.f32 %v535, 0.0
        %v540 = vmax.f32 %v536, 0.0
        %v541 = vmax.f32 %v537, 0.0
        %v542 = vlaneseq
        %v543 = vshrl.u32 %v542, 7
        %v544 = vadd.s32 %v543, 8
        %s545 = smul.u32 %s23, 8
        %v546 = vstv %s545
        %v547 = vadd.s32 %v543, %v546
        %v548 = vadd.s32 %v544, %v546
        %vm549 = vcmp.ge.s32.totalorder %v547, 1
        %vm550 = vcmp.ge.s32.totalorder %v548, 1
        %vm551 = vcmp.le.s32.totalorder %v547, 8
        %vm552 = vcmp.le.s32.totalorder %v548, 8
        %vm553 = vmand %vm549, %vm551
        %vm554 = vmand %vm550, %vm552
        %v555 = vsel %vm553, 1, 0
        %v556 = vsel %vm554, 1, 0
        %vm557 = vcmp.eq.s32.totalorder %v555, 1
        %vm558 = vcmp.eq.s32.totalorder %v556, 1
        %v559 = vsel %vm557, %v538, 0.0
        %v560 = vsel %vm557, %v539, 0.0
        %v561 = vsel %vm558, %v540, 0.0
        %v562 = vsel %vm558, %v541, 0.0
        %v563 = vpack.c.bf16 %v561, %v559
        %v564 = vpack.c.bf16 %v562, %v560
        %v565 = vld [vmem:[#allocation4] sm:$0xff]
        %v566 = vld [vmem:[#allocation4 + $0x8] sm:$0xff]
        %v567 = vld [vmem:[#allocation4 + $0x10] sm:$0xff]
        %v568 = vld [vmem:[#allocation4 + $0x18] sm:$0xff]
        %v569 = vld [vmem:[#allocation4 + $0x20] sm:$0xff]
        %v570 = vld [vmem:[#allocation4 + $0x28] sm:$0xff]
        %v571 = vld [vmem:[#allocation4 + $0x30] sm:$0xff]
        %v572 = vld [vmem:[#allocation4 + $0x38] sm:$0xff]
        %v573 = vld [vmem:[#allocation4 + $0x40] sm:$0xff]
        %v574 = vld [vmem:[#allocation4 + $0x48] sm:$0xff]
        %v575 = vld [vmem:[#allocation4 + $0x50] sm:$0xff]
        %v576 = vld [vmem:[#allocation4 + $0x58] sm:$0xff]
        %v577 = vld [vmem:[#allocation4 + $0x60] sm:$0xff]
        %v578 = vld [vmem:[#allocation4 + $0x68] sm:$0xff]
        %v579 = vld [vmem:[#allocation4 + $0x70] sm:$0xff]
        %v580 = vld [vmem:[#allocation4 + $0x78] sm:$0xff]
        %v581 = vld [vmem:[#allocation4 + $0x80] sm:$0xff]
        %v582 = vld [vmem:[#allocation4 + $0x88] sm:$0xff]
        %s583 = scalar_lea.vmem [#allocation4], 144
        %v584 = vld [vmem:[%s583] sm:$0xff]
        %v585 = vld [vmem:[%s583 + $0x8] sm:$0xff]
        %v586 = vld [vmem:[%s583 + $0x10] sm:$0xff]
        %v587 = vld [vmem:[%s583 + $0x18] sm:$0xff]
        %v588 = vld [vmem:[%s583 + $0x20] sm:$0xff]
        %v589 = vld [vmem:[%s583 + $0x28] sm:$0xff]
        %v590 = vld [vmem:[%s583 + $0x30] sm:$0xff]
        %v591 = vld [vmem:[%s583 + $0x38] sm:$0xff]
        %v592 = vld [vmem:[%s583 + $0x40] sm:$0xff]
        %v593 = vld [vmem:[%s583 + $0x48] sm:$0xff]
        %v594 = vld [vmem:[%s583 + $0x50] sm:$0xff]
        %v595 = vld [vmem:[%s583 + $0x58] sm:$0xff]
        %v596 = vld [vmem:[%s583 + $0x60] sm:$0xff]
        %v597 = vld [vmem:[%s583 + $0x68] sm:$0xff]
        %v598 = vld [vmem:[%s583 + $0x70] sm:$0xff]
        %v599 = vld [vmem:[%s583 + $0x78] sm:$0xff]
        %v600 = vld [vmem:[%s583 + $0x80] sm:$0xff]
        %v601 = vld [vmem:[%s583 + $0x88] sm:$0xff]
        %v603 = vshrl.u32 %v563, 16
        %v605 = vshll.u32 %v563, 16
        %v607 = vrot.slane %v605, 1
        %v608 = vor.u32 %v603, %v607
        %v610 = vshrl.u32 %v564, 16
        %v612 = vshll.u32 %v564, 16
        %v614 = vrot.slane %v612, 1
        %v615 = vor.u32 %v610, %v614
        %v635 = vunpack.c.l.b16 %v584
        %v636 = vunpack.c.h.b16 %v584
        %v637 = vunpack.c.l.b16 %v585
        %v638 = vunpack.c.h.b16 %v585
        %v639 = vunpack.c.l.b16 %v586
        %v640 = vunpack.c.h.b16 %v586
        %v641 = vunpack.c.l.b16 %v587
        %v642 = vunpack.c.h.b16 %v587
        %v643 = vunpack.c.l.b16 %v588
        %v644 = vunpack.c.h.b16 %v588
        %v645 = vunpack.c.l.b16 %v589
        %v646 = vunpack.c.h.b16 %v589
        %v647 = vunpack.c.l.b16 %v590
        %v648 = vunpack.c.h.b16 %v590
        %v649 = vunpack.c.l.b16 %v591
        %v650 = vunpack.c.h.b16 %v591
        %v651 = vunpack.c.l.b16 %v592
        %v652 = vunpack.c.h.b16 %v592
        %v653 = vunpack.c.l.b16 %v593
        %v654 = vunpack.c.h.b16 %v593
        %v655 = vunpack.c.l.b16 %v594
        %v656 = vunpack.c.h.b16 %v594
        %v657 = vunpack.c.l.b16 %v595
        %v658 = vunpack.c.h.b16 %v595
        %v659 = vunpack.c.l.b16 %v596
        %v660 = vunpack.c.h.b16 %v596
        %v661 = vunpack.c.l.b16 %v597
        %v662 = vunpack.c.h.b16 %v597
        %v663 = vunpack.c.l.b16 %v598
        %v664 = vunpack.c.h.b16 %v598
        %v665 = vunpack.c.l.b16 %v599
        %v666 = vunpack.c.h.b16 %v599
        %v667 = vunpack.c.l.b16 %v600
        %v668 = vunpack.c.h.b16 %v600
        %v669 = vunpack.c.l.b16 %v601
        %v670 = vunpack.c.h.b16 %v601
        %v671 = vpack.c.b16 %v637, %v635
        %v672 = vpack.c.b16 %v638, %v636
        %v673 = vpack.c.b16 %v641, %v639
        %v674 = vpack.c.b16 %v642, %v640
        %v675 = vpack.c.b16 %v645, %v643
        %v676 = vpack.c.b16 %v646, %v644
        %v677 = vpack.c.b16 %v649, %v647
        %v678 = vpack.c.b16 %v650, %v648
        %v679 = vpack.c.b16 %v653, %v651
        %v680 = vpack.c.b16 %v654, %v652
        %v681 = vpack.c.b16 %v657, %v655
        %v682 = vpack.c.b16 %v658, %v656
        %v683 = vpack.c.b16 %v661, %v659
        %v684 = vpack.c.b16 %v662, %v660
        %v685 = vpack.c.b16 %v665, %v663
        %v686 = vpack.c.b16 %v666, %v664
        %v687 = vpack.c.b16 %v669, %v667
        %v688 = vpack.c.b16 %v670, %v668
        %vm707 = vcmask 130048
        %v709 = vsel %vm707, %v615, 0
        %711 = vmatprep.subr.bf16.mxu0 %v672
        %712 = vmatpush1.bf16.msra.mxu0 %v671
        %713 = vmatprep.subr.bf16.mxu0 %v674
        %714 = vmatpush1.bf16.msra.mxu0 %v673
        %715 = vmatprep.subr.bf16.mxu0 %v676
        %716 = vmatpush1.bf16.msra.mxu0 %v675
        %717 = vmatprep.subr.bf16.mxu0 %v678
        %718 = vmatpush1.bf16.msra.mxu0 %v677
        %719 = vmatprep.subr.bf16.mxu0 %v680
        %720 = vmatpush1.bf16.msra.mxu0 %v679
        %721 = vmatprep.subr.bf16.mxu0 %v682
        %722 = vmatpush1.bf16.msra.mxu0 %v681
        %723 = vmatprep.subr.bf16.mxu0 %v684
        %724 = vmatpush1.bf16.msra.mxu0 %v683
        %725 = vmatprep.subr.bf16.mxu0 %v686
        %726 = vmatpush1.bf16.msra.mxu0 %v685
        %727 = vmatprep.subr.bf16.mxu0 %v688
        %728 = vmatpush1.bf16.msra.mxu0 %v687
        %729 = vmatprep.subr.bf16.mxu0 0
        %730 = vmatpush1.bf16.msra.mxu0 0
        %731 = vmatprep.subr.bf16.mxu0 0
        %732 = vmatpush1.bf16.msra.mxu0 0
        %733 = vmatprep.subr.bf16.mxu0 0
        %734 = vmatpush1.bf16.msra.mxu0 0
        %735 = vmatprep.subr.bf16.mxu0 0
        %736 = vmatpush1.bf16.msra.mxu0 0
        %737 = vmatprep.subr.bf16.mxu0 0
        %738 = vmatpush1.bf16.msra.mxu0 0
        %739 = vmatprep.subr.bf16.mxu0 0
        %740 = vmatpush1.bf16.msra.mxu0 0
        %741 = vmatprep.subr.bf16.mxu0 0
        %742 = vmatpush1.bf16.msra.mxu0 0
        %743 = vmatprep.mubr.bf16.mxu0 %v709
        %744 = vmatmul.mubr.bf16.gmra.mrb[0].mxu0 %v608
        %v745 = vpop.f32.mrb[0].mxu0
        %v746 = vadd.f32 0.0, %v745
        %v747 = vpop.f32.mrb[0].mxu0
        %v748 = vadd.f32 0.0, %v747
        %v749 = vpop.f32.mrb[0].mxu0
        %v750 = vpop.f32.mrb[0].mxu0
        %751 = vdwg.mxu0
        %v770 = vunpack.c.l.b16 %v565
        %v771 = vunpack.c.h.b16 %v565
        %v772 = vunpack.c.l.b16 %v566
        %v773 = vunpack.c.h.b16 %v566
        %v774 = vunpack.c.l.b16 %v567
        %v775 = vunpack.c.h.b16 %v567
        %v776 = vunpack.c.l.b16 %v568
        %v777 = vunpack.c.h.b16 %v568
        %v778 = vunpack.c.l.b16 %v569
        %v779 = vunpack.c.h.b16 %v569
        %v780 = vunpack.c.l.b16 %v570
        %v781 = vunpack.c.h.b16 %v570
        %v782 = vunpack.c.l.b16 %v571
        %v783 = vunpack.c.h.b16 %v571
        %v784 = vunpack.c.l.b16 %v572
        %v785 = vunpack.c.h.b16 %v572
        %v786 = vunpack.c.l.b16 %v573
        %v787 = vunpack.c.h.b16 %v573
        %v788 = vunpack.c.l.b16 %v574
        %v789 = vunpack.c.h.b16 %v574
        %v790 = vunpack.c.l.b16 %v575
        %v791 = vunpack.c.h.b16 %v575
        %v792 = vunpack.c.l.b16 %v576
        %v793 = vunpack.c.h.b16 %v576
        %v794 = vunpack.c.l.b16 %v577
        %v795 = vunpack.c.h.b16 %v577
        %v796 = vunpack.c.l.b16 %v578
        %v797 = vunpack.c.h.b16 %v578
        %v798 = vunpack.c.l.b16 %v579
        %v799 = vunpack.c.h.b16 %v579
        %v800 = vunpack.c.l.b16 %v580
        %v801 = vunpack.c.h.b16 %v580
        %v802 = vunpack.c.l.b16 %v581
        %v803 = vunpack.c.h.b16 %v581
        %v804 = vunpack.c.l.b16 %v582
        %v805 = vunpack.c.h.b16 %v582
        %v806 = vpack.c.b16 %v772, %v770
        %v807 = vpack.c.b16 %v773, %v771
        %v808 = vpack.c.b16 %v776, %v774
        %v809 = vpack.c.b16 %v777, %v775
        %v810 = vpack.c.b16 %v780, %v778
        %v811 = vpack.c.b16 %v781, %v779
        %v812 = vpack.c.b16 %v784, %v782
        %v813 = vpack.c.b16 %v785, %v783
        %v814 = vpack.c.b16 %v788, %v786
        %v815 = vpack.c.b16 %v789, %v787
        %v816 = vpack.c.b16 %v792, %v790
        %v817 = vpack.c.b16 %v793, %v791
        %v818 = vpack.c.b16 %v796, %v794
        %v819 = vpack.c.b16 %v797, %v795
        %v820 = vpack.c.b16 %v800, %v798
        %v821 = vpack.c.b16 %v801, %v799
        %v822 = vpack.c.b16 %v804, %v802
        %v823 = vpack.c.b16 %v805, %v803
        %v842 = vsel %vm707, %v564, 0
        %844 = vmatprep.subr.bf16.mxu0 %v807
        %845 = vmatpush1.bf16.msra.mxu0 %v806
        %846 = vmatprep.subr.bf16.mxu0 %v809
        %847 = vmatpush1.bf16.msra.mxu0 %v808
        %848 = vmatprep.subr.bf16.mxu0 %v811
        %849 = vmatpush1.bf16.msra.mxu0 %v810
        %850 = vmatprep.subr.bf16.mxu0 %v813
        %851 = vmatpush1.bf16.msra.mxu0 %v812
        %852 = vmatprep.subr.bf16.mxu0 %v815
        %853 = vmatpush1.bf16.msra.mxu0 %v814
        %854 = vmatprep.subr.bf16.mxu0 %v817
        %855 = vmatpush1.bf16.msra.mxu0 %v816
        %856 = vmatprep.subr.bf16.mxu0 %v819
        %857 = vmatpush1.bf16.msra.mxu0 %v818
        %858 = vmatprep.subr.bf16.mxu0 %v821
        %859 = vmatpush1.bf16.msra.mxu0 %v820
        %860 = vmatprep.subr.bf16.mxu0 %v823
        %861 = vmatpush1.bf16.msra.mxu0 %v822
        %862 = vmatprep.subr.bf16.mxu0 0
        %863 = vmatpush1.bf16.msra.mxu0 0
        %864 = vmatprep.subr.bf16.mxu0 0
        %865 = vmatpush1.bf16.msra.mxu0 0
        %866 = vmatprep.subr.bf16.mxu0 0
        %867 = vmatpush1.bf16.msra.mxu0 0
        %868 = vmatprep.subr.bf16.mxu0 0
        %869 = vmatpush1.bf16.msra.mxu0 0
        %870 = vmatprep.subr.bf16.mxu0 0
        %871 = vmatpush1.bf16.msra.mxu0 0
        %872 = vmatprep.subr.bf16.mxu0 0
        %873 = vmatpush1.bf16.msra.mxu0 0
        %874 = vmatprep.subr.bf16.mxu0 0
        %875 = vmatpush1.bf16.msra.mxu0 0
        %876 = vmatprep.mubr.bf16.mxu0 %v842
        %877 = vmatmul.mubr.bf16.gmra.mrb[0].mxu0 %v563
        %v878 = vpop.f32.mrb[0].mxu0
        %v879 = vadd.f32 %v746, %v878
        %v880 = vpop.f32.mrb[0].mxu0
        %v881 = vadd.f32 %v748, %v880
        %v882 = vpop.f32.mrb[0].mxu0
        %v883 = vpop.f32.mrb[0].mxu0
        %884 = vdwg.mxu0
        %s885 = scalar_lea.vmem [#allocation4], 288
        %v886 = vld [vmem:[%s885] sm:$0xff]
        %v887 = vld [vmem:[%s885 + $0x8] sm:$0xff]
        %v888 = vld [vmem:[%s885 + $0x10] sm:$0xff]
        %v889 = vld [vmem:[%s885 + $0x18] sm:$0xff]
        %v890 = vld [vmem:[%s885 + $0x20] sm:$0xff]
        %v891 = vld [vmem:[%s885 + $0x28] sm:$0xff]
        %v892 = vld [vmem:[%s885 + $0x30] sm:$0xff]
        %v893 = vld [vmem:[%s885 + $0x38] sm:$0xff]
        %v894 = vld [vmem:[%s885 + $0x40] sm:$0xff]
        %v895 = vld [vmem:[%s885 + $0x48] sm:$0xff]
        %v896 = vld [vmem:[%s885 + $0x50] sm:$0xff]
        %v897 = vld [vmem:[%s885 + $0x58] sm:$0xff]
        %v898 = vld [vmem:[%s885 + $0x60] sm:$0xff]
        %v899 = vld [vmem:[%s885 + $0x68] sm:$0xff]
        %v900 = vld [vmem:[%s885 + $0x70] sm:$0xff]
        %v901 = vld [vmem:[%s885 + $0x78] sm:$0xff]
        %v902 = vld [vmem:[%s885 + $0x80] sm:$0xff]
        %v903 = vld [vmem:[%s885 + $0x88] sm:$0xff]
        %v906 = vrot.slane %v563, 1
        %v907 = vrot.slane %v564, 1
        %v927 = vunpack.c.l.b16 %v886
        %v928 = vunpack.c.h.b16 %v886
        %v929 = vunpack.c.l.b16 %v887
        %v930 = vunpack.c.h.b16 %v887
        %v931 = vunpack.c.l.b16 %v888
        %v932 = vunpack.c.h.b16 %v888
        %v933 = vunpack.c.l.b16 %v889
        %v934 = vunpack.c.h.b16 %v889
        %v935 = vunpack.c.l.b16 %v890
        %v936 = vunpack.c.h.b16 %v890
        %v937 = vunpack.c.l.b16 %v891
        %v938 = vunpack.c.h.b16 %v891
        %v939 = vunpack.c.l.b16 %v892
        %v940 = vunpack.c.h.b16 %v892
        %v941 = vunpack.c.l.b16 %v893
        %v942 = vunpack.c.h.b16 %v893
        %v943 = vunpack.c.l.b16 %v894
        %v944 = vunpack.c.h.b16 %v894
        %v945 = vunpack.c.l.b16 %v895
        %v946 = vunpack.c.h.b16 %v895
        %v947 = vunpack.c.l.b16 %v896
        %v948 = vunpack.c.h.b16 %v896
        %v949 = vunpack.c.l.b16 %v897
        %v950 = vunpack.c.h.b16 %v897
        %v951 = vunpack.c.l.b16 %v898
        %v952 = vunpack.c.h.b16 %v898
        %v953 = vunpack.c.l.b16 %v899
        %v954 = vunpack.c.h.b16 %v899
        %v955 = vunpack.c.l.b16 %v900
        %v956 = vunpack.c.h.b16 %v900
        %v957 = vunpack.c.l.b16 %v901
        %v958 = vunpack.c.h.b16 %v901
        %v959 = vunpack.c.l.b16 %v902
        %v960 = vunpack.c.h.b16 %v902
        %v961 = vunpack.c.l.b16 %v903
        %v962 = vunpack.c.h.b16 %v903
        %v963 = vpack.c.b16 %v929, %v927
        %v964 = vpack.c.b16 %v930, %v928
        %v965 = vpack.c.b16 %v933, %v931
        %v966 = vpack.c.b16 %v934, %v932
        %v967 = vpack.c.b16 %v937, %v935
        %v968 = vpack.c.b16 %v938, %v936
        %v969 = vpack.c.b16 %v941, %v939
        %v970 = vpack.c.b16 %v942, %v940
        %v971 = vpack.c.b16 %v945, %v943
        %v972 = vpack.c.b16 %v946, %v944
        %v973 = vpack.c.b16 %v949, %v947
        %v974 = vpack.c.b16 %v950, %v948
        %v975 = vpack.c.b16 %v953, %v951
        %v976 = vpack.c.b16 %v954, %v952
        %v977 = vpack.c.b16 %v957, %v955
        %v978 = vpack.c.b16 %v958, %v956
        %v979 = vpack.c.b16 %v961, %v959
        %v980 = vpack.c.b16 %v962, %v960
        %v1000 = vsel %vm707, %v907, 0
        %1002 = vmatprep.subr.bf16.mxu0 %v964
        %1003 = vmatpush1.bf16.msra.mxu0 %v963
        %1004 = vmatprep.subr.bf16.mxu0 %v966
        %1005 = vmatpush1.bf16.msra.mxu0 %v965
        %1006 = vmatprep.subr.bf16.mxu0 %v968
        %1007 = vmatpush1.bf16.msra.mxu0 %v967
        %1008 = vmatprep.subr.bf16.mxu0 %v970
        %1009 = vmatpush1.bf16.msra.mxu0 %v969
        %1010 = vmatprep.subr.bf16.mxu0 %v972
        %1011 = vmatpush1.bf16.msra.mxu0 %v971
        %1012 = vmatprep.subr.bf16.mxu0 %v974
        %1013 = vmatpush1.bf16.msra.mxu0 %v973
        %1014 = vmatprep.subr.bf16.mxu0 %v976
        %1015 = vmatpush1.bf16.msra.mxu0 %v975
        %1016 = vmatprep.subr.bf16.mxu0 %v978
        %1017 = vmatpush1.bf16.msra.mxu0 %v977
        %1018 = vmatprep.subr.bf16.mxu0 %v980
        %1019 = vmatpush1.bf16.msra.mxu0 %v979
        %1020 = vmatprep.subr.bf16.mxu0 0
        %1021 = vmatpush1.bf16.msra.mxu0 0
        %1022 = vmatprep.subr.bf16.mxu0 0
        %1023 = vmatpush1.bf16.msra.mxu0 0
        %1024 = vmatprep.subr.bf16.mxu0 0
        %1025 = vmatpush1.bf16.msra.mxu0 0
        %1026 = vmatprep.subr.bf16.mxu0 0
        %1027 = vmatpush1.bf16.msra.mxu0 0
        %1028 = vmatprep.subr.bf16.mxu0 0
        %1029 = vmatpush1.bf16.msra.mxu0 0
        %1030 = vmatprep.subr.bf16.mxu0 0
        %1031 = vmatpush1.bf16.msra.mxu0 0
        %1032 = vmatprep.subr.bf16.mxu0 0
        %1033 = vmatpush1.bf16.msra.mxu0 0
        %1034 = vmatprep.mubr.bf16.mxu0 %v1000
        %1035 = vmatmul.mubr.bf16.gmra.mrb[0].mxu0 %v906
        %v1036 = vpop.f32.mrb[0].mxu0
        %v1037 = vadd.f32 0.0, %v1036
        %v1038 = vpop.f32.mrb[0].mxu0
        %v1039 = vadd.f32 0.0, %v1038
        %v1040 = vpop.f32.mrb[0].mxu0
        %v1041 = vpop.f32.mrb[0].mxu0
        %1042 = vdwg.mxu0
        %v1043 = vadd.f32 %v879, %v1037
        %v1044 = vadd.f32 %v881, %v1039
        %v1045 = vld [vmem:[%s4] sm:$0x3]
        %v1047 = vlaneseq
        %v1048 = vshrl.u32 %v1047, 7
        %v1049 = vsub.s32 0, %v1048
        %v1050 = vrot.slane %v1045, %v1049
        %v1051 = vlaneseq
        %v1052 = vshrl.u32 %v1051, 7
        %v1053 = vsub.s32 1, %v1052
        %v1054 = vrot.slane %v1045, %v1053
        %v1057 = vadd.f32 %v1043, %v1050
        %v1058 = vadd.f32 %v1044, %v1054
        %v1059 = vmax.f32 %v1057, 0.0
        %v1060 = vmax.f32 %v1058, 0.0
        %v1061 = vpack.c.bf16 %v1059, %v1059
        %v1062 = vpack.c.bf16 %v1060, %v1060
        %v1065 = vunpack.c.l.b16 %v1061
        %v1066 = vunpack.c.l.b16 %v1062
        %v1067 = vpack.c.b16 %v1066, %v1065
        %1069 = vst [vmem:[%s290] sm:$0xff] %v1067
        %s1070 = smul.u32 2, %s22
        %p1071 = scmp.lt.s32.totalorder %s23, 0
        %s1072 = scalar_select %p1071, %s23, 0
        %p1073 = scmp.lt.s32.totalorder %s1070, 3
        %s1074 = scalar_select %p1073, %s1070, 3
        %s1075 = smul.addr %s1072, 4
        %s1076 = sadd.s32 %s1074, %s1075
        %s1077 = smul.addr %s1076, 4
        %s1078 = scalar_lea.vmem %s5, %s1077
        // Predicated region
        $region49: #{vocal_separation_hybrid_forward.6} parent=39 // pred_check
          %p1079 = pneg %p162
        $region50: #{vocal_separation_hybrid_forward.6} parent=39 // pred_check_branch
          %1081 = sbr.rel (%p1079) target = $region52
        $region51: #{vocal_separation_hybrid_forward.6} parent=39 // pred_region
          %s1082 = smul.u32 2, %s22
        $region52: #{vocal_separation_hybrid_forward.6} parent=39 // pred_fallthru
          _
      $region40: #{vocal_separation_hybrid_forward.6} parent=5 // pred_fallthru
        _
      %p1083 = scmp.le.s32.totalorder 2, %s13
      // Predicated region
      $region53: #{vocal_separation_hybrid_forward.6} parent=5 // pred_check
        %p1084 = pneg %p1083
      $region54: #{vocal_separation_hybrid_forward.6} parent=5 // pred_check_branch
        %1086 = sbr.rel (%p1084) target = $region56
      $region55: #{vocal_separation_hybrid_forward.6} parent=5 // pred_region
        %s1087 = ssub.s32 %s13, 2
        // Predicated region
        $region57: #{vocal_separation_hybrid_forward.6} parent=55 // pred_check
          %p1088 = pneg %p168
        $region58: #{vocal_separation_hybrid_forward.6} parent=55 // pred_check_branch
          %1090 = sbr.rel (%p1088) target = $region60
        $region59: #{vocal_separation_hybrid_forward.6} parent=55 // pred_region
          %s1091 = smul.u32 2, %s24
          %p1092 = scmp.lt.s32.totalorder %s25, 0
          %s1093 = scalar_select %p1092, %s25, 0
          %p1094 = scmp.lt.s32.totalorder %s1091, 3
          %s1095 = scalar_select %p1094, %s1091, 3
          %s1096 = smul.addr %s1093, 4
          %s1097 = sadd.s32 %s1095, %s1096
          %s1098 = smul.addr %s1097, 4
          %s1099 = scalar_lea.vmem %s5, %s1098
        $region60: #{vocal_separation_hybrid_forward.6} parent=55 // pred_fallthru
          _
      $region56: #{vocal_separation_hybrid_forward.6} parent=5 // pred_fallthru
        _
    $region6: #{vocal_separation_hybrid_forward.6} parent=1 // loop_footer
      %s17 = sadd.s32 1, %s13
    $region7: #{vocal_separation_hybrid_forward.6} parent=1 // loop_footer_branch
      %12 = sbr.rel target = $region3
    $region8: #{vocal_separation_hybrid_forward.6} parent=1 // loop_exit
      _
    %1100 = vsyncpa [#allocation3], 1
    %s1101 = scalar_lea.sflag [#allocation3], 1
    %1102 = vsyncpa %s1101, 1
    %1103 = vsyncpa [#allocation5], 1

// kernel: vocal_separation_hybrid_forward.8
$region0: #{vocal_separation_hybrid_forward.8}
  #allocation0 [shape = 'u32[]', space=smem, size = 0x4, offset = 0x4, fixed_abs, tag = 'smem constant byte address 0x4 - core index']
  #allocation1 [shape = 'u32[144,128]{1,0:T(1,128)}', space=vmem, size = 0x12000, scoped, tag = 'internal scratch']
  #allocation2 [shape = 'f32[2,2,128]{2,1,0:T(2,128)}', space=vmem, size = 0x800, scoped, tag = 'scratch operand']
  #allocation3 [shape = 'f32[2,2,128]{2,1,0:T(2,128)}', space=vmem, size = 0x800, scoped, tag = 'scratch operand']
  %s0 = inlined_call_operand.vmem [shape: bf16[8,2,1024], index: 0, kind: input, shape index: {}, may-alias: {0,1}]
  %s1 = inlined_call_operand.vmem [shape: bf16[8,2,1024], index: 1, kind: input, shape index: {}, may-alias: {0,1}]
  %s2 = inlined_call_operand.vmem [shape: bf16[2,128,512], index: 2, kind: input, shape index: {}]
  %s3 = inlined_call_operand.vmem [shape: bf16[8,2,128], index: 3, kind: output, shape index: {0}]
  %s4 = inlined_call_operand.vmem [shape: bf16[8,2,128], index: 4, kind: output, shape index: {1}]
  %5 = xla_tuple %s3, %s4
  %s6 = sld [smem:[#allocation0]]
  $region123: #{vocal_separation_hybrid_forward.8} parent=0
    _
  %s8 = ssub.s32 1, %s6
  %s9 = scalar_select 0, %s8, %s6
  $region1: #{vocal_separation_hybrid_forward.8} parent=0
    #allocation4 [shape = 'u8[16384]{0}', space=vmem, size = 0x4000, scoped, tag = 'input window, operand 0, single buffered']
    #allocation5 [shape = 'u8[16384]{0}', space=vmem, size = 0x4000, scoped, tag = 'input window, operand 1, single buffered']
    // Predicated region
    $region2: #{vocal_separation_hybrid_forward.8} parent=1 // pred_check
      _
    $region3: #{vocal_separation_hybrid_forward.8} parent=1 // pred_check_branch
      %11 = sbr.rel (0) target = $region5
    $region4: #{vocal_separation_hybrid_forward.8} parent=1 // pred_region
      // Predicated region
      $region6: #{vocal_separation_hybrid_forward.8} parent=4 // pred_check
        _
      $region7: #{vocal_separation_hybrid_forward.8} parent=4 // pred_check_branch
        %13 = sbr.rel (0) target = $region9
      $region8: #{vocal_separation_hybrid_forward.8} parent=4 // pred_region
        // Predicated region
        $region10: #{vocal_separation_hybrid_forward.8} parent=8 // pred_check
          _
        $region11: #{vocal_separation_hybrid_forward.8} parent=8 // pred_check_branch
          %15 = sbr.rel target = $region13
        $region12: #{vocal_separation_hybrid_forward.8} parent=8 // pred_region
          // Predicated region
          $region25: #{vocal_separation_hybrid_forward.8} parent=12 // pred_check
            _
          $region26: #{vocal_separation_hybrid_forward.8} parent=12 // pred_check_branch
            %44 = sbr.rel (0) target = $region28
          $region27: #{vocal_separation_hybrid_forward.8} parent=12 // pred_region
            loop: start=0, step=1, limit=1
            $region29: #{vocal_separation_hybrid_forward.8} parent=27 // loop_pre_header
              _
            $region30: #{vocal_separation_hybrid_forward.8} parent=27 // loop_header
              %s46 = sphi 0, %s50
              %p47 = scmp.ge.s32.totalorder %s46, 1
              %s51 = sphi %s0, %s0
              %s52 = sphi [#allocation4], [#allocation4]
            $region31: #{vocal_separation_hybrid_forward.8} parent=27 // loop_header_branch
              %49 = sbr.rel (%p47) target = $region35
            $region32: #{vocal_separation_hybrid_forward.8} parent=27 // loop_body
              _
            $region33: #{vocal_separation_hybrid_forward.8} parent=27 // loop_footer
              %s50 = sadd.s32 1, %s46
            $region34: #{vocal_separation_hybrid_forward.8} parent=27 // loop_footer_branch
              %45 = sbr.rel target = $region30
            $region35: #{vocal_separation_hybrid_forward.8} parent=27 // loop_exit
              _
            loop: start=0, step=1, limit=1
            $region36: #{vocal_separation_hybrid_forward.8} parent=27 // loop_pre_header
              _
            $region37: #{vocal_separation_hybrid_forward.8} parent=27 // loop_header
              %s55 = sphi 0, %s59
              %p56 = scmp.ge.s32.totalorder %s55, 1
              %s60 = sphi %s0, %s0
              %s61 = sphi [#allocation4], [#allocation4]
            $region38: #{vocal_separation_hybrid_forward.8} parent=27 // loop_header_branch
              %58 = sbr.rel (%p56) target = $region42
            $region39: #{vocal_separation_hybrid_forward.8} parent=27 // loop_body
              %v62 = vld [vmem:[%s60] sm:$0xf]
              %63 = vst [vmem:[%s61] sm:$0xf] %v62
              %v64 = vld [vmem:[%s60 + $0x8] sm:$0xf]
              %65 = vst [vmem:[%s61 + $0x4] sm:$0xf] %v64
              %v66 = vld [vmem:[%s60 + $0x10] sm:$0xf]
              %67 = vst [vmem:[%s61 + $0x8] sm:$0xf] %v66
              %v68 = vld [vmem:[%s60 + $0x18] sm:$0xf]
              %69 = vst [vmem:[%s61 + $0xc] sm:$0xf] %v68
              %v70 = vld [vmem:[%s60 + $0x20] sm:$0xf]
              %71 = vst [vmem:[%s61 + $0x10] sm:$0xf] %v70
              %v72 = vld [vmem:[%s60 + $0x28] sm:$0xf]
              %73 = vst [vmem:[%s61 + $0x14] sm:$0xf] %v72
              %v74 = vld [vmem:[%s60 + $0x30] sm:$0xf]
              %75 = vst [vmem:[%s61 + $0x18] sm:$0xf] %v74
              %v76 = vld [vmem:[%s60 + $0x38] sm:$0xf]
              %77 = vst [vmem:[%s61 + $0x1c] sm:$0xf] %v76
            $region40: #{vocal_separation_hybrid_forward.8} parent=27 // loop_footer
              %s59 = sadd.s32 1, %s55
            $region41: #{vocal_separation_hybrid_forward.8} parent=27 // loop_footer_branch
              %54 = sbr.rel target = $region37
            $region42: #{vocal_separation_hybrid_forward.8} parent=27 // loop_exit
              _
          $region28: #{vocal_separation_hybrid_forward.8} parent=12 // pred_fallthru
            _
        $region13: #{vocal_separation_hybrid_forward.8} parent=8 // pred_fallthru
          _
        // Predicated region
        $region14: #{vocal_separation_hybrid_forward.8} parent=8 // pred_check
          _
        $region15: #{vocal_separation_hybrid_forward.8} parent=8 // pred_check_branch
          %17 = sbr.rel (0) target = $region17
        $region16: #{vocal_separation_hybrid_forward.8} parent=8 // pred_region
          loop: start=0, step=1, limit=1
          $region18: #{vocal_separation_hybrid_forward.8} parent=16 // loop_pre_header
            _
          $region19: #{vocal_separation_hybrid_forward.8} parent=16 // loop_header
            %s20 = sphi 0, %s24
            %p21 = scmp.ge.s32.totalorder %s20, 1
            %s25 = sphi %s0, %s0
            %s26 = sphi [#allocation4], [#allocation4]
          $region20: #{vocal_separation_hybrid_forward.8} parent=16 // loop_header_branch
            %23 = sbr.rel (%p21) target = $region24
          $region21: #{vocal_separation_hybrid_forward.8} parent=16 // loop_body
            %v27 = vld [vmem:[%s25] sm:$0xf]
            %28 = vst [vmem:[%s26] sm:$0xf] %v27
            %v29 = vld [vmem:[%s25 + $0x8] sm:$0xf]
            %30 = vst [vmem:[%s26 + $0x4] sm:$0xf] %v29
            %v31 = vld [vmem:[%s25 + $0x10] sm:$0xf]
            %32 = vst [vmem:[%s26 + $0x8] sm:$0xf] %v31
            %v33 = vld [vmem:[%s25 + $0x18] sm:$0xf]
            %34 = vst [vmem:[%s26 + $0xc] sm:$0xf] %v33
            %v35 = vld [vmem:[%s25 + $0x20] sm:$0xf]
            %36 = vst [vmem:[%s26 + $0x10] sm:$0xf] %v35
            %v37 = vld [vmem:[%s25 + $0x28] sm:$0xf]
            %38 = vst [vmem:[%s26 + $0x14] sm:$0xf] %v37
            %v39 = vld [vmem:[%s25 + $0x30] sm:$0xf]
            %40 = vst [vmem:[%s26 + $0x18] sm:$0xf] %v39
            %v41 = vld [vmem:[%s25 + $0x38] sm:$0xf]
            %42 = vst [vmem:[%s26 + $0x1c] sm:$0xf] %v41
          $region22: #{vocal_separation_hybrid_forward.8} parent=16 // loop_footer
            %s24 = sadd.s32 1, %s20
          $region23: #{vocal_separation_hybrid_forward.8} parent=16 // loop_footer_branch
            %19 = sbr.rel target = $region19
          $region24: #{vocal_separation_hybrid_forward.8} parent=16 // loop_exit
            _
        $region17: #{vocal_separation_hybrid_forward.8} parent=8 // pred_fallthru
          _
      $region9: #{vocal_separation_hybrid_forward.8} parent=4 // pred_fallthru
        _
      %78 = vnop
    $region5: #{vocal_separation_hybrid_forward.8} parent=1 // pred_fallthru
      _
    // Predicated region
    $region43: #{vocal_separation_hybrid_forward.8} parent=1 // pred_check
      _
    $region44: #{vocal_separation_hybrid_forward.8} parent=1 // pred_check_branch
      %80 = sbr.rel (0) target = $region46
    $region45: #{vocal_separation_hybrid_forward.8} parent=1 // pred_region
      %s81 = ssub.s32 0, 0
      %s82 = smul.u32 8, %s81
      %s83 = smul.addr %s82, 8
      %s84 = sadd.s32 4, %s83
      %s85 = scalar_lea.vmem %s1, %s84
      // Predicated region
      $region47: #{vocal_separation_hybrid_forward.8} parent=45 // pred_check
        _
      $region48: #{vocal_separation_hybrid_forward.8} parent=45 // pred_check_branch
        %87 = sbr.rel (0) target = $region50
      $region49: #{vocal_separation_hybrid_forward.8} parent=45 // pred_region
        // Predicated region
        $region51: #{vocal_separation_hybrid_forward.8} parent=49 // pred_check
          _
        $region52: #{vocal_separation_hybrid_forward.8} parent=49 // pred_check_branch
          %89 = sbr.rel target = $region54
        $region53: #{vocal_separation_hybrid_forward.8} parent=49 // pred_region
          // Predicated region
          $region66: #{vocal_separation_hybrid_forward.8} parent=53 // pred_check
            _
          $region67: #{vocal_separation_hybrid_forward.8} parent=53 // pred_check_branch
            %118 = sbr.rel (0) target = $region69
          $region68: #{vocal_separation_hybrid_forward.8} parent=53 // pred_region
            loop: start=0, step=1, limit=1
            $region70: #{vocal_separation_hybrid_forward.8} parent=68 // loop_pre_header
              _
            $region71: #{vocal_separation_hybrid_forward.8} parent=68 // loop_header
              %s120 = sphi 0, %s124
              %p121 = scmp.ge.s32.totalorder %s120, 1
              %s125 = sphi %s85, %s85
              %s126 = sphi [#allocation5], [#allocation5]
            $region72: #{vocal_separation_hybrid_forward.8} parent=68 // loop_header_branch
              %123 = sbr.rel (%p121) target = $region76
            $region73: #{vocal_separation_hybrid_forward.8} parent=68 // loop_body
              _
            $region74: #{vocal_separation_hybrid_forward.8} parent=68 // loop_footer
              %s124 = sadd.s32 1, %s120
            $region75: #{vocal_separation_hybrid_forward.8} parent=68 // loop_footer_branch
              %119 = sbr.rel target = $region71
            $region76: #{vocal_separation_hybrid_forward.8} parent=68 // loop_exit
              _
            loop: start=0, step=1, limit=1
            $region77: #{vocal_separation_hybrid_forward.8} parent=68 // loop_pre_header
              _
            $region78: #{vocal_separation_hybrid_forward.8} parent=68 // loop_header
              %s129 = sphi 0, %s133
              %p130 = scmp.ge.s32.totalorder %s129, 1
              %s134 = sphi %s85, %s85
              %s135 = sphi [#allocation5], [#allocation5]
            $region79: #{vocal_separation_hybrid_forward.8} parent=68 // loop_header_branch
              %132 = sbr.rel (%p130) target = $region83
            $region80: #{vocal_separation_hybrid_forward.8} parent=68 // loop_body
              %v136 = vld [vmem:[%s134] sm:$0xf]
              %137 = vst [vmem:[%s135] sm:$0xf] %v136
              %v138 = vld [vmem:[%s134 + $0x8] sm:$0xf]
              %139 = vst [vmem:[%s135 + $0x4] sm:$0xf] %v138
              %v140 = vld [vmem:[%s134 + $0x10] sm:$0xf]
              %141 = vst [vmem:[%s135 + $0x8] sm:$0xf] %v140
              %v142 = vld [vmem:[%s134 + $0x18] sm:$0xf]
              %143 = vst [vmem:[%s135 + $0xc] sm:$0xf] %v142
              %v144 = vld [vmem:[%s134 + $0x20] sm:$0xf]
              %145 = vst [vmem:[%s135 + $0x10] sm:$0xf] %v144
              %v146 = vld [vmem:[%s134 + $0x28] sm:$0xf]
              %147 = vst [vmem:[%s135 + $0x14] sm:$0xf] %v146
              %v148 = vld [vmem:[%s134 + $0x30] sm:$0xf]
              %149 = vst [vmem:[%s135 + $0x18] sm:$0xf] %v148
              %v150 = vld [vmem:[%s134 + $0x38] sm:$0xf]
              %151 = vst [vmem:[%s135 + $0x1c] sm:$0xf] %v150
            $region81: #{vocal_separation_hybrid_forward.8} parent=68 // loop_footer
              %s133 = sadd.s32 1, %s129
            $region82: #{vocal_separation_hybrid_forward.8} parent=68 // loop_footer_branch
              %128 = sbr.rel target = $region78
            $region83: #{vocal_separation_hybrid_forward.8} parent=68 // loop_exit
              _
          $region69: #{vocal_separation_hybrid_forward.8} parent=53 // pred_fallthru
            _
        $region54: #{vocal_separation_hybrid_forward.8} parent=49 // pred_fallthru
          _
        // Predicated region
        $region55: #{vocal_separation_hybrid_forward.8} parent=49 // pred_check
          _
        $region56: #{vocal_separation_hybrid_forward.8} parent=49 // pred_check_branch
          %91 = sbr.rel (0) target = $region58
        $region57: #{vocal_separation_hybrid_forward.8} parent=49 // pred_region
          loop: start=0, step=1, limit=1
          $region59: #{vocal_separation_hybrid_forward.8} parent=57 // loop_pre_header
            _
          $region60: #{vocal_separation_hybrid_forward.8} parent=57 // loop_header
            %s94 = sphi 0, %s98
            %p95 = scmp.ge.s32.totalorder %s94, 1
            %s99 = sphi %s85, %s85
            %s100 = sphi [#allocation5], [#allocation5]
          $region61: #{vocal_separation_hybrid_forward.8} parent=57 // loop_header_branch
            %97 = sbr.rel (%p95) target = $region65
          $region62: #{vocal_separation_hybrid_forward.8} parent=57 // loop_body
            %v101 = vld [vmem:[%s99] sm:$0xf]
            %102 = vst [vmem:[%s100] sm:$0xf] %v101
            %v103 = vld [vmem:[%s99 + $0x8] sm:$0xf]
            %104 = vst [vmem:[%s100 + $0x4] sm:$0xf] %v103
            %v105 = vld [vmem:[%s99 + $0x10] sm:$0xf]
            %106 = vst [vmem:[%s100 + $0x8] sm:$0xf] %v105
            %v107 = vld [vmem:[%s99 + $0x18] sm:$0xf]
            %108 = vst [vmem:[%s100 + $0xc] sm:$0xf] %v107
            %v109 = vld [vmem:[%s99 + $0x20] sm:$0xf]
            %110 = vst [vmem:[%s100 + $0x10] sm:$0xf] %v109
            %v111 = vld [vmem:[%s99 + $0x28] sm:$0xf]
            %112 = vst [vmem:[%s100 + $0x14] sm:$0xf] %v111
            %v113 = vld [vmem:[%s99 + $0x30] sm:$0xf]
            %114 = vst [vmem:[%s100 + $0x18] sm:$0xf] %v113
            %v115 = vld [vmem:[%s99 + $0x38] sm:$0xf]
            %116 = vst [vmem:[%s100 + $0x1c] sm:$0xf] %v115
          $region63: #{vocal_separation_hybrid_forward.8} parent=57 // loop_footer
            %s98 = sadd.s32 1, %s94
          $region64: #{vocal_separation_hybrid_forward.8} parent=57 // loop_footer_branch
            %93 = sbr.rel target = $region60
          $region65: #{vocal_separation_hybrid_forward.8} parent=57 // loop_exit
            _
        $region58: #{vocal_separation_hybrid_forward.8} parent=49 // pred_fallthru
          _
      $region50: #{vocal_separation_hybrid_forward.8} parent=45 // pred_fallthru
        _
      %152 = vnop
    $region46: #{vocal_separation_hybrid_forward.8} parent=1 // pred_fallthru
      _
    // Predicated region
    $region84: #{vocal_separation_hybrid_forward.8} parent=1 // pred_check
      _
    $region85: #{vocal_separation_hybrid_forward.8} parent=1 // pred_check_branch
      %154 = sbr.rel (0) target = $region87
    $region86: #{vocal_separation_hybrid_forward.8} parent=1 // pred_region
      _
    $region87: #{vocal_separation_hybrid_forward.8} parent=1 // pred_fallthru
      _
    // Predicated region
    $region88: #{vocal_separation_hybrid_forward.8} parent=1 // pred_check
      _
    $region89: #{vocal_separation_hybrid_forward.8} parent=1 // pred_check_branch
      %156 = sbr.rel (0) target = $region91
    $region90: #{vocal_separation_hybrid_forward.8} parent=1 // pred_region
      _
    $region91: #{vocal_separation_hybrid_forward.8} parent=1 // pred_fallthru
      _
    // Predicated region
    $region92: #{vocal_separation_hybrid_forward.8} parent=1 // pred_check
      _
    $region93: #{vocal_separation_hybrid_forward.8} parent=1 // pred_check_branch
      %158 = sbr.rel (0) target = $region95
    $region94: #{vocal_separation_hybrid_forward.8} parent=1 // pred_region
      _
    $region95: #{vocal_separation_hybrid_forward.8} parent=1 // pred_fallthru
      _
    %s159 = ssub.s32 0, 0
    %s160 = smul.u32 8, %s159
    %p161 = scmp.lt.s32.totalorder %s160, 7
    %s162 = scalar_select %p161, %s160, 7
    %s163 = scalar_lea.vmem %s4, %s162
    %s164 = ssub.s32 0, 0
    %s165 = smul.u32 8, %s164
    %s166 = ssub.s32 0, 0
    %s167 = smul.u32 8, %s166
    %p168 = scmp.lt.s32.totalorder %s167, 7
    %s169 = scalar_select %p168, %s167, 7
    %s170 = scalar_lea.vmem %s4, %s169
    %s171 = ssub.s32 0, 0
    %s172 = smul.u32 8, %s171
    %p174 = scmp.eq.s32.totalorder 0, 0
    // Predicated region
    $region96: #{vocal_separation_hybrid_forward.8} parent=1 // pred_check
      %p175 = pneg %p174
    $region97: #{vocal_separation_hybrid_forward.8} parent=1 // pred_check_branch
      %177 = sbr.rel (%p175) target = $region99
    $region98: #{vocal_separation_hybrid_forward.8} parent=1 // pred_region
      %178 = vst [vmem:[#allocation2] sm:$0x3] 0.0
      %179 = vst [vmem:[#allocation2 + $0x2] sm:$0x3] 0.0
      %180 = vst [vmem:[#allocation3] sm:$0x3] 0.0
      %181 = vst [vmem:[#allocation3 + $0x2] sm:$0x3] 0.0
    $region99: #{vocal_separation_hybrid_forward.8} parent=1 // pred_fallthru
      _
    %v182 = vld [vmem:[%s2] sm:$0xff]
    %v183 = vld [vmem:[%s2 + $0x8] sm:$0xff]
    %v184 = vld [vmem:[%s2 + $0x10] sm:$0xff]
    %v185 = vld [vmem:[%s2 + $0x18] sm:$0xff]
    %v186 = vld [vmem:[%s2 + $0x20] sm:$0xff]
    %v187 = vld [vmem:[%s2 + $0x28] sm:$0xff]
    %v188 = vld [vmem:[%s2 + $0x30] sm:$0xff]
    %v189 = vld [vmem:[%s2 + $0x38] sm:$0xff]
    %v190 = vld [vmem:[%s2 + $0x40] sm:$0xff]
    %v191 = vld [vmem:[%s2 + $0x48] sm:$0xff]
    %v192 = vld [vmem:[%s2 + $0x50] sm:$0xff]
    %v193 = vld [vmem:[%s2 + $0x58] sm:$0xff]
    %v194 = vld [vmem:[%s2 + $0x60] sm:$0xff]
    %v195 = vld [vmem:[%s2 + $0x68] sm:$0xff]
    %v196 = vld [vmem:[%s2 + $0x70] sm:$0xff]
    %v197 = vld [vmem:[%s2 + $0x78] sm:$0xff]
    %v198 = vld [vmem:[%s2 + $0x80] sm:$0xff]
    %v199 = vld [vmem:[%s2 + $0x88] sm:$0xff]
    %v200 = vld [vmem:[%s2 + $0x90] sm:$0xff]
    %v201 = vld [vmem:[%s2 + $0x98] sm:$0xff]
    %v202 = vld [vmem:[%s2 + $0xa0] sm:$0xff]
    %v203 = vld [vmem:[%s2 + $0xa8] sm:$0xff]
    %v204 = vld [vmem:[%s2 + $0xb0] sm:$0xff]
    %v205 = vld [vmem:[%s2 + $0xb8] sm:$0xff]
    %v206 = vld [vmem:[%s2 + $0xc0] sm:$0xff]
    %v207 = vld [vmem:[%s2 + $0xc8] sm:$0xff]
    %v208 = vld [vmem:[%s2 + $0xd0] sm:$0xff]
    %v209 = vld [vmem:[%s2 + $0xd8] sm:$0xff]
    %v210 = vld [vmem:[%s2 + $0xe0] sm:$0xff]
    %v211 = vld [vmem:[%s2 + $0xe8] sm:$0xff]
    %v212 = vld [vmem:[%s2 + $0xf0] sm:$0xff]
    %v213 = vld [vmem:[%s2 + $0xf8] sm:$0xff]
    %s214 = scalar_lea.vmem %s2, 256
    %v215 = vld [vmem:[%s214] sm:$0xff]
    %v216 = vld [vmem:[%s214 + $0x8] sm:$0xff]
    %v217 = vld [vmem:[%s214 + $0x10] sm:$0xff]
    %v218 = vld [vmem:[%s214 + $0x18] sm:$0xff]
    %v219 = vld [vmem:[%s214 + $0x20] sm:$0xff]
    %v220 = vld [vmem:[%s214 + $0x28] sm:$0xff]
    %v221 = vld [vmem:[%s214 + $0x30] sm:$0xff]
    %v222 = vld [vmem:[%s214 + $0x38] sm:$0xff]
    %v223 = vld [vmem:[%s214 + $0x40] sm:$0xff]
    %v224 = vld [vmem:[%s214 + $0x48] sm:$0xff]
    %v225 = vld [vmem:[%s214 + $0x50] sm:$0xff]
    %v226 = vld [vmem:[%s214 + $0x58] sm:$0xff]
    %v227 = vld [vmem:[%s214 + $0x60] sm:$0xff]
    %v228 = vld [vmem:[%s214 + $0x68] sm:$0xff]
    %v229 = vld [vmem:[%s214 + $0x70] sm:$0xff]
    %v230 = vld [vmem:[%s214 + $0x78] sm:$0xff]
    %v231 = vld [vmem:[%s214 + $0x80] sm:$0xff]
    %v232 = vld [vmem:[%s214 + $0x88] sm:$0xff]
    %v233 = vld [vmem:[%s214 + $0x90] sm:$0xff]
    %v234 = vld [vmem:[%s214 + $0x98] sm:$0xff]
    %v235 = vld [vmem:[%s214 + $0xa0] sm:$0xff]
    %v236 = vld [vmem:[%s214 + $0xa8] sm:$0xff]
    %v237 = vld [vmem:[%s214 + $0xb0] sm:$0xff]
    %v238 = vld [vmem:[%s214 + $0xb8] sm:$0xff]
    %v239 = vld [vmem:[%s214 + $0xc0] sm:$0xff]
    %v240 = vld [vmem:[%s214 + $0xc8] sm:$0xff]
    %v241 = vld [vmem:[%s214 + $0xd0] sm:$0xff]
    %v242 = vld [vmem:[%s214 + $0xd8] sm:$0xff]
    %v243 = vld [vmem:[%s214 + $0xe0] sm:$0xff]
    %v244 = vld [vmem:[%s214 + $0xe8] sm:$0xff]
    %v245 = vld [vmem:[%s214 + $0xf0] sm:$0xff]
    %v246 = vld [vmem:[%s214 + $0xf8] sm:$0xff]
    %v247 = vld [vmem:[#allocation2] sm:$0x3]
    %v248 = vld [vmem:[#allocation3] sm:$0x3]
    %s249 = scalar_lea.vmem [#allocation2], 2
    %v250 = vld [vmem:[%s249] sm:$0x3]
    %s251 = scalar_lea.vmem [#allocation3], 2
    %v252 = vld [vmem:[%s251] sm:$0x3]
    loop: start=0, step=1, limit=8
    $region100: #{vocal_separation_hybrid_forward.8} parent=1 // loop_pre_header
      _
    $region101: #{vocal_separation_hybrid_forward.8} parent=1 // loop_header
      %s254 = sphi 0, %s258
      %p255 = scmp.ge.s32.totalorder %s254, 8
      %v259 = vphi %v247, %v828
      %v260 = vphi %v248, %v826
      %v261 = vphi %v250, %v853
      %v262 = vphi %v252, %v851
    $region102: #{vocal_separation_hybrid_forward.8} parent=1 // loop_header_branch
      %257 = sbr.rel (%p255) target = $region106
    $region103: #{vocal_separation_hybrid_forward.8} parent=1 // loop_body
      %s263 = ssub.s32 7, %s254
      %s264 = smul.u32 %s254, 4
      %s265 = scalar_lea.vmem [#allocation4], %s264
      %v266 = vld [vmem:[%s265] sm:$0xf]
      %v267 = vunpack.c.l.bf16 %v266
      %v268 = vpack.c.bf16 %v259, %v259
      %v301 = vunpack.c.l.b16 %v182
      %v302 = vunpack.c.h.b16 %v182
      %v303 = vunpack.c.l.b16 %v183
      %v304 = vunpack.c.h.b16 %v183
      %v305 = vunpack.c.l.b16 %v184
      %v306 = vunpack.c.h.b16 %v184
      %v307 = vunpack.c.l.b16 %v185
      %v308 = vunpack.c.h.b16 %v185
      %v309 = vunpack.c.l.b16 %v186
      %v310 = vunpack.c.h.b16 %v186
      %v311 = vunpack.c.l.b16 %v187
      %v312 = vunpack.c.h.b16 %v187
      %v313 = vunpack.c.l.b16 %v188
      %v314 = vunpack.c.h.b16 %v188
      %v315 = vunpack.c.l.b16 %v189
      %v316 = vunpack.c.h.b16 %v189
      %v317 = vunpack.c.l.b16 %v190
      %v318 = vunpack.c.h.b16 %v190
      %v319 = vunpack.c.l.b16 %v191
      %v320 = vunpack.c.h.b16 %v191
      %v321 = vunpack.c.l.b16 %v192
      %v322 = vunpack.c.h.b16 %v192
      %v323 = vunpack.c.l.b16 %v193
      %v324 = vunpack.c.h.b16 %v193
      %v325 = vunpack.c.l.b16 %v194
      %v326 = vunpack.c.h.b16 %v194
      %v327 = vunpack.c.l.b16 %v195
      %v328 = vunpack.c.h.b16 %v195
      %v329 = vunpack.c.l.b16 %v196
      %v330 = vunpack.c.h.b16 %v196
      %v331 = vunpack.c.l.b16 %v197
      %v332 = vunpack.c.h.b16 %v197
      %v333 = vunpack.c.l.b16 %v198
      %v334 = vunpack.c.h.b16 %v198
      %v335 = vunpack.c.l.b16 %v199
      %v336 = vunpack.c.h.b16 %v199
      %v337 = vunpack.c.l.b16 %v200
      %v338 = vunpack.c.h.b16 %v200
      %v339 = vunpack.c.l.b16 %v201
      %v340 = vunpack.c.h.b16 %v201
      %v341 = vunpack.c.l.b16 %v202
      %v342 = vunpack.c.h.b16 %v202
      %v343 = vunpack.c.l.b16 %v203
      %v344 = vunpack.c.h.b16 %v203
      %v345 = vunpack.c.l.b16 %v204
      %v346 = vunpack.c.h.b16 %v204
      %v347 = vunpack.c.l.b16 %v205
      %v348 = vunpack.c.h.b16 %v205
      %v349 = vunpack.c.l.b16 %v206
      %v350 = vunpack.c.h.b16 %v206
      %v351 = vunpack.c.l.b16 %v207
      %v352 = vunpack.c.h.b16 %v207
      %v353 = vunpack.c.l.b16 %v208
      %v354 = vunpack.c.h.b16 %v208
      %v355 = vunpack.c.l.b16 %v209
      %v356 = vunpack.c.h.b16 %v209
      %v357 = vunpack.c.l.b16 %v210
      %v358 = vunpack.c.h.b16 %v210
      %v359 = vunpack.c.l.b16 %v211
      %v360 = vunpack.c.h.b16 %v211
      %v361 = vunpack.c.l.b16 %v212
      %v362 = vunpack.c.h.b16 %v212
      %v363 = vunpack.c.l.b16 %v213
      %v364 = vunpack.c.h.b16 %v213
      %v365 = vpack.c.b16 %v305, %v301
      %v366 = vpack.c.b16 %v306, %v302
      %v367 = vpack.c.b16 %v307, %v303
      %v368 = vpack.c.b16 %v308, %v304
      %v369 = vpack.c.b16 %v313, %v309
      %v370 = vpack.c.b16 %v314, %v310
      %v371 = vpack.c.b16 %v315, %v311
      %v372 = vpack.c.b16 %v316, %v312
      %v373 = vpack.c.b16 %v321, %v317
      %v374 = vpack.c.b16 %v322, %v318
      %v375 = vpack.c.b16 %v323, %v319
      %v376 = vpack.c.b16 %v324, %v320
      %v377 = vpack.c.b16 %v329, %v325
      %v378 = vpack.c.b16 %v330, %v326
      %v379 = vpack.c.b16 %v331, %v327
      %v380 = vpack.c.b16 %v332, %v328
      %v381 = vpack.c.b16 %v337, %v333
      %v382 = vpack.c.b16 %v338, %v334
      %v383 = vpack.c.b16 %v339, %v335
      %v384 = vpack.c.b16 %v340, %v336
      %v385 = vpack.c.b16 %v345, %v341
      %v386 = vpack.c.b16 %v346, %v342
      %v387 = vpack.c.b16 %v347, %v343
      %v388 = vpack.c.b16 %v348, %v344
      %v389 = vpack.c.b16 %v353, %v349
      %v390 = vpack.c.b16 %v354, %v350
      %v391 = vpack.c.b16 %v355, %v351
      %v392 = vpack.c.b16 %v356, %v352
      %v393 = vpack.c.b16 %v361, %v357
      %v394 = vpack.c.b16 %v362, %v358
      %v395 = vpack.c.b16 %v363, %v359
      %v396 = vpack.c.b16 %v364, %v360
      %429 = vmatprep.subr.bf16.mxu0 %v366
      %430 = vmatpush1.bf16.msra.mxu0 %v365
      %431 = vmatprep.subr.bf16.mxu0 %v370
      %432 = vmatpush1.bf16.msra.mxu0 %v369
      %433 = vmatprep.subr.bf16.mxu0 %v374
      %434 = vmatpush1.bf16.msra.mxu0 %v373
      %435 = vmatprep.subr.bf16.mxu0 %v378
      %436 = vmatpush1.bf16.msra.mxu0 %v377
      %437 = vmatprep.subr.bf16.mxu0 %v382
      %438 = vmatpush1.bf16.msra.mxu0 %v381
      %439 = vmatprep.subr.bf16.mxu0 %v386
      %440 = vmatpush1.bf16.msra.mxu0 %v385
      %441 = vmatprep.subr.bf16.mxu0 %v390
      %442 = vmatpush1.bf16.msra.mxu0 %v389
      %443 = vmatprep.subr.bf16.mxu0 %v394
      %444 = vmatpush1.bf16.msra.mxu0 %v393
      %445 = vmatprep.subr.bf16.mxu0 0
      %446 = vmatpush1.bf16.msra.mxu0 0
      %447 = vmatprep.subr.bf16.mxu0 0
      %448 = vmatpush1.bf16.msra.mxu0 0
      %449 = vmatprep.subr.bf16.mxu0 0
      %450 = vmatpush1.bf16.msra.mxu0 0
      %451 = vmatprep.subr.bf16.mxu0 0
      %452 = vmatpush1.bf16.msra.mxu0 0
      %453 = vmatprep.subr.bf16.mxu0 0
      %454 = vmatpush1.bf16.msra.mxu0 0
      %455 = vmatprep.subr.bf16.mxu0 0
      %456 = vmatpush1.bf16.msra.mxu0 0
      %457 = vmatprep.subr.bf16.mxu0 0
      %458 = vmatpush1.bf16.msra.mxu0 0
      %459 = vmatprep.subr.bf16.mxu0 0
      %460 = vmatpush1.bf16.msra.mxu0 0
      %461 = vmatprep.mubr.bf16.mxu0 0
      %462 = vmatmul.mubr.bf16.gmra.mrb[0].mxu0 %v268
      %v463 = vpop.f32.mrb[0].mxu0
      %v464 = vadd.f32 0.0, %v463
      %v465 = vpop.f32.mrb[0].mxu0
      %v466 = vadd.f32 0.0, %v465
      %v467 = vpop.f32.mrb[0].mxu0
      %v468 = vpop.f32.mrb[0].mxu0
      %469 = vdwg.mxu0
      %470 = vmatprep.subr.bf16.mxu0 %v368
      %471 = vmatpush1.bf16.msra.mxu0 %v367
      %472 = vmatprep.subr.bf16.mxu0 %v372
      %473 = vmatpush1.bf16.msra.mxu0 %v371
      %474 = vmatprep.subr.bf16.mxu0 %v376
      %475 = vmatpush1.bf16.msra.mxu0 %v375
      %476 = vmatprep.subr.bf16.mxu0 %v380
      %477 = vmatpush1.bf16.msra.mxu0 %v379
      %478 = vmatprep.subr.bf16.mxu0 %v384
      %479 = vmatpush1.bf16.msra.mxu0 %v383
      %480 = vmatprep.subr.bf16.mxu0 %v388
      %481 = vmatpush1.bf16.msra.mxu0 %v387
      %482 = vmatprep.subr.bf16.mxu0 %v392
      %483 = vmatpush1.bf16.msra.mxu0 %v391
      %484 = vmatprep.subr.bf16.mxu0 %v396
      %485 = vmatpush1.bf16.msra.mxu0 %v395
      %486 = vmatprep.subr.bf16.mxu0 0
      %487 = vmatpush1.bf16.msra.mxu0 0
      %488 = vmatprep.subr.bf16.mxu0 0
      %489 = vmatpush1.bf16.msra.mxu0 0
      %490 = vmatprep.subr.bf16.mxu0 0
      %491 = vmatpush1.bf16.msra.mxu0 0
      %492 = vmatprep.subr.bf16.mxu0 0
      %493 = vmatpush1.bf16.msra.mxu0 0
      %494 = vmatprep.subr.bf16.mxu0 0
      %495 = vmatpush1.bf16.msra.mxu0 0
      %496 = vmatprep.subr.bf16.mxu0 0
      %497 = vmatpush1.bf16.msra.mxu0 0
      %498 = vmatprep.subr.bf16.mxu0 0
      %499 = vmatpush1.bf16.msra.mxu0 0
      %500 = vmatprep.subr.bf16.mxu0 0
      %501 = vmatpush1.bf16.msra.mxu0 0
      %502 = vmatprep.mubr.bf16.mxu0 0
      %503 = vmatmul.mubr.bf16.gmra.mrb[0].mxu0 %v268
      %v504 = vpop.f32.mrb[0].mxu0
      %v505 = vadd.f32 0.0, %v504
      %v506 = vpop.f32.mrb[0].mxu0
      %v507 = vadd.f32 0.0, %v506
      %v508 = vpop.f32.mrb[0].mxu0
      %v509 = vpop.f32.mrb[0].mxu0
      %510 = vdwg.mxu0
      %v515 = vcombine.low %v464, %v466
      %v516 = vcombine.low %v505, %v507
      %v518 = vunpack.c.l.s4 1983009808
      %v519 = vunpack.c.0.s8 %v518
      %v520 = vlaneseq
      %v521 = vshrl.u32 %v520, 7
      %v522 = vsub.s32 %v519, %v521
      %v523 = vrot.slane %v515, %v522
      %v525 = vunpack.c.l.s4 1983009808
      %v526 = vunpack.c.0.s8 %v525
      %v527 = vlaneseq
      %v528 = vshrl.u32 %v527, 7
      %v529 = vsub.s32 %v526, %v528
      %v530 = vrot.slane %v516, %v529
      %v531 = vcombine.low %v523, %v530
      %v533 = vadd.f32 %v267, %v531
      %s534 = smul.u32 %s263, 4
      %s535 = scalar_lea.vmem [#allocation5], %s534
      %v536 = vld [vmem:[%s535] sm:$0xf]
      %v537 = vunpack.c.l.bf16 %v536
      %v538 = vpack.c.bf16 %v261, %v261
      %v571 = vunpack.c.l.b16 %v215
      %v572 = vunpack.c.h.b16 %v215
      %v573 = vunpack.c.l.b16 %v216
      %v574 = vunpack.c.h.b16 %v216
      %v575 = vunpack.c.l.b16 %v217
      %v576 = vunpack.c.h.b16 %v217
      %v577 = vunpack.c.l.b16 %v218
      %v578 = vunpack.c.h.b16 %v218
      %v579 = vunpack.c.l.b16 %v219
      %v580 = vunpack.c.h.b16 %v219
      %v581 = vunpack.c.l.b16 %v220
      %v582 = vunpack.c.h.b16 %v220
      %v583 = vunpack.c.l.b16 %v221
      %v584 = vunpack.c.h.b16 %v221
      %v585 = vunpack.c.l.b16 %v222
      %v586 = vunpack.c.h.b16 %v222
      %v587 = vunpack.c.l.b16 %v223
      %v588 = vunpack.c.h.b16 %v223
      %v589 = vunpack.c.l.b16 %v224
      %v590 = vunpack.c.h.b16 %v224
      %v591 = vunpack.c.l.b16 %v225
      %v592 = vunpack.c.h.b16 %v225
      %v593 = vunpack.c.l.b16 %v226
      %v594 = vunpack.c.h.b16 %v226
      %v595 = vunpack.c.l.b16 %v227
      %v596 = vunpack.c.h.b16 %v227
      %v597 = vunpack.c.l.b16 %v228
      %v598 = vunpack.c.h.b16 %v228
      %v599 = vunpack.c.l.b16 %v229
      %v600 = vunpack.c.h.b16 %v229
      %v601 = vunpack.c.l.b16 %v230
      %v602 = vunpack.c.h.b16 %v230
      %v603 = vunpack.c.l.b16 %v231
      %v604 = vunpack.c.h.b16 %v231
      %v605 = vunpack.c.l.b16 %v232
      %v606 = vunpack.c.h.b16 %v232
      %v607 = vunpack.c.l.b16 %v233
      %v608 = vunpack.c.h.b16 %v233
      %v609 = vunpack.c.l.b16 %v234
      %v610 = vunpack.c.h.b16 %v234
      %v611 = vunpack.c.l.b16 %v235
      %v612 = vunpack.c.h.b16 %v235
      %v613 = vunpack.c.l.b16 %v236
      %v614 = vunpack.c.h.b16 %v236
      %v615 = vunpack.c.l.b16 %v237
      %v616 = vunpack.c.h.b16 %v237
      %v617 = vunpack.c.l.b16 %v238
      %v618 = vunpack.c.h.b16 %v238
      %v619 = vunpack.c.l.b16 %v239
      %v620 = vunpack.c.h.b16 %v239
      %v621 = vunpack.c.l.b16 %v240
      %v622 = vunpack.c.h.b16 %v240
      %v623 = vunpack.c.l.b16 %v241
      %v624 = vunpack.c.h.b16 %v241
      %v625 = vunpack.c.l.b16 %v242
      %v626 = vunpack.c.h.b16 %v242
      %v627 = vunpack.c.l.b16 %v243
      %v628 = vunpack.c.h.b16 %v243
      %v629 = vunpack.c.l.b16 %v244
      %v630 = vunpack.c.h.b16 %v244
      %v631 = vunpack.c.l.b16 %v245
      %v632 = vunpack.c.h.b16 %v245
      %v633 = vunpack.c.l.b16 %v246
      %v634 = vunpack.c.h.b16 %v246
      %v635 = vpack.c.b16 %v575, %v571
      %v636 = vpack.c.b16 %v576, %v572
      %v637 = vpack.c.b16 %v577, %v573
      %v638 = vpack.c.b16 %v578, %v574
      %v639 = vpack.c.b16 %v583, %v579
      %v640 = vpack.c.b16 %v584, %v580
      %v641 = vpack.c.b16 %v585, %v581
      %v642 = vpack.c.b16 %v586, %v582
      %v643 = vpack.c.b16 %v591, %v587
      %v644 = vpack.c.b16 %v592, %v588
      %v645 = vpack.c.b16 %v593, %v589
      %v646 = vpack.c.b16 %v594, %v590
      %v647 = vpack.c.b16 %v599, %v595
      %v648 = vpack.c.b16 %v600, %v596
      %v649 = vpack.c.b16 %v601, %v597
      %v650 = vpack.c.b16 %v602, %v598
      %v651 = vpack.c.b16 %v607, %v603
      %v652 = vpack.c.b16 %v608, %v604
      %v653 = vpack.c.b16 %v609, %v605
      %v654 = vpack.c.b16 %v610, %v606
      %v655 = vpack.c.b16 %v615, %v611
      %v656 = vpack.c.b16 %v616, %v612
      %v657 = vpack.c.b16 %v617, %v613
      %v658 = vpack.c.b16 %v618, %v614
      %v659 = vpack.c.b16 %v623, %v619
      %v660 = vpack.c.b16 %v624, %v620
      %v661 = vpack.c.b16 %v625, %v621
      %v662 = vpack.c.b16 %v626, %v622
      %v663 = vpack.c.b16 %v631, %v627
      %v664 = vpack.c.b16 %v632, %v628
      %v665 = vpack.c.b16 %v633, %v629
      %v666 = vpack.c.b16 %v634, %v630
      %699 = vmatprep.subr.bf16.mxu0 %v636
      %700 = vmatpush1.bf16.msra.mxu0 %v635
      %701 = vmatprep.subr.bf16.mxu0 %v640
      %702 = vmatpush1.bf16.msra.mxu0 %v639
      %703 = vmatprep.subr.bf16.mxu0 %v644
      %704 = vmatpush1.bf16.msra.mxu0 %v643
      %705 = vmatprep.subr.bf16.mxu0 %v648
      %706 = vmatpush1.bf16.msra.mxu0 %v647
      %707 = vmatprep.subr.bf16.mxu0 %v652
      %708 = vmatpush1.bf16.msra.mxu0 %v651
      %709 = vmatprep.subr.bf16.mxu0 %v656
      %710 = vmatpush1.bf16.msra.mxu0 %v655
      %711 = vmatprep.subr.bf16.mxu0 %v660
      %712 = vmatpush1.bf16.msra.mxu0 %v659
      %713 = vmatprep.subr.bf16.mxu0 %v664
      %714 = vmatpush1.bf16.msra.mxu0 %v663
      %715 = vmatprep.subr.bf16.mxu0 0
      %716 = vmatpush1.bf16.msra.mxu0 0
      %717 = vmatprep.subr.bf16.mxu0 0
      %718 = vmatpush1.bf16.msra.mxu0 0
      %719 = vmatprep.subr.bf16.mxu0 0
      %720 = vmatpush1.bf16.msra.mxu0 0
      %721 = vmatprep.subr.bf16.mxu0 0
      %722 = vmatpush1.bf16.msra.mxu0 0
      %723 = vmatprep.subr.bf16.mxu0 0
      %724 = vmatpush1.bf16.msra.mxu0 0
      %725 = vmatprep.subr.bf16.mxu0 0
      %726 = vmatpush1.bf16.msra.mxu0 0
      %727 = vmatprep.subr.bf16.mxu0 0
      %728 = vmatpush1.bf16.msra.mxu0 0
      %729 = vmatprep.subr.bf16.mxu0 0
      %730 = vmatpush1.bf16.msra.mxu0 0
      %731 = vmatprep.mubr.bf16.mxu0 0
      %732 = vmatmul.mubr.bf16.gmra.mrb[0].mxu0 %v538
      %v733 = vpop.f32.mrb[0].mxu0
      %v734 = vadd.f32 0.0, %v733
      %v735 = vpop.f32.mrb[0].mxu0
      %v736 = vadd.f32 0.0, %v735
      %v737 = vpop.f32.mrb[0].mxu0
      %v738 = vpop.f32.mrb[0].mxu0
      %739 = vdwg.mxu0
      %740 = vmatprep.subr.bf16.mxu0 %v638
      %741 = vmatpush1.bf16.msra.mxu0 %v637
      %742 = vmatprep.subr.bf16.mxu0 %v642
      %743 = vmatpush1.bf16.msra.mxu0 %v641
      %744 = vmatprep.subr.bf16.mxu0 %v646
      %745 = vmatpush1.bf16.msra.mxu0 %v645
      %746 = vmatprep.subr.bf16.mxu0 %v650
      %747 = vmatpush1.bf16.msra.mxu0 %v649
      %748 = vmatprep.subr.bf16.mxu0 %v654
      %749 = vmatpush1.bf16.msra.mxu0 %v653
      %750 = vmatprep.subr.bf16.mxu0 %v658
      %751 = vmatpush1.bf16.msra.mxu0 %v657
      %752 = vmatprep.subr.bf16.mxu0 %v662
      %753 = vmatpush1.bf16.msra.mxu0 %v661
      %754 = vmatprep.subr.bf16.mxu0 %v666
      %755 = vmatpush1.bf16.msra.mxu0 %v665
      %756 = vmatprep.subr.bf16.mxu0 0
      %757 = vmatpush1.bf16.msra.mxu0 0
      %758 = vmatprep.subr.bf16.mxu0 0
      %759 = vmatpush1.bf16.msra.mxu0 0
      %760 = vmatprep.subr.bf16.mxu0 0
      %761 = vmatpush1.bf16.msra.mxu0 0
      %762 = vmatprep.subr.bf16.mxu0 0
      %763 = vmatpush1.bf16.msra.mxu0 0
      %764 = vmatprep.subr.bf16.mxu0 0
      %765 = vmatpush1.bf16.msra.mxu0 0
      %766 = vmatprep.subr.bf16.mxu0 0
      %767 = vmatpush1.bf16.msra.mxu0 0
      %768 = vmatprep.subr.bf16.mxu0 0
      %769 = vmatpush1.bf16.msra.mxu0 0
      %770 = vmatprep.subr.bf16.mxu0 0
      %771 = vmatpush1.bf16.msra.mxu0 0
      %772 = vmatprep.mubr.bf16.mxu0 0
      %773 = vmatmul.mubr.bf16.gmra.mrb[0].mxu0 %v538
      %v774 = vpop.f32.mrb[0].mxu0
      %v775 = vadd.f32 0.0, %v774
      %v776 = vpop.f32.mrb[0].mxu0
      %v777 = vadd.f32 0.0, %v776
      %v778 = vpop.f32.mrb[0].mxu0
      %v779 = vpop.f32.mrb[0].mxu0
      %780 = vdwg.mxu0
      %v785 = vcombine.low %v734, %v736
      %v786 = vcombine.low %v775, %v777
      %v788 = vunpack.c.l.s4 1983009808
      %v789 = vunpack.c.0.s8 %v788
      %v790 = vlaneseq
      %v791 = vshrl.u32 %v790, 7
      %v792 = vsub.s32 %v789, %v791
      %v793 = vrot.slane %v785, %v792
      %v795 = vunpack.c.l.s4 1983009808
      %v796 = vunpack.c.0.s8 %v795
      %v797 = vlaneseq
      %v798 = vshrl.u32 %v797, 7
      %v799 = vsub.s32 %v796, %v798
      %v800 = vrot.slane %v786, %v799
      %v801 = vcombine.low %v793, %v800
      %v803 = vadd.f32 %v537, %v801
      %v804 = vmul.f32 %v533, 0.5
      %v805 = vtanh.pop %v804
      %v806 = vmul.f32 %v805, 0.5
      %v807 = vadd.f32 %v806, 0.5
      %v809 = vrot.slane %v533, 2
      %v811 = vmul.f32 %v809, 0.5
      %v812 = vtanh.pop %v811
      %v813 = vmul.f32 %v812, 0.5
      %v814 = vadd.f32 %v813, 0.5
      %v815 = vrot.slane %v533, 4
      %v817 = vtanh.pop %v815
      %v818 = vrot.slane %v533, 6
      %v820 = vmul.f32 %v818, 0.5
      %v821 = vtanh.pop %v820
      %v822 = vmul.f32 %v821, 0.5
      %v823 = vadd.f32 %v822, 0.5
      %v824 = vmul.f32 %v814, %v260
      %v825 = vmul.f32 %v807, %v817
      %v826 = vadd.f32 %v824, %v825
      %v827 = vtanh.pop %v826
      %v828 = vmul.f32 %v823, %v827
      %v829 = vmul.f32 %v803, 0.5
      %v830 = vtanh.pop %v829
      %v831 = vmul.f32 %v830, 0.5
      %v832 = vadd.f32 %v831, 0.5
      %v834 = vrot.slane %v803, 2
      %v836 = vmul.f32 %v834, 0.5
      %v837 = vtanh.pop %v836
      %v838 = vmul.f32 %v837, 0.5
      %v839 = vadd.f32 %v838, 0.5
      %v840 = vrot.slane %v803, 4
      %v842 = vtanh.pop %v840
      %v843 = vrot.slane %v803, 6
      %v845 = vmul.f32 %v843, 0.5
      %v846 = vtanh.pop %v845
      %v847 = vmul.f32 %v846, 0.5
      %v848 = vadd.f32 %v847, 0.5
      %v849 = vmul.f32 %v839, %v262
      %v850 = vmul.f32 %v832, %v842
      %v851 = vadd.f32 %v849, %v850
      %v852 = vtanh.pop %v851
      %v853 = vmul.f32 %v848, %v852
      %v854 = vpack.c.bf16 %v828, %v828
      %s855 = scalar_lea.vmem %s3, %s254
      %856 = vst [vmem:[%s855] sm:$0x1] %v854
      %v857 = vpack.c.bf16 %v853, %v853
      %s858 = scalar_lea.vmem %s170, %s263
      %859 = vst [vmem:[%s858] sm:$0x1] %v857
    $region104: #{vocal_separation_hybrid_forward.8} parent=1 // loop_footer
      %s258 = sadd.s32 1, %s254
    $region105: #{vocal_separation_hybrid_forward.8} parent=1 // loop_footer_branch
      %253 = sbr.rel target = $region101
    $region106: #{vocal_separation_hybrid_forward.8} parent=1 // loop_exit
      _
    %860 = vst [vmem:[#allocation2] sm:$0x3] %v259
    %861 = vst [vmem:[#allocation3] sm:$0x3] %v260
    %862 = vst [vmem:[%s249] sm:$0x3] %v261
    %863 = vst [vmem:[%s251] sm:$0x3] %v262
    %s864 = ssub.s32 0, 0
    %s865 = smul.u32 8, %s864
    %p866 = scmp.lt.s32.totalorder %s865, 7
    %s867 = scalar_select %p866, %s865, 7
    %s868 = scalar_lea.vmem %s4, %s867
    // Predicated region
    $region107: #{vocal_separation_hybrid_forward.8} parent=1 // pred_check
      _
    $region108: #{vocal_separation_hybrid_forward.8} parent=1 // pred_check_branch
      %870 = sbr.rel (0) target = $region110
    $region109: #{vocal_separation_hybrid_forward.8} parent=1 // pred_region
      _
    $region110: #{vocal_separation_hybrid_forward.8} parent=1 // pred_fallthru
      _
    // Predicated region
    $region111: #{vocal_separation_hybrid_forward.8} parent=1 // pred_check
      _
    $region112: #{vocal_separation_hybrid_forward.8} parent=1 // pred_check_branch
      %872 = sbr.rel (0) target = $region114
    $region113: #{vocal_separation_hybrid_forward.8} parent=1 // pred_region
      %s873 = ssub.s32 0, 0
      %s874 = smul.u32 8, %s873
    $region114: #{vocal_separation_hybrid_forward.8} parent=1 // pred_fallthru
      _
    // Predicated region
    $region115: #{vocal_separation_hybrid_forward.8} parent=1 // pred_check
      _
    $region116: #{vocal_separation_hybrid_forward.8} parent=1 // pred_check_branch
      %876 = sbr.rel (0) target = $region118
    $region117: #{vocal_separation_hybrid_forward.8} parent=1 // pred_region
      _
    $region118: #{vocal_separation_hybrid_forward.8} parent=1 // pred_fallthru
      _
    // Predicated region
    $region119: #{vocal_separation_hybrid_forward.8} parent=1 // pred_check
      _
    $region120: #{vocal_separation_hybrid_forward.8} parent=1 // pred_check_branch
      %878 = sbr.rel (0) target = $region122
    $region121: #{vocal_separation_hybrid_forward.8} parent=1 // pred_region
      %s879 = ssub.s32 0, 0
      %s880 = smul.u32 8, %s879
      %p881 = scmp.lt.s32.totalorder %s880, 7
      %s882 = scalar_select %p881, %s880, 7
      %s883 = scalar_lea.vmem %s4, %s882
    $region122: #{vocal_separation_hybrid_forward.8} parent=1 // pred_fallthru
      _

// kernel: vocal_separation_hybrid_forward.9
$region0: #{vocal_separation_hybrid_forward.9}
  #allocation0 [shape = 'u32[]', space=smem, size = 0x4, offset = 0x4, fixed_abs, tag = 'smem constant byte address 0x4 - core index']
  #allocation1 [shape = 'u32[144,128]{1,0:T(1,128)}', space=vmem, size = 0x12000, scoped, tag = 'internal scratch']
  #allocation2 [shape = 'f32[16,256]{1,0:T(8,128)}', space=vmem, size = 0x4000, scoped, tag = 'scratch operand']
  %s0 = inlined_call_operand.vmem [shape: bf16[16,256], index: 0, kind: input, shape index: {}]
  %s1 = inlined_call_operand.vmem [shape: bf16[256,1024], index: 1, kind: input, shape index: {}]
  %s2 = inlined_call_operand.vmem [shape: f32[1,1024], index: 2, kind: input, shape index: {}]
  %s3 = inlined_call_operand.vmem [shape: bf16[16,1024], index: 3, kind: output, shape index: {}]
  %s4 = sld [smem:[#allocation0]]
  $region125: #{vocal_separation_hybrid_forward.9} parent=0
    _
  %s6 = ssub.s32 1, %s4
  %s7 = scalar_select 0, %s6, %s4
  $region1: #{vocal_separation_hybrid_forward.9} parent=0
    #allocation3 [shape = 'u8[262144]{0}', space=vmem, size = 0x40000, scoped, tag = 'input window, operand 1']
    #allocation4 [shape = 'u8[16384]{0}', space=vmem, size = 0x4000, scoped, tag = 'output window, operand 0']
    loop: start=0, step=1, limit=6
    $region2: #{vocal_separation_hybrid_forward.9} parent=1 // loop_pre_header
      _
    $region3: #{vocal_separation_hybrid_forward.9} parent=1 // loop_header
      %s9 = sphi 0, %s13
      %p10 = scmp.ge.s32.totalorder %s9, 6
      %s16 = sphi 0, %s35
      %s17 = sphi 0, %s31
      %s18 = sphi 0, %s27
      %s19 = sphi 0, %s16
      %s20 = sphi 0, %s17
      %s21 = sphi 0, %s18
      %s22 = sphi 0, %s19
      %s23 = sphi 0, %s20
      %s24 = sphi 0, %s21
      %s40 = sphi 0, %s42
      %s43 = sphi 0, %s40
      %s44 = sphi 0, %s43
      %s60 = sphi 0, %s44
      %s68 = sphi 0, %s70
      %s71 = sphi 0, %s68
      %s72 = sphi 0, %s71
      %s88 = sphi 0, %s72
      %s94 = sphi 0, %s96
      %s97 = sphi 0, %s94
      %s98 = sphi 0, %s97
      %s114 = sphi 0, %s98
      %s122 = sphi 0, %s124
      %s125 = sphi 0, %s122
      %s126 = sphi 0, %s125
      %s142 = sphi 0, %s126
    $region4: #{vocal_separation_hybrid_forward.9} parent=1 // loop_header_branch
      %12 = sbr.rel (%p10) target = $region8
    $region5: #{vocal_separation_hybrid_forward.9} parent=1 // loop_body
      %s14 = ssub.s32 %s9, 1
      %s15 = ssub.s32 %s9, 2
      %s25 = sadd.s32 1, %s18
      %p26 = scmp.ge.s32.totalorder %s25, 1
      %s27 = scalar_select %p26, 0, %s25
      %s28 = sadd.s32 1, %s17
      %s29 = scalar_select %p26, %s28, %s17
      %p30 = scmp.ge.s32.totalorder %s29, 4
      %s31 = scalar_select %p30, 0, %s29
      %s32 = sadd.s32 1, %s16
      %s33 = scalar_select %p30, %s32, %s16
      %p34 = scmp.ge.s32.totalorder %s33, 1
      %s35 = scalar_select %p34, 0, %s33
      %s36 = ssub.s32 %s16, %s35
      %s37 = ssub.s32 %s18, %s27
      %s38 = sor.u32 %s36, %s37
      %p39 = scmp.eq.s32.totalorder %s38, 0
      %s41 = sadd.s32 %s40, 1
      %s42 = scalar_select %p39, %s40, %s41
      %p45 = pneg %p39
      %p46 = scmp.eq.s32.totalorder %s9, 3
      %p47 = por %p45, %p46
      %p48 = scmp.ne.s32.totalorder %s40, %s43
      %p49 = scmp.eq.s32.totalorder %s9, 0
      %p50 = por %p48, %p49
      %p51 = scmp.ne.s32.totalorder %s40, %s43
      %p52 = scmp.eq.s32.totalorder %s14, 3
      %p53 = por %p51, %p52
      %p54 = scmp.ne.s32.totalorder %s43, %s44
      %p55 = scmp.eq.s32.totalorder %s14, 0
      %p56 = por %p54, %p55
      %p57 = scmp.ne.s32.totalorder %s43, %s44
      %p58 = scmp.eq.s32.totalorder %s15, 3
      %p59 = por %p57, %p58
      %p61 = scmp.ne.s32.totalorder %s44, %s60
      %p62 = scmp.eq.s32.totalorder %s15, 0
      %p63 = por %p61, %p62
      %s64 = ssub.s32 %s18, %s27
      %s65 = ssub.s32 %s17, %s31
      %s66 = sor.u32 %s64, %s65
      %p67 = scmp.eq.s32.totalorder %s66, 0
      %s69 = sadd.s32 %s68, 1
      %s70 = scalar_select %p67, %s68, %s69
      %p73 = pneg %p67
      %p74 = scmp.eq.s32.totalorder %s9, 3
      %p75 = por %p73, %p74
      %p76 = scmp.ne.s32.totalorder %s68, %s71
      %p77 = scmp.eq.s32.totalorder %s9, 0
      %p78 = por %p76, %p77
      %p79 = scmp.ne.s32.totalorder %s68, %s71
      %p80 = scmp.eq.s32.totalorder %s14, 3
      %p81 = por %p79, %p80
      %p82 = scmp.ne.s32.totalorder %s71, %s72
      %p83 = scmp.eq.s32.totalorder %s14, 0
      %p84 = por %p82, %p83
      %p85 = scmp.ne.s32.totalorder %s71, %s72
      %p86 = scmp.eq.s32.totalorder %s15, 3
      %p87 = por %p85, %p86
      %p89 = scmp.ne.s32.totalorder %s72, %s88
      %p90 = scmp.eq.s32.totalorder %s15, 0
      %p91 = por %p89, %p90
      %s92 = ssub.s32 %s17, %s31
      %p93 = scmp.eq.s32.totalorder %s92, 0
      %s95 = sadd.s32 %s94, 1
      %s96 = scalar_select %p93, %s94, %s95
      %p99 = pneg %p93
      %p100 = scmp.eq.s32.totalorder %s9, 3
      %p101 = por %p99, %p100
      %p102 = scmp.ne.s32.totalorder %s94, %s97
      %p103 = scmp.eq.s32.totalorder %s9, 0
      %p104 = por %p102, %p103
      %p105 = scmp.ne.s32.totalorder %s94, %s97
      %p106 = scmp.eq.s32.totalorder %s14, 3
      %p107 = por %p105, %p106
      %p108 = scmp.ne.s32.totalorder %s97, %s98
      %p109 = scmp.eq.s32.totalorder %s14, 0
      %p110 = por %p108, %p109
      %p111 = scmp.ne.s32.totalorder %s97, %s98
      %p112 = scmp.eq.s32.totalorder %s15, 3
      %p113 = por %p111, %p112
      %p115 = scmp.ne.s32.totalorder %s98, %s114
      %p116 = scmp.eq.s32.totalorder %s15, 0
      %p117 = por %p115, %p116
      %s118 = ssub.s32 %s16, %s35
      %s119 = ssub.s32 %s17, %s31
      %s120 = sor.u32 %s118, %s119
      %p121 = scmp.eq.s32.totalorder %s120, 0
      %s123 = sadd.s32 %s122, 1
      %s124 = scalar_select %p121, %s122, %s123
      %p127 = pneg %p121
      %p128 = scmp.eq.s32.totalorder %s9, 3
      %p129 = por %p127, %p128
      %p130 = scmp.ne.s32.totalorder %s122, %s125
      %p131 = scmp.eq.s32.totalorder %s9, 0
      %p132 = por %p130, %p131
      %p133 = scmp.ne.s32.totalorder %s122, %s125
      %p134 = scmp.eq.s32.totalorder %s14, 3
      %p135 = por %p133, %p134
      %p136 = scmp.ne.s32.totalorder %s125, %s126
      %p137 = scmp.eq.s32.totalorder %s14, 0
      %p138 = por %p136, %p137
      %p139 = scmp.ne.s32.totalorder %s125, %s126
      %p140 = scmp.eq.s32.totalorder %s15, 3
      %p141 = por %p139, %p140
      %p143 = scmp.ne.s32.totalorder %s126, %s142
      %p144 = scmp.eq.s32.totalorder %s15, 0
      %p145 = por %p143, %p144
      %p146 = scmp.le.s32.totalorder 1, %s9
      %p147 = scmp.lt.s32.totalorder %s9, 5
      %p148 = pnand %p146, %p147
      %p149 = pneg %p148
      // Predicated region
      $region9: #{vocal_separation_hybrid_forward.9} parent=5 // pred_check
        _
      $region10: #{vocal_separation_hybrid_forward.9} parent=5 // pred_check_branch
        %151 = sbr.rel (%p148) target = $region12
      $region11: #{vocal_separation_hybrid_forward.9} parent=5 // pred_region
        %s152 = ssub.s32 %s9, 1
        // Predicated region
        $region13: #{vocal_separation_hybrid_forward.9} parent=11 // pred_check
          %p153 = pneg %p56
        $region14: #{vocal_separation_hybrid_forward.9} parent=11 // pred_check_branch
          %155 = sbr.rel (%p153) target = $region16
        $region15: #{vocal_separation_hybrid_forward.9} parent=11 // pred_region
          %s156 = smul.u32 2, %s19
          %s157 = smul.u32 2, %s21
          %p158 = scmp.lt.s32.totalorder %s156, 1
          %s159 = scalar_select %p158, %s156, 1
          %p160 = scmp.lt.s32.totalorder %s157, 1
          %s161 = scalar_select %p160, %s157, 1
          %s162 = smul.addr %s159, 2
          %s163 = sadd.s32 %s161, %s162
          %s164 = smul.addr %s163, 4
          %s165 = scalar_lea.vmem %s0, %s164
          %s166 = smul.u32 2, %s19
          %s167 = smul.u32 2, %s21
        $region16: #{vocal_separation_hybrid_forward.9} parent=11 // pred_fallthru
          _
      $region12: #{vocal_separation_hybrid_forward.9} parent=5 // pred_fallthru
        _
      %p168 = scmp.lt.s32.totalorder %s9, 4
      // Predicated region
      $region17: #{vocal_separation_hybrid_forward.9} parent=5 // pred_check
        %p169 = pneg %p168
      $region18: #{vocal_separation_hybrid_forward.9} parent=5 // pred_check_branch
        %171 = sbr.rel (%p169) target = $region20
      $region19: #{vocal_separation_hybrid_forward.9} parent=5 // pred_region
        // Predicated region
        $region21: #{vocal_separation_hybrid_forward.9} parent=19 // pred_check
          %p172 = pneg %p78
        $region22: #{vocal_separation_hybrid_forward.9} parent=19 // pred_check_branch
          %174 = sbr.rel (%p172) target = $region24
        $region23: #{vocal_separation_hybrid_forward.9} parent=19 // pred_region
          %s175 = sand.u32 %s68, 1
          %s176 = sand.u32 %s68, 1
          %s177 = smul.addr %s176, 256
          %s178 = scalar_lea.vmem [#allocation3], %s177
          %s179 = smul.u32 32, %s18
          %s180 = smul.u32 2, %s17
          %s181 = smul.addr %s179, 8
          %s182 = sadd.s32 %s180, %s181
          %s183 = smul.addr %s182, 4
          %s184 = scalar_lea.vmem %s1, %s183
          // Predicated region
          $region25: #{vocal_separation_hybrid_forward.9} parent=23 // pred_check
            _
          $region26: #{vocal_separation_hybrid_forward.9} parent=23 // pred_check_branch
            %186 = sbr.rel (0) target = $region28
          $region27: #{vocal_separation_hybrid_forward.9} parent=23 // pred_region
            // Predicated region
            $region29: #{vocal_separation_hybrid_forward.9} parent=27 // pred_check
              _
            $region30: #{vocal_separation_hybrid_forward.9} parent=27 // pred_check_branch
              %188 = sbr.rel (0) target = $region32
            $region31: #{vocal_separation_hybrid_forward.9} parent=27 // pred_region
              // Predicated region
              $region44: #{vocal_separation_hybrid_forward.9} parent=31 // pred_check
                _
              $region45: #{vocal_separation_hybrid_forward.9} parent=31 // pred_check_branch
                %265 = sbr.rel (0) target = $region47
              $region46: #{vocal_separation_hybrid_forward.9} parent=31 // pred_region
                loop: start=0, step=1, limit=1
                $region48: #{vocal_separation_hybrid_forward.9} parent=46 // loop_pre_header
                  _
                $region49: #{vocal_separation_hybrid_forward.9} parent=46 // loop_header
                  %s267 = sphi 0, %s271
                  %p268 = scmp.ge.s32.totalorder %s267, 1
                  %s272 = sphi %s184, %s184
                  %s273 = sphi %s178, %s178
                $region50: #{vocal_separation_hybrid_forward.9} parent=46 // loop_header_branch
                  %270 = sbr.rel (%p268) target = $region54
                $region51: #{vocal_separation_hybrid_forward.9} parent=46 // loop_body
                  %v274 = vld [vmem:[%s272] sm:$0xff]
                  %275 = vst [vmem:[%s273] sm:$0xff] %v274
                  %v276 = vld [vmem:[%s272 + $0x20] sm:$0xff]
                  %277 = vst [vmem:[%s273 + $0x8] sm:$0xff] %v276
                  %v278 = vld [vmem:[%s272 + $0x40] sm:$0xff]
                  %279 = vst [vmem:[%s273 + $0x10] sm:$0xff] %v278
                  %v280 = vld [vmem:[%s272 + $0x60] sm:$0xff]
                  %281 = vst [vmem:[%s273 + $0x18] sm:$0xff] %v280
                  %v282 = vld [vmem:[%s272 + $0x80] sm:$0xff]
                  %283 = vst [vmem:[%s273 + $0x20] sm:$0xff] %v282
                  %v284 = vld [vmem:[%s272 + $0xa0] sm:$0xff]
                  %285 = vst [vmem:[%s273 + $0x28] sm:$0xff] %v284
                  %v286 = vld [vmem:[%s272 + $0xc0] sm:$0xff]
                  %287 = vst [vmem:[%s273 + $0x30] sm:$0xff] %v286
                  %v288 = vld [vmem:[%s272 + $0xe0] sm:$0xff]
                  %289 = vst [vmem:[%s273 + $0x38] sm:$0xff] %v288
                  %v290 = vld [vmem:[%s272 + $0x100] sm:$0xff]
                  %291 = vst [vmem:[%s273 + $0x40] sm:$0xff] %v290
                  %v292 = vld [vmem:[%s272 + $0x120] sm:$0xff]
                  %293 = vst [vmem:[%s273 + $0x48] sm:$0xff] %v292
                  %v294 = vld [vmem:[%s272 + $0x140] sm:$0xff]
                  %295 = vst [vmem:[%s273 + $0x50] sm:$0xff] %v294
                  %v296 = vld [vmem:[%s272 + $0x160] sm:$0xff]
                  %297 = vst [vmem:[%s273 + $0x58] sm:$0xff] %v296
                  %v298 = vld [vmem:[%s272 + $0x180] sm:$0xff]
                  %299 = vst [vmem:[%s273 + $0x60] sm:$0xff] %v298
                  %v300 = vld [vmem:[%s272 + $0x1a0] sm:$0xff]
                  %301 = vst [vmem:[%s273 + $0x68] sm:$0xff] %v300
                  %v302 = vld [vmem:[%s272 + $0x1c0] sm:$0xff]
                  %303 = vst [vmem:[%s273 + $0x70] sm:$0xff] %v302
                  %v304 = vld [vmem:[%s272 + $0x1e0] sm:$0xff]
                  %305 = vst [vmem:[%s273 + $0x78] sm:$0xff] %v304
                  %v306 = vld [vmem:[%s272 + $0x200] sm:$0xff]
                  %307 = vst [vmem:[%s273 + $0x80] sm:$0xff] %v306
                  %v308 = vld [vmem:[%s272 + $0x220] sm:$0xff]
                  %309 = vst [vmem:[%s273 + $0x88] sm:$0xff] %v308
                  %v310 = vld [vmem:[%s272 + $0x240] sm:$0xff]
                  %311 = vst [vmem:[%s273 + $0x90] sm:$0xff] %v310
                  %v312 = vld [vmem:[%s272 + $0x260] sm:$0xff]
                  %313 = vst [vmem:[%s273 + $0x98] sm:$0xff] %v312
                  %v314 = vld [vmem:[%s272 + $0x280] sm:$0xff]
                  %315 = vst [vmem:[%s273 + $0xa0] sm:$0xff] %v314
                  %v316 = vld [vmem:[%s272 + $0x2a0] sm:$0xff]
                  %317 = vst [vmem:[%s273 + $0xa8] sm:$0xff] %v316
                  %v318 = vld [vmem:[%s272 + $0x2c0] sm:$0xff]
                  %319 = vst [vmem:[%s273 + $0xb0] sm:$0xff] %v318
                  %v320 = vld [vmem:[%s272 + $0x2e0] sm:$0xff]
                  %321 = vst [vmem:[%s273 + $0xb8] sm:$0xff] %v320
                  %v322 = vld [vmem:[%s272 + $0x300] sm:$0xff]
                  %323 = vst [vmem:[%s273 + $0xc0] sm:$0xff] %v322
                  %v324 = vld [vmem:[%s272 + $0x320] sm:$0xff]
                  %325 = vst [vmem:[%s273 + $0xc8] sm:$0xff] %v324
                  %v326 = vld [vmem:[%s272 + $0x340] sm:$0xff]
                  %327 = vst [vmem:[%s273 + $0xd0] sm:$0xff] %v326
                  %v328 = vld [vmem:[%s272 + $0x360] sm:$0xff]
                  %329 = vst [vmem:[%s273 + $0xd8] sm:$0xff] %v328
                  %v330 = vld [vmem:[%s272 + $0x380] sm:$0xff]
                  %331 = vst [vmem:[%s273 + $0xe0] sm:$0xff] %v330
                  %v332 = vld [vmem:[%s272 + $0x3a0] sm:$0xff]
                  %333 = vst [vmem:[%s273 + $0xe8] sm:$0xff] %v332
                  %v334 = vld [vmem:[%s272 + $0x3c0] sm:$0xff]
                  %335 = vst [vmem:[%s273 + $0xf0] sm:$0xff] %v334
                  %v336 = vld [vmem:[%s272 + $0x3e0] sm:$0xff]
                  %337 = vst [vmem:[%s273 + $0xf8] sm:$0xff] %v336
                $region52: #{vocal_separation_hybrid_forward.9} parent=46 // loop_footer
                  %s271 = sadd.s32 1, %s267
                $region53: #{vocal_separation_hybrid_forward.9} parent=46 // loop_footer_branch
                  %266 = sbr.rel target = $region49
                $region54: #{vocal_separation_hybrid_forward.9} parent=46 // loop_exit
                  _
              $region47: #{vocal_separation_hybrid_forward.9} parent=31 // pred_fallthru
                _
              // Predicated region
              $region55: #{vocal_separation_hybrid_forward.9} parent=31 // pred_check
                _
              $region56: #{vocal_separation_hybrid_forward.9} parent=31 // pred_check_branch
                %339 = sbr.rel target = $region58
              $region57: #{vocal_separation_hybrid_forward.9} parent=31 // pred_region
                _
              $region58: #{vocal_separation_hybrid_forward.9} parent=31 // pred_fallthru
                _
            $region32: #{vocal_separation_hybrid_forward.9} parent=27 // pred_fallthru
              _
            // Predicated region
            $region33: #{vocal_separation_hybrid_forward.9} parent=27 // pred_check
              _
            $region34: #{vocal_separation_hybrid_forward.9} parent=27 // pred_check_branch
              %190 = sbr.rel target = $region36
            $region35: #{vocal_separation_hybrid_forward.9} parent=27 // pred_region
              loop: start=0, step=1, limit=1
              $region37: #{vocal_separation_hybrid_forward.9} parent=35 // loop_pre_header
                _
              $region38: #{vocal_separation_hybrid_forward.9} parent=35 // loop_header
                %s193 = sphi 0, %s197
                %p194 = scmp.ge.s32.totalorder %s193, 1
                %s198 = sphi %s184, %s184
                %s199 = sphi %s178, %s178
              $region39: #{vocal_separation_hybrid_forward.9} parent=35 // loop_header_branch
                %196 = sbr.rel (%p194) target = $region43
              $region40: #{vocal_separation_hybrid_forward.9} parent=35 // loop_body
                %v200 = vld [vmem:[%s198] sm:$0xff]
                %201 = vst [vmem:[%s199] sm:$0xff] %v200
                %v202 = vld [vmem:[%s198 + $0x20] sm:$0xff]
                %203 = vst [vmem:[%s199 + $0x8] sm:$0xff] %v202
                %v204 = vld [vmem:[%s198 + $0x40] sm:$0xff]
                %205 = vst [vmem:[%s199 + $0x10] sm:$0xff] %v204
                %v206 = vld [vmem:[%s198 + $0x60] sm:$0xff]
                %207 = vst [vmem:[%s199 + $0x18] sm:$0xff] %v206
                %v208 = vld [vmem:[%s198 + $0x80] sm:$0xff]
                %209 = vst [vmem:[%s199 + $0x20] sm:$0xff] %v208
                %v210 = vld [vmem:[%s198 + $0xa0] sm:$0xff]
                %211 = vst [vmem:[%s199 + $0x28] sm:$0xff] %v210
                %v212 = vld [vmem:[%s198 + $0xc0] sm:$0xff]
                %213 = vst [vmem:[%s199 + $0x30] sm:$0xff] %v212
                %v214 = vld [vmem:[%s198 + $0xe0] sm:$0xff]
                %215 = vst [vmem:[%s199 + $0x38] sm:$0xff] %v214
                %v216 = vld [vmem:[%s198 + $0x100] sm:$0xff]
                %217 = vst [vmem:[%s199 + $0x40] sm:$0xff] %v216
                %v218 = vld [vmem:[%s198 + $0x120] sm:$0xff]
                %219 = vst [vmem:[%s199 + $0x48] sm:$0xff] %v218
                %v220 = vld [vmem:[%s198 + $0x140] sm:$0xff]
                %221 = vst [vmem:[%s199 + $0x50] sm:$0xff] %v220
                %v222 = vld [vmem:[%s198 + $0x160] sm:$0xff]
                %223 = vst [vmem:[%s199 + $0x58] sm:$0xff] %v222
                %v224 = vld [vmem:[%s198 + $0x180] sm:$0xff]
                %225 = vst [vmem:[%s199 + $0x60] sm:$0xff] %v224
                %v226 = vld [vmem:[%s198 + $0x1a0] sm:$0xff]
                %227 = vst [vmem:[%s199 + $0x68] sm:$0xff] %v226
                %v228 = vld [vmem:[%s198 + $0x1c0] sm:$0xff]
                %229 = vst [vmem:[%s199 + $0x70] sm:$0xff] %v228
                %v230 = vld [vmem:[%s198 + $0x1e0] sm:$0xff]
                %231 = vst [vmem:[%s199 + $0x78] sm:$0xff] %v230
                %v232 = vld [vmem:[%s198 + $0x200] sm:$0xff]
                %233 = vst [vmem:[%s199 + $0x80] sm:$0xff] %v232
                %v234 = vld [vmem:[%s198 + $0x220] sm:$0xff]
                %235 = vst [vmem:[%s199 + $0x88] sm:$0xff] %v234
                %v236 = vld [vmem:[%s198 + $0x240] sm:$0xff]
                %237 = vst [vmem:[%s199 + $0x90] sm:$0xff] %v236
                %v238 = vld [vmem:[%s198 + $0x260] sm:$0xff]
                %239 = vst [vmem:[%s199 + $0x98] sm:$0xff] %v238
                %v240 = vld [vmem:[%s198 + $0x280] sm:$0xff]
                %241 = vst [vmem:[%s199 + $0xa0] sm:$0xff] %v240
                %v242 = vld [vmem:[%s198 + $0x2a0] sm:$0xff]
                %243 = vst [vmem:[%s199 + $0xa8] sm:$0xff] %v242
                %v244 = vld [vmem:[%s198 + $0x2c0] sm:$0xff]
                %245 = vst [vmem:[%s199 + $0xb0] sm:$0xff] %v244
                %v246 = vld [vmem:[%s198 + $0x2e0] sm:$0xff]
                %247 = vst [vmem:[%s199 + $0xb8] sm:$0xff] %v246
                %v248 = vld [vmem:[%s198 + $0x300] sm:$0xff]
                %249 = vst [vmem:[%s199 + $0xc0] sm:$0xff] %v248
                %v250 = vld [vmem:[%s198 + $0x320] sm:$0xff]
                %251 = vst [vmem:[%s199 + $0xc8] sm:$0xff] %v250
                %v252 = vld [vmem:[%s198 + $0x340] sm:$0xff]
                %253 = vst [vmem:[%s199 + $0xd0] sm:$0xff] %v252
                %v254 = vld [vmem:[%s198 + $0x360] sm:$0xff]
                %255 = vst [vmem:[%s199 + $0xd8] sm:$0xff] %v254
                %v256 = vld [vmem:[%s198 + $0x380] sm:$0xff]
                %257 = vst [vmem:[%s199 + $0xe0] sm:$0xff] %v256
                %v258 = vld [vmem:[%s198 + $0x3a0] sm:$0xff]
                %259 = vst [vmem:[%s199 + $0xe8] sm:$0xff] %v258
                %v260 = vld [vmem:[%s198 + $0x3c0] sm:$0xff]
                %261 = vst [vmem:[%s199 + $0xf0] sm:$0xff] %v260
                %v262 = vld [vmem:[%s198 + $0x3e0] sm:$0xff]
                %263 = vst [vmem:[%s199 + $0xf8] sm:$0xff] %v262
              $region41: #{vocal_separation_hybrid_forward.9} parent=35 // loop_footer
                %s197 = sadd.s32 1, %s193
              $region42: #{vocal_separation_hybrid_forward.9} parent=35 // loop_footer_branch
                %192 = sbr.rel target = $region38
              $region43: #{vocal_separation_hybrid_forward.9} parent=35 // loop_exit
                _
            $region36: #{vocal_separation_hybrid_forward.9} parent=27 // pred_fallthru
              _
          $region28: #{vocal_separation_hybrid_forward.9} parent=23 // pred_fallthru
            _
          %340 = vnop
        $region24: #{vocal_separation_hybrid_forward.9} parent=19 // pred_fallthru
          _
        // Predicated region
        $region59: #{vocal_separation_hybrid_forward.9} parent=19 // pred_check
          %p341 = pneg %p104
        $region60: #{vocal_separation_hybrid_forward.9} parent=19 // pred_check_branch
          %343 = sbr.rel (%p341) target = $region62
        $region61: #{vocal_separation_hybrid_forward.9} parent=19 // pred_region
          %s344 = smul.u32 2, %s17
          %p345 = scmp.lt.s32.totalorder %s344, 7
          %s346 = scalar_select %p345, %s344, 7
          %s347 = scalar_lea.vmem %s2, %s346
          %s348 = smul.u32 2, %s17
        $region62: #{vocal_separation_hybrid_forward.9} parent=19 // pred_fallthru
          _
      $region20: #{vocal_separation_hybrid_forward.9} parent=5 // pred_fallthru
        _
      %p349 = scmp.le.s32.totalorder 1, %s9
      %p350 = scmp.lt.s32.totalorder %s9, 5
      %p351 = pnand %p349, %p350
      %p352 = pneg %p351
      // Predicated region
      $region63: #{vocal_separation_hybrid_forward.9} parent=5 // pred_check
        _
      $region64: #{vocal_separation_hybrid_forward.9} parent=5 // pred_check_branch
        %354 = sbr.rel (%p351) target = $region66
      $region65: #{vocal_separation_hybrid_forward.9} parent=5 // pred_region
        %s355 = ssub.s32 %s9, 1
        %s356 = sand.u32 %s71, 1
        %s357 = sand.u32 %s71, 1
        %s358 = smul.addr %s357, 256
        %s359 = scalar_lea.vmem [#allocation3], %s358
        // Predicated region
        $region67: #{vocal_separation_hybrid_forward.9} parent=65 // pred_check
          %p360 = pneg %p84
        $region68: #{vocal_separation_hybrid_forward.9} parent=65 // pred_check_branch
          %362 = sbr.rel (%p360) target = $region70
        $region69: #{vocal_separation_hybrid_forward.9} parent=65 // pred_region
          _
        $region70: #{vocal_separation_hybrid_forward.9} parent=65 // pred_fallthru
          _
        %s363 = smul.u32 2, %s19
        %s364 = smul.u32 2, %s21
        %p365 = scmp.lt.s32.totalorder %s363, 1
        %s366 = scalar_select %p365, %s363, 1
        %p367 = scmp.lt.s32.totalorder %s364, 1
        %s368 = scalar_select %p367, %s364, 1
        %s369 = smul.addr %s366, 2
        %s370 = sadd.s32 %s368, %s369
        %s371 = smul.addr %s370, 4
        %s372 = scalar_lea.vmem %s0, %s371
        %p373 = pneg %p56
        %p374 = pneg %p53
        %s375 = sand.u32 %s71, 1
        %s376 = sand.u32 %s71, 1
        %s377 = smul.addr %s376, 256
        %s378 = scalar_lea.vmem [#allocation3], %s377
        %p379 = pneg %p84
        %p380 = pneg %p81
        %s381 = smul.u32 2, %s20
        %p382 = scmp.lt.s32.totalorder %s381, 7
        %s383 = scalar_select %p382, %s381, 7
        %s384 = scalar_lea.vmem %s2, %s383
        %p385 = pneg %p110
        %p386 = pneg %p107
        %p387 = pneg %p138
        %p388 = pneg %p135
        %s389 = sand.u32 %s125, 1
        %s390 = sand.u32 %s125, 1
        %s391 = smul.addr %s390, 16
        %s392 = scalar_lea.vmem [#allocation4], %s391
        %s393 = smul.u32 2, %s19
        %s394 = smul.u32 2, %s21
        %p395 = scmp.lt.s32.totalorder %s393, 1
        %s396 = scalar_select %p395, %s393, 1
        %p397 = scmp.lt.s32.totalorder %s394, 1
        %s398 = scalar_select %p397, %s394, 1
        %s399 = smul.addr %s396, 2
        %s400 = sadd.s32 %s398, %s399
        %s401 = smul.addr %s400, 4
        %s402 = scalar_lea.vmem %s0, %s401
        %s403 = smul.u32 2, %s19
        %s404 = smul.u32 2, %s21
        %s405 = smul.u32 32, %s21
        %s406 = smul.u32 2, %s20
        %s407 = smul.u32 2, %s20
        %p408 = scmp.lt.s32.totalorder %s407, 7
        %s409 = scalar_select %p408, %s407, 7
        %s410 = scalar_lea.vmem %s2, %s409
        %s411 = smul.u32 2, %s20
        %s412 = smul.u32 2, %s19
        %s413 = smul.u32 2, %s20
        %p414 = scmp.eq.s32.totalorder %s21, 0
        // Predicated region
        $region71: #{vocal_separation_hybrid_forward.9} parent=65 // pred_check
          %p415 = pneg %p414
        $region72: #{vocal_separation_hybrid_forward.9} parent=65 // pred_check_branch
          %417 = sbr.rel (%p415) target = $region74
        $region73: #{vocal_separation_hybrid_forward.9} parent=65 // pred_region
          %418 = vst [vmem:[#allocation2] sm:$0xff] 0.0
          %419 = vst [vmem:[#allocation2 + $0x8] sm:$0xff] 0.0
          %420 = vst [vmem:[#allocation2 + $0x10] sm:$0xff] 0.0
          %421 = vst [vmem:[#allocation2 + $0x18] sm:$0xff] 0.0
        $region74: #{vocal_separation_hybrid_forward.9} parent=65 // pred_fallthru
          _
        %v422 = vld [vmem:[#allocation2] sm:$0xff]
        %v423 = vld [vmem:[#allocation2 + $0x8] sm:$0xff]
        %v424 = vld [vmem:[#allocation2 + $0x10] sm:$0xff]
        %v425 = vld [vmem:[#allocation2 + $0x18] sm:$0xff]
        %v426 = vld [vmem:[%s402] sm:$0xff]
        %v427 = vld [vmem:[%s402 + $0x8] sm:$0xff]
        %v428 = vld [vmem:[%s359] sm:$0xff]
        %v429 = vld [vmem:[%s359 + $0x8] sm:$0xff]
        %v430 = vld [vmem:[%s359 + $0x10] sm:$0xff]
        %v431 = vld [vmem:[%s359 + $0x18] sm:$0xff]
        %v432 = vld [vmem:[%s359 + $0x20] sm:$0xff]
        %v433 = vld [vmem:[%s359 + $0x28] sm:$0xff]
        %v434 = vld [vmem:[%s359 + $0x30] sm:$0xff]
        %v435 = vld [vmem:[%s359 + $0x38] sm:$0xff]
        %v436 = vld [vmem:[%s359 + $0x40] sm:$0xff]
        %v437 = vld [vmem:[%s359 + $0x48] sm:$0xff]
        %v438 = vld [vmem:[%s359 + $0x50] sm:$0xff]
        %v439 = vld [vmem:[%s359 + $0x58] sm:$0xff]
        %v440 = vld [vmem:[%s359 + $0x60] sm:$0xff]
        %v441 = vld [vmem:[%s359 + $0x68] sm:$0xff]
        %v442 = vld [vmem:[%s359 + $0x70] sm:$0xff]
        %v443 = vld [vmem:[%s359 + $0x78] sm:$0xff]
        %v444 = vld [vmem:[%s359 + $0x80] sm:$0xff]
        %v445 = vld [vmem:[%s359 + $0x88] sm:$0xff]
        %v446 = vld [vmem:[%s359 + $0x90] sm:$0xff]
        %v447 = vld [vmem:[%s359 + $0x98] sm:$0xff]
        %v448 = vld [vmem:[%s359 + $0xa0] sm:$0xff]
        %v449 = vld [vmem:[%s359 + $0xa8] sm:$0xff]
        %v450 = vld [vmem:[%s359 + $0xb0] sm:$0xff]
        %v451 = vld [vmem:[%s359 + $0xb8] sm:$0xff]
        %v452 = vld [vmem:[%s359 + $0xc0] sm:$0xff]
        %v453 = vld [vmem:[%s359 + $0xc8] sm:$0xff]
        %v454 = vld [vmem:[%s359 + $0xd0] sm:$0xff]
        %v455 = vld [vmem:[%s359 + $0xd8] sm:$0xff]
        %v456 = vld [vmem:[%s359 + $0xe0] sm:$0xff]
        %v457 = vld [vmem:[%s359 + $0xe8] sm:$0xff]
        %v458 = vld [vmem:[%s359 + $0xf0] sm:$0xff]
        %v459 = vld [vmem:[%s359 + $0xf8] sm:$0xff]
        %v462 = vunpack.c.l.b16 %v426
        %v463 = vunpack.c.h.b16 %v426
        %v464 = vunpack.c.l.b16 %v427
        %v465 = vunpack.c.h.b16 %v427
        %v466 = vpack.c.b16 %v464, %v462
        %v467 = vpack.c.b16 %v465, %v463
        %v502 = vunpack.c.l.b16 %v428
        %v503 = vunpack.c.h.b16 %v428
        %v504 = vunpack.c.l.b16 %v429
        %v505 = vunpack.c.h.b16 %v429
        %v506 = vunpack.c.l.b16 %v430
        %v507 = vunpack.c.h.b16 %v430
        %v508 = vunpack.c.l.b16 %v431
        %v509 = vunpack.c.h.b16 %v431
        %v510 = vunpack.c.l.b16 %v432
        %v511 = vunpack.c.h.b16 %v432
        %v512 = vunpack.c.l.b16 %v433
        %v513 = vunpack.c.h.b16 %v433
        %v514 = vunpack.c.l.b16 %v434
        %v515 = vunpack.c.h.b16 %v434
        %v516 = vunpack.c.l.b16 %v435
        %v517 = vunpack.c.h.b16 %v435
        %v518 = vunpack.c.l.b16 %v436
        %v519 = vunpack.c.h.b16 %v436
        %v520 = vunpack.c.l.b16 %v437
        %v521 = vunpack.c.h.b16 %v437
        %v522 = vunpack.c.l.b16 %v438
        %v523 = vunpack.c.h.b16 %v438
        %v524 = vunpack.c.l.b16 %v439
        %v525 = vunpack.c.h.b16 %v439
        %v526 = vunpack.c.l.b16 %v440
        %v527 = vunpack.c.h.b16 %v440
        %v528 = vunpack.c.l.b16 %v441
        %v529 = vunpack.c.h.b16 %v441
        %v530 = vunpack.c.l.b16 %v442
        %v531 = vunpack.c.h.b16 %v442
        %v532 = vunpack.c.l.b16 %v443
        %v533 = vunpack.c.h.b16 %v443
        %v534 = vunpack.c.l.b16 %v444
        %v535 = vunpack.c.h.b16 %v444
        %v536 = vunpack.c.l.b16 %v445
        %v537 = vunpack.c.h.b16 %v445
        %v538 = vunpack.c.l.b16 %v446
        %v539 = vunpack.c.h.b16 %v446
        %v540 = vunpack.c.l.b16 %v447
        %v541 = vunpack.c.h.b16 %v447
        %v542 = vunpack.c.l.b16 %v448
        %v543 = vunpack.c.h.b16 %v448
        %v544 = vunpack.c.l.b16 %v449
        %v545 = vunpack.c.h.b16 %v449
        %v546 = vunpack.c.l.b16 %v450
        %v547 = vunpack.c.h.b16 %v450
        %v548 = vunpack.c.l.b16 %v451
        %v549 = vunpack.c.h.b16 %v451
        %v550 = vunpack.c.l.b16 %v452
        %v551 = vunpack.c.h.b16 %v452
        %v552 = vunpack.c.l.b16 %v453
        %v553 = vunpack.c.h.b16 %v453
        %v554 = vunpack.c.l.b16 %v454
        %v555 = vunpack.c.h.b16 %v454
        %v556 = vunpack.c.l.b16 %v455
        %v557 = vunpack.c.h.b16 %v455
        %v558 = vunpack.c.l.b16 %v456
        %v559 = vunpack.c.h.b16 %v456
        %v560 = vunpack.c.l.b16 %v457
        %v561 = vunpack.c.h.b16 %v457
        %v562 = vunpack.c.l.b16 %v458
        %v563 = vunpack.c.h.b16 %v458
        %v564 = vunpack.c.l.b16 %v459
        %v565 = vunpack.c.h.b16 %v459
        %v566 = vpack.c.b16 %v504, %v502
        %v567 = vpack.c.b16 %v505, %v503
        %v568 = vpack.c.b16 %v508, %v506
        %v569 = vpack.c.b16 %v509, %v507
        %v570 = vpack.c.b16 %v512, %v510
        %v571 = vpack.c.b16 %v513, %v511
        %v572 = vpack.c.b16 %v516, %v514
        %v573 = vpack.c.b16 %v517, %v515
        %v574 = vpack.c.b16 %v520, %v518
        %v575 = vpack.c.b16 %v521, %v519
        %v576 = vpack.c.b16 %v524, %v522
        %v577 = vpack.c.b16 %v525, %v523
        %v578 = vpack.c.b16 %v528, %v526
        %v579 = vpack.c.b16 %v529, %v527
        %v580 = vpack.c.b16 %v532, %v530
        %v581 = vpack.c.b16 %v533, %v531
        %v582 = vpack.c.b16 %v536, %v534
        %v583 = vpack.c.b16 %v537, %v535
        %v584 = vpack.c.b16 %v540, %v538
        %v585 = vpack.c.b16 %v541, %v539
        %v586 = vpack.c.b16 %v544, %v542
        %v587 = vpack.c.b16 %v545, %v543
        %v588 = vpack.c.b16 %v548, %v546
        %v589 = vpack.c.b16 %v549, %v547
        %v590 = vpack.c.b16 %v552, %v550
        %v591 = vpack.c.b16 %v553, %v551
        %v592 = vpack.c.b16 %v556, %v554
        %v593 = vpack.c.b16 %v557, %v555
        %v594 = vpack.c.b16 %v560, %v558
        %v595 = vpack.c.b16 %v561, %v559
        %v596 = vpack.c.b16 %v564, %v562
        %v597 = vpack.c.b16 %v565, %v563
        %630 = vmatprep.subr.bf16.mxu0 %v567
        %631 = vmatpush1.bf16.msra.mxu0 %v566
        %632 = vmatprep.subr.bf16.mxu0 %v569
        %633 = vmatpush1.bf16.msra.mxu0 %v568
        %634 = vmatprep.subr.bf16.mxu0 %v571
        %635 = vmatpush1.bf16.msra.mxu0 %v570
        %636 = vmatprep.subr.bf16.mxu0 %v573
        %637 = vmatpush1.bf16.msra.mxu0 %v572
        %638 = vmatprep.subr.bf16.mxu0 %v575
        %639 = vmatpush1.bf16.msra.mxu0 %v574
        %640 = vmatprep.subr.bf16.mxu0 %v577
        %641 = vmatpush1.bf16.msra.mxu0 %v576
        %642 = vmatprep.subr.bf16.mxu0 %v579
        %643 = vmatpush1.bf16.msra.mxu0 %v578
        %644 = vmatprep.subr.bf16.mxu0 %v581
        %645 = vmatpush1.bf16.msra.mxu0 %v580
        %646 = vmatprep.subr.bf16.mxu0 %v583
        %647 = vmatpush1.bf16.msra.mxu0 %v582
        %648 = vmatprep.subr.bf16.mxu0 %v585
        %649 = vmatpush1.bf16.msra.mxu0 %v584
        %650 = vmatprep.subr.bf16.mxu0 %v587
        %651 = vmatpush1.bf16.msra.mxu0 %v586
        %652 = vmatprep.subr.bf16.mxu0 %v589
        %653 = vmatpush1.bf16.msra.mxu0 %v588
        %654 = vmatprep.subr.bf16.mxu0 %v591
        %655 = vmatpush1.bf16.msra.mxu0 %v590
        %656 = vmatprep.subr.bf16.mxu0 %v593
        %657 = vmatpush1.bf16.msra.mxu0 %v592
        %658 = vmatprep.subr.bf16.mxu0 %v595
        %659 = vmatpush1.bf16.msra.mxu0 %v594
        %660 = vmatprep.subr.bf16.mxu0 %v597
        %661 = vmatpush1.bf16.msra.mxu0 %v596
        %662 = vmatprep.mubr.bf16.mxu0 %v467
        %663 = vmatmul.mubr.bf16.gmra.mrb[0].mxu0 %v466
        %v664 = vpop.f32.mrb[0].mxu0
        %v665 = vadd.f32 0.0, %v664
        %v666 = vpop.f32.mrb[0].mxu0
        %v667 = vadd.f32 0.0, %v666
        %v668 = vpop.f32.mrb[0].mxu0
        %v669 = vadd.f32 0.0, %v668
        %v670 = vpop.f32.mrb[0].mxu0
        %v671 = vadd.f32 0.0, %v670
        %672 = vdwg.mxu0
        %v673 = vadd.f32 %v422, %v665
        %v674 = vadd.f32 %v423, %v667
        %v675 = vadd.f32 %v424, %v669
        %v676 = vadd.f32 %v425, %v671
        %677 = vst [vmem:[#allocation2] sm:$0xff] %v673
        %678 = vst [vmem:[#allocation2 + $0x8] sm:$0xff] %v674
        %679 = vst [vmem:[#allocation2 + $0x10] sm:$0xff] %v675
        %680 = vst [vmem:[#allocation2 + $0x18] sm:$0xff] %v676
        // Predicated region
        $region75: #{vocal_separation_hybrid_forward.9} parent=65 // pred_check
          %p681 = pneg %p414
        $region76: #{vocal_separation_hybrid_forward.9} parent=65 // pred_check_branch
          %683 = sbr.rel (%p681) target = $region78
        $region77: #{vocal_separation_hybrid_forward.9} parent=65 // pred_region
          %v684 = vld [vmem:[#allocation2] sm:$0xff]
          %v685 = vld [vmem:[#allocation2 + $0x8] sm:$0xff]
          %v686 = vld [vmem:[#allocation2 + $0x10] sm:$0xff]
          %v687 = vld [vmem:[#allocation2 + $0x18] sm:$0xff]
          %v688 = vld [vmem:[%s410] sm:$0x3]
          %v690 = vlaneseq
          %v691 = vshrl.u32 %v690, 7
          %v692 = vsub.s32 0, %v691
          %v693 = vrot.slane %v688, %v692
          %v694 = vlaneseq
          %v695 = vshrl.u32 %v694, 7
          %v696 = vsub.s32 1, %v695
          %v697 = vrot.slane %v688, %v696
          %v700 = vadd.f32 %v684, %v693
          %v701 = vadd.f32 %v685, %v697
          %v702 = vadd.f32 %v686, %v693
          %v703 = vadd.f32 %v687, %v697
          %v704 = vpack.c.bf16 %v702, %v700
          %v705 = vpack.c.bf16 %v703, %v701
          %v708 = vunpack.c.l.b16 %v704
          %v709 = vunpack.c.l.b16 %v705
          %v710 = vunpack.c.h.b16 %v704
          %v711 = vunpack.c.h.b16 %v705
          %v712 = vpack.c.b16 %v709, %v708
          %v713 = vpack.c.b16 %v711, %v710
          %716 = vst [vmem:[%s392] sm:$0xff] %v712
          %717 = vst [vmem:[%s392 + $0x8] sm:$0xff] %v713
        $region78: #{vocal_separation_hybrid_forward.9} parent=65 // pred_fallthru
          _
        %s718 = sand.u32 %s125, 1
        %s719 = sand.u32 %s125, 1
        %s720 = smul.addr %s719, 16
        %s721 = scalar_lea.vmem [#allocation4], %s720
        // Predicated region
        $region79: #{vocal_separation_hybrid_forward.9} parent=65 // pred_check
          %p722 = pneg %p135
        $region80: #{vocal_separation_hybrid_forward.9} parent=65 // pred_check_branch
          %724 = sbr.rel (%p722) target = $region82
        $region81: #{vocal_separation_hybrid_forward.9} parent=65 // pred_region
          %s725 = smul.u32 2, %s19
          %s726 = smul.u32 2, %s20
          %s727 = smul.addr %s725, 8
          %s728 = sadd.s32 %s726, %s727
          %s729 = smul.addr %s728, 4
          %s730 = scalar_lea.vmem %s3, %s729
          // Predicated region
          $region83: #{vocal_separation_hybrid_forward.9} parent=81 // pred_check
            _
          $region84: #{vocal_separation_hybrid_forward.9} parent=81 // pred_check_branch
            %732 = sbr.rel (0) target = $region86
          $region85: #{vocal_separation_hybrid_forward.9} parent=81 // pred_region
            // Predicated region
            $region87: #{vocal_separation_hybrid_forward.9} parent=85 // pred_check
              _
            $region88: #{vocal_separation_hybrid_forward.9} parent=85 // pred_check_branch
              %734 = sbr.rel (0) target = $region90
            $region89: #{vocal_separation_hybrid_forward.9} parent=85 // pred_region
              // Predicated region
              $region102: #{vocal_separation_hybrid_forward.9} parent=89 // pred_check
                _
              $region103: #{vocal_separation_hybrid_forward.9} parent=89 // pred_check_branch
                %751 = sbr.rel (0) target = $region105
              $region104: #{vocal_separation_hybrid_forward.9} parent=89 // pred_region
                loop: start=0, step=1, limit=1
                $region106: #{vocal_separation_hybrid_forward.9} parent=104 // loop_pre_header
                  _
                $region107: #{vocal_separation_hybrid_forward.9} parent=104 // loop_header
                  %s753 = sphi 0, %s757
                  %p754 = scmp.ge.s32.totalorder %s753, 1
                  %s758 = sphi %s721, %s721
                  %s759 = sphi %s730, %s730
                $region108: #{vocal_separation_hybrid_forward.9} parent=104 // loop_header_branch
                  %756 = sbr.rel (%p754) target = $region112
                $region109: #{vocal_separation_hybrid_forward.9} parent=104 // loop_body
                  %v760 = vld [vmem:[%s758] sm:$0xff]
                  %761 = vst [vmem:[%s759] sm:$0xff] %v760
                  %v762 = vld [vmem:[%s758 + $0x8] sm:$0xff]
                  %763 = vst [vmem:[%s759 + $0x20] sm:$0xff] %v762
                $region110: #{vocal_separation_hybrid_forward.9} parent=104 // loop_footer
                  %s757 = sadd.s32 1, %s753
                $region111: #{vocal_separation_hybrid_forward.9} parent=104 // loop_footer_branch
                  %752 = sbr.rel target = $region107
                $region112: #{vocal_separation_hybrid_forward.9} parent=104 // loop_exit
                  _
              $region105: #{vocal_separation_hybrid_forward.9} parent=89 // pred_fallthru
                _
              // Predicated region
              $region113: #{vocal_separation_hybrid_forward.9} parent=89 // pred_check
                _
              $region114: #{vocal_separation_hybrid_forward.9} parent=89 // pred_check_branch
                %765 = sbr.rel target = $region116
              $region115: #{vocal_separation_hybrid_forward.9} parent=89 // pred_region
                _
              $region116: #{vocal_separation_hybrid_forward.9} parent=89 // pred_fallthru
                _
            $region90: #{vocal_separation_hybrid_forward.9} parent=85 // pred_fallthru
              _
            // Predicated region
            $region91: #{vocal_separation_hybrid_forward.9} parent=85 // pred_check
              _
            $region92: #{vocal_separation_hybrid_forward.9} parent=85 // pred_check_branch
              %736 = sbr.rel target = $region94
            $region93: #{vocal_separation_hybrid_forward.9} parent=85 // pred_region
              loop: start=0, step=1, limit=1
              $region95: #{vocal_separation_hybrid_forward.9} parent=93 // loop_pre_header
                _
              $region96: #{vocal_separation_hybrid_forward.9} parent=93 // loop_header
                %s739 = sphi 0, %s743
                %p740 = scmp.ge.s32.totalorder %s739, 1
                %s744 = sphi %s721, %s721
                %s745 = sphi %s730, %s730
              $region97: #{vocal_separation_hybrid_forward.9} parent=93 // loop_header_branch
                %742 = sbr.rel (%p740) target = $region101
              $region98: #{vocal_separation_hybrid_forward.9} parent=93 // loop_body
                %v746 = vld [vmem:[%s744] sm:$0xff]
                %747 = vst [vmem:[%s745] sm:$0xff] %v746
                %v748 = vld [vmem:[%s744 + $0x8] sm:$0xff]
                %749 = vst [vmem:[%s745 + $0x20] sm:$0xff] %v748
              $region99: #{vocal_separation_hybrid_forward.9} parent=93 // loop_footer
                %s743 = sadd.s32 1, %s739
              $region100: #{vocal_separation_hybrid_forward.9} parent=93 // loop_footer_branch
                %738 = sbr.rel target = $region96
              $region101: #{vocal_separation_hybrid_forward.9} parent=93 // loop_exit
                _
            $region94: #{vocal_separation_hybrid_forward.9} parent=85 // pred_fallthru
              _
          $region86: #{vocal_separation_hybrid_forward.9} parent=81 // pred_fallthru
            _
          %766 = vnop
        $region82: #{vocal_separation_hybrid_forward.9} parent=65 // pred_fallthru
          _
      $region66: #{vocal_separation_hybrid_forward.9} parent=5 // pred_fallthru
        _
      %p767 = scmp.le.s32.totalorder 2, %s9
      // Predicated region
      $region117: #{vocal_separation_hybrid_forward.9} parent=5 // pred_check
        %p768 = pneg %p767
      $region118: #{vocal_separation_hybrid_forward.9} parent=5 // pred_check_branch
        %770 = sbr.rel (%p768) target = $region120
      $region119: #{vocal_separation_hybrid_forward.9} parent=5 // pred_region
        %s771 = ssub.s32 %s9, 2
        // Predicated region
        $region121: #{vocal_separation_hybrid_forward.9} parent=119 // pred_check
          %p772 = pneg %p141
        $region122: #{vocal_separation_hybrid_forward.9} parent=119 // pred_check_branch
          %774 = sbr.rel (%p772) target = $region124
        $region123: #{vocal_separation_hybrid_forward.9} parent=119 // pred_region
          %s775 = sand.u32 %s126, 1
          %s776 = sand.u32 %s126, 1
          %s777 = smul.addr %s776, 16
          %s778 = scalar_lea.vmem [#allocation4], %s777
        $region124: #{vocal_separation_hybrid_forward.9} parent=119 // pred_fallthru
          _
      $region120: #{vocal_separation_hybrid_forward.9} parent=5 // pred_fallthru
        _
    $region6: #{vocal_separation_hybrid_forward.9} parent=1 // loop_footer
      %s13 = sadd.s32 1, %s9
    $region7: #{vocal_separation_hybrid_forward.9} parent=1 // loop_footer_branch
      %8 = sbr.rel target = $region3
    $region8: #{vocal_separation_hybrid_forward.9} parent=1 // loop_exit
      _

// kernel: vocal_separation_hybrid_forward.11
$region0: #{vocal_separation_hybrid_forward.11}
  #allocation0 [shape = 'u32[]', space=smem, size = 0x4, offset = 0x4, fixed_abs, tag = 'smem constant byte address 0x4 - core index']
  #allocation1 [shape = 'u32[144,128]{1,0:T(1,128)}', space=vmem, size = 0x12000, scoped, tag = 'internal scratch']
  %s0 = inlined_call_operand.vmem [shape: bf16[8,2,256], index: 0, kind: input, shape index: {}]
  %s1 = inlined_call_operand.vmem [shape: bf16[128,256], index: 1, kind: input, shape index: {}]
  %s2 = inlined_call_operand.vmem [shape: f32[128,1], index: 2, kind: input, shape index: {}]
  %s3 = inlined_call_operand.vmem [shape: f32[2,128,8], index: 3, kind: output, shape index: {}]
  %s4 = sld [smem:[#allocation0]]
  $region22: #{vocal_separation_hybrid_forward.11} parent=0
    _
  %s6 = ssub.s32 1, %s4
  %s7 = scalar_select 0, %s6, %s4
  // Predicated region
  $region2: #{vocal_separation_hybrid_forward.11} parent=0 // pred_check
    _
  $region3: #{vocal_separation_hybrid_forward.11} parent=0 // pred_check_branch
    %9 = sbr.rel (0) target = $region5
  $region4: #{vocal_separation_hybrid_forward.11} parent=0 // pred_region
    _
  $region5: #{vocal_separation_hybrid_forward.11} parent=0 // pred_fallthru
    _
  // Predicated region
  $region6: #{vocal_separation_hybrid_forward.11} parent=0 // pred_check
    _
  $region7: #{vocal_separation_hybrid_forward.11} parent=0 // pred_check_branch
    %11 = sbr.rel (0) target = $region9
  $region8: #{vocal_separation_hybrid_forward.11} parent=0 // pred_region
    _
  $region9: #{vocal_separation_hybrid_forward.11} parent=0 // pred_fallthru
    _
  // Predicated region
  $region10: #{vocal_separation_hybrid_forward.11} parent=0 // pred_check
    _
  $region11: #{vocal_separation_hybrid_forward.11} parent=0 // pred_check_branch
    %13 = sbr.rel (0) target = $region13
  $region12: #{vocal_separation_hybrid_forward.11} parent=0 // pred_region
    _
  $region13: #{vocal_separation_hybrid_forward.11} parent=0 // pred_fallthru
    _
  %v15 = vld [vmem:[%s1] sm:$0xff]
  %v16 = vld [vmem:[%s1 + $0x8] sm:$0xff]
  %v17 = vld [vmem:[%s1 + $0x10] sm:$0xff]
  %v18 = vld [vmem:[%s1 + $0x18] sm:$0xff]
  %v19 = vld [vmem:[%s1 + $0x20] sm:$0xff]
  %v20 = vld [vmem:[%s1 + $0x28] sm:$0xff]
  %v21 = vld [vmem:[%s1 + $0x30] sm:$0xff]
  %v22 = vld [vmem:[%s1 + $0x38] sm:$0xff]
  %v23 = vld [vmem:[%s1 + $0x40] sm:$0xff]
  %v24 = vld [vmem:[%s1 + $0x48] sm:$0xff]
  %v25 = vld [vmem:[%s1 + $0x50] sm:$0xff]
  %v26 = vld [vmem:[%s1 + $0x58] sm:$0xff]
  %v27 = vld [vmem:[%s1 + $0x60] sm:$0xff]
  %v28 = vld [vmem:[%s1 + $0x68] sm:$0xff]
  %v29 = vld [vmem:[%s1 + $0x70] sm:$0xff]
  %v30 = vld [vmem:[%s1 + $0x78] sm:$0xff]
  %v31 = vld [vmem:[%s2] sm:$0xff]
  %v32 = vld [vmem:[%s2 + $0x8] sm:$0xff]
  %v33 = vld [vmem:[%s2 + $0x10] sm:$0xff]
  %v34 = vld [vmem:[%s2 + $0x18] sm:$0xff]
  %v35 = vld [vmem:[%s2 + $0x20] sm:$0xff]
  %v36 = vld [vmem:[%s2 + $0x28] sm:$0xff]
  %v37 = vld [vmem:[%s2 + $0x30] sm:$0xff]
  %v38 = vld [vmem:[%s2 + $0x38] sm:$0xff]
  %v39 = vld [vmem:[%s2 + $0x40] sm:$0xff]
  %v40 = vld [vmem:[%s2 + $0x48] sm:$0xff]
  %v41 = vld [vmem:[%s2 + $0x50] sm:$0xff]
  %v42 = vld [vmem:[%s2 + $0x58] sm:$0xff]
  %v43 = vld [vmem:[%s2 + $0x60] sm:$0xff]
  %v44 = vld [vmem:[%s2 + $0x68] sm:$0xff]
  %v45 = vld [vmem:[%s2 + $0x70] sm:$0xff]
  %v46 = vld [vmem:[%s2 + $0x78] sm:$0xff]
  %v47 = vld [vmem:[%s0] sm:$0x3]
  %v48 = vld [vmem:[%s0 + $0x2] sm:$0x3]
  %v49 = vld [vmem:[%s0 + $0x4] sm:$0x3]
  %v50 = vld [vmem:[%s0 + $0x6] sm:$0x3]
  %v51 = vld [vmem:[%s0 + $0x8] sm:$0x3]
  %v52 = vld [vmem:[%s0 + $0xa] sm:$0x3]
  %v53 = vld [vmem:[%s0 + $0xc] sm:$0x3]
  %v54 = vld [vmem:[%s0 + $0xe] sm:$0x3]
  %56 = vset.pattern.permute.xlu0 0
  %57 = vperm.xlu0 %56, %v31
  %v58 = vpop.permute.xlu0 %57
  %61 = vset.pattern.permute.xlu0 0
  %62 = vperm.xlu0 %61, %v32
  %v63 = vpop.permute.xlu0 %62
  %66 = vset.pattern.permute.xlu0 0
  %67 = vperm.xlu0 %66, %v33
  %v68 = vpop.permute.xlu0 %67
  %71 = vset.pattern.permute.xlu0 0
  %72 = vperm.xlu0 %71, %v34
  %v73 = vpop.permute.xlu0 %72
  %76 = vset.pattern.permute.xlu0 0
  %77 = vperm.xlu0 %76, %v35
  %v78 = vpop.permute.xlu0 %77
  %81 = vset.pattern.permute.xlu0 0
  %82 = vperm.xlu0 %81, %v36
  %v83 = vpop.permute.xlu0 %82
  %86 = vset.pattern.permute.xlu0 0
  %87 = vperm.xlu0 %86, %v37
  %v88 = vpop.permute.xlu0 %87
  %91 = vset.pattern.permute.xlu0 0
  %92 = vperm.xlu0 %91, %v38
  %v93 = vpop.permute.xlu0 %92
  %96 = vset.pattern.permute.xlu0 0
  %97 = vperm.xlu0 %96, %v39
  %v98 = vpop.permute.xlu0 %97
  %101 = vset.pattern.permute.xlu0 0
  %102 = vperm.xlu0 %101, %v40
  %v103 = vpop.permute.xlu0 %102
  %106 = vset.pattern.permute.xlu0 0
  %107 = vperm.xlu0 %106, %v41
  %v108 = vpop.permute.xlu0 %107
  %111 = vset.pattern.permute.xlu0 0
  %112 = vperm.xlu0 %111, %v42
  %v113 = vpop.permute.xlu0 %112
  %116 = vset.pattern.permute.xlu0 0
  %117 = vperm.xlu0 %116, %v43
  %v118 = vpop.permute.xlu0 %117
  %121 = vset.pattern.permute.xlu0 0
  %122 = vperm.xlu0 %121, %v44
  %v123 = vpop.permute.xlu0 %122
  %126 = vset.pattern.permute.xlu0 0
  %127 = vperm.xlu0 %126, %v45
  %v128 = vpop.permute.xlu0 %127
  %131 = vset.pattern.permute.xlu0 0
  %132 = vperm.xlu0 %131, %v46
  %v133 = vpop.permute.xlu0 %132
  %v151 = vunpack.c.l.b16 %v15
  %v152 = vunpack.c.h.b16 %v15
  %v153 = vunpack.c.l.b16 %v16
  %v154 = vunpack.c.h.b16 %v16
  %v155 = vunpack.c.l.b16 %v17
  %v156 = vunpack.c.h.b16 %v17
  %v157 = vunpack.c.l.b16 %v18
  %v158 = vunpack.c.h.b16 %v18
  %v159 = vunpack.c.l.b16 %v19
  %v160 = vunpack.c.h.b16 %v19
  %v161 = vunpack.c.l.b16 %v20
  %v162 = vunpack.c.h.b16 %v20
  %v163 = vunpack.c.l.b16 %v21
  %v164 = vunpack.c.h.b16 %v21
  %v165 = vunpack.c.l.b16 %v22
  %v166 = vunpack.c.h.b16 %v22
  %v167 = vunpack.c.l.b16 %v23
  %v168 = vunpack.c.h.b16 %v23
  %v169 = vunpack.c.l.b16 %v24
  %v170 = vunpack.c.h.b16 %v24
  %v171 = vunpack.c.l.b16 %v25
  %v172 = vunpack.c.h.b16 %v25
  %v173 = vunpack.c.l.b16 %v26
  %v174 = vunpack.c.h.b16 %v26
  %v175 = vunpack.c.l.b16 %v27
  %v176 = vunpack.c.h.b16 %v27
  %v177 = vunpack.c.l.b16 %v28
  %v178 = vunpack.c.h.b16 %v28
  %v179 = vunpack.c.l.b16 %v29
  %v180 = vunpack.c.h.b16 %v29
  %v181 = vunpack.c.l.b16 %v30
  %v182 = vunpack.c.h.b16 %v30
  %v183 = vpack.c.b16 %v153, %v151
  %v184 = vpack.c.b16 %v154, %v152
  %v185 = vpack.c.b16 %v157, %v155
  %v186 = vpack.c.b16 %v158, %v156
  %v187 = vpack.c.b16 %v161, %v159
  %v188 = vpack.c.b16 %v162, %v160
  %v189 = vpack.c.b16 %v165, %v163
  %v190 = vpack.c.b16 %v166, %v164
  %v191 = vpack.c.b16 %v169, %v167
  %v192 = vpack.c.b16 %v170, %v168
  %v193 = vpack.c.b16 %v173, %v171
  %v194 = vpack.c.b16 %v174, %v172
  %v195 = vpack.c.b16 %v177, %v175
  %v196 = vpack.c.b16 %v178, %v176
  %v197 = vpack.c.b16 %v181, %v179
  %v198 = vpack.c.b16 %v182, %v180
  %v224 = vunpack.c.l.s4 1966171168
  %v225 = vunpack.c.0.s8 %v224
  %v226 = vlaneseq
  %v227 = vshrl.u32 %v226, 7
  %v228 = vsub.s32 %v225, %v227
  %v229 = vrot.slane %v47, %v228
  %v230 = vcombine.high %v229, %v229
  %v232 = vunpack.c.l.s4 1966171168
  %v233 = vunpack.c.0.s8 %v232
  %v234 = vlaneseq
  %v235 = vshrl.u32 %v234, 7
  %v236 = vsub.s32 %v233, %v235
  %v237 = vrot.slane %v229, %v236
  %v239 = vunpack.c.l.s4 1966171168
  %v240 = vunpack.c.0.s8 %v239
  %v241 = vlaneseq
  %v242 = vshrl.u32 %v241, 7
  %v243 = vsub.s32 %v240, %v242
  %v244 = vrot.slane %v230, %v243
  %v246 = vunpack.c.l.s4 1966171168
  %v247 = vunpack.c.0.s8 %v246
  %v248 = vlaneseq
  %v249 = vshrl.u32 %v248, 7
  %v250 = vsub.s32 %v247, %v249
  %v251 = vrot.slane %v48, %v250
  %v252 = vcombine.high %v251, %v251
  %v254 = vunpack.c.l.s4 1966171168
  %v255 = vunpack.c.0.s8 %v254
  %v256 = vlaneseq
  %v257 = vshrl.u32 %v256, 7
  %v258 = vsub.s32 %v255, %v257
  %v259 = vrot.slane %v251, %v258
  %v261 = vunpack.c.l.s4 1966171168
  %v262 = vunpack.c.0.s8 %v261
  %v263 = vlaneseq
  %v264 = vshrl.u32 %v263, 7
  %v265 = vsub.s32 %v262, %v264
  %v266 = vrot.slane %v252, %v265
  %v268 = vunpack.c.l.s4 1966171168
  %v269 = vunpack.c.0.s8 %v268
  %v270 = vlaneseq
  %v271 = vshrl.u32 %v270, 7
  %v272 = vsub.s32 %v269, %v271
  %v273 = vrot.slane %v49, %v272
  %v274 = vcombine.high %v273, %v273
  %v276 = vunpack.c.l.s4 1966171168
  %v277 = vunpack.c.0.s8 %v276
  %v278 = vlaneseq
  %v279 = vshrl.u32 %v278, 7
  %v280 = vsub.s32 %v277, %v279
  %v281 = vrot.slane %v273, %v280
  %v283 = vunpack.c.l.s4 1966171168
  %v284 = vunpack.c.0.s8 %v283
  %v285 = vlaneseq
  %v286 = vshrl.u32 %v285, 7
  %v287 = vsub.s32 %v284, %v286
  %v288 = vrot.slane %v274, %v287
  %v290 = vunpack.c.l.s4 1966171168
  %v291 = vunpack.c.0.s8 %v290
  %v292 = vlaneseq
  %v293 = vshrl.u32 %v292, 7
  %v294 = vsub.s32 %v291, %v293
  %v295 = vrot.slane %v50, %v294
  %v296 = vcombine.high %v295, %v295
  %v298 = vunpack.c.l.s4 1966171168
  %v299 = vunpack.c.0.s8 %v298
  %v300 = vlaneseq
  %v301 = vshrl.u32 %v300, 7
  %v302 = vsub.s32 %v299, %v301
  %v303 = vrot.slane %v295, %v302
  %v305 = vunpack.c.l.s4 1966171168
  %v306 = vunpack.c.0.s8 %v305
  %v307 = vlaneseq
  %v308 = vshrl.u32 %v307, 7
  %v309 = vsub.s32 %v306, %v308
  %v310 = vrot.slane %v296, %v309
  %v312 = vunpack.c.l.s4 1966171168
  %v313 = vunpack.c.0.s8 %v312
  %v314 = vlaneseq
  %v315 = vshrl.u32 %v314, 7
  %v316 = vsub.s32 %v313, %v315
  %v317 = vrot.slane %v51, %v316
  %v318 = vcombine.high %v317, %v317
  %v320 = vunpack.c.l.s4 1966171168
  %v321 = vunpack.c.0.s8 %v320
  %v322 = vlaneseq
  %v323 = vshrl.u32 %v322, 7
  %v324 = vsub.s32 %v321, %v323
  %v325 = vrot.slane %v317, %v324
  %v327 = vunpack.c.l.s4 1966171168
  %v328 = vunpack.c.0.s8 %v327
  %v329 = vlaneseq
  %v330 = vshrl.u32 %v329, 7
  %v331 = vsub.s32 %v328, %v330
  %v332 = vrot.slane %v318, %v331
  %v334 = vunpack.c.l.s4 1966171168
  %v335 = vunpack.c.0.s8 %v334
  %v336 = vlaneseq
  %v337 = vshrl.u32 %v336, 7
  %v338 = vsub.s32 %v335, %v337
  %v339 = vrot.slane %v52, %v338
  %v340 = vcombine.high %v339, %v339
  %v342 = vunpack.c.l.s4 1966171168
  %v343 = vunpack.c.0.s8 %v342
  %v344 = vlaneseq
  %v345 = vshrl.u32 %v344, 7
  %v346 = vsub.s32 %v343, %v345
  %v347 = vrot.slane %v339, %v346
  %v349 = vunpack.c.l.s4 1966171168
  %v350 = vunpack.c.0.s8 %v349
  %v351 = vlaneseq
  %v352 = vshrl.u32 %v351, 7
  %v353 = vsub.s32 %v350, %v352
  %v354 = vrot.slane %v340, %v353
  %v356 = vunpack.c.l.s4 1966171168
  %v357 = vunpack.c.0.s8 %v356
  %v358 = vlaneseq
  %v359 = vshrl.u32 %v358, 7
  %v360 = vsub.s32 %v357, %v359
  %v361 = vrot.slane %v53, %v360
  %v362 = vcombine.high %v361, %v361
  %v364 = vunpack.c.l.s4 1966171168
  %v365 = vunpack.c.0.s8 %v364
  %v366 = vlaneseq
  %v367 = vshrl.u32 %v366, 7
  %v368 = vsub.s32 %v365, %v367
  %v369 = vrot.slane %v361, %v368
  %v371 = vunpack.c.l.s4 1966171168
  %v372 = vunpack.c.0.s8 %v371
  %v373 = vlaneseq
  %v374 = vshrl.u32 %v373, 7
  %v375 = vsub.s32 %v372, %v374
  %v376 = vrot.slane %v362, %v375
  %v378 = vunpack.c.l.s4 1966171168
  %v379 = vunpack.c.0.s8 %v378
  %v380 = vlaneseq
  %v381 = vshrl.u32 %v380, 7
  %v382 = vsub.s32 %v379, %v381
  %v383 = vrot.slane %v54, %v382
  %v384 = vcombine.high %v383, %v383
  %v386 = vunpack.c.l.s4 1966171168
  %v387 = vunpack.c.0.s8 %v386
  %v388 = vlaneseq
  %v389 = vshrl.u32 %v388, 7
  %v390 = vsub.s32 %v387, %v389
  %v391 = vrot.slane %v383, %v390
  %v393 = vunpack.c.l.s4 1966171168
  %v394 = vunpack.c.0.s8 %v393
  %v395 = vlaneseq
  %v396 = vshrl.u32 %v395, 7
  %v397 = vsub.s32 %v394, %v396
  %v398 = vrot.slane %v384, %v397
  %v399 = vunpack.c.l.b16 %v237
  %v400 = vunpack.c.l.b16 %v244
  %v401 = vunpack.c.l.b16 %v259
  %v402 = vunpack.c.l.b16 %v266
  %v403 = vunpack.c.l.b16 %v281
  %v404 = vunpack.c.l.b16 %v288
  %v405 = vunpack.c.l.b16 %v303
  %v406 = vunpack.c.l.b16 %v310
  %v407 = vunpack.c.l.b16 %v325
  %v408 = vunpack.c.l.b16 %v332
  %v409 = vunpack.c.l.b16 %v347
  %v410 = vunpack.c.l.b16 %v354
  %v411 = vunpack.c.l.b16 %v369
  %v412 = vunpack.c.l.b16 %v376
  %v413 = vunpack.c.l.b16 %v391
  %v414 = vunpack.c.l.b16 %v398
  %v415 = vrot.slane %v401, 7
  %vm416 = vcmask 1041409
  %v417 = vsel %vm416, %v415, %v399
  %v418 = vrot.slane %v403, 6
  %vm419 = vcmask 1042434
  %v420 = vsel %vm419, %v418, %v417
  %v421 = vrot.slane %v405, 5
  %vm422 = vcmask 1043459
  %v423 = vsel %vm422, %v421, %v420
  %v424 = vrot.slane %v407, 4
  %vm425 = vcmask 1044484
  %v426 = vsel %vm425, %v424, %v423
  %v427 = vrot.slane %v409, 3
  %vm428 = vcmask 1045509
  %v429 = vsel %vm428, %v427, %v426
  %v430 = vrot.slane %v411, 2
  %vm431 = vcmask 1046534
  %v432 = vsel %vm431, %v430, %v429
  %v433 = vrot.slane %v413, 1
  %vm434 = vcmask 1047559
  %v435 = vsel %vm434, %v433, %v432
  %v436 = vrot.slane %v402, 7
  %v437 = vsel %vm416, %v436, %v400
  %v438 = vrot.slane %v404, 6
  %v439 = vsel %vm419, %v438, %v437
  %v440 = vrot.slane %v406, 5
  %v441 = vsel %vm422, %v440, %v439
  %v442 = vrot.slane %v408, 4
  %v443 = vsel %vm425, %v442, %v441
  %v444 = vrot.slane %v410, 3
  %v445 = vsel %vm428, %v444, %v443
  %v446 = vrot.slane %v412, 2
  %v447 = vsel %vm431, %v446, %v445
  %v448 = vrot.slane %v414, 1
  %v449 = vsel %vm434, %v448, %v447
  %v450 = vpack.c.b16 %v435, %v435
  %v451 = vpack.c.b16 %v449, %v449
  %454 = vmatprep.subr.bf16.mxu0 %v451
  %455 = vmatpush1.bf16.xpose.msra.mxu0 %v450
  %456 = vmatprep.subr.bf16.mxu0 0
  %457 = vmatpush1.bf16.xpose.msra.mxu0 0
  %458 = vmatprep.subr.bf16.mxu0 0
  %459 = vmatpush1.bf16.xpose.msra.mxu0 0
  %460 = vmatprep.subr.bf16.mxu0 0
  %461 = vmatpush1.bf16.xpose.msra.mxu0 0
  %462 = vmatprep.subr.bf16.mxu0 0
  %463 = vmatpush1.bf16.xpose.msra.mxu0 0
  %464 = vmatprep.subr.bf16.mxu0 0
  %465 = vmatpush1.bf16.xpose.msra.mxu0 0
  %466 = vmatprep.subr.bf16.mxu0 0
  %467 = vmatpush1.bf16.xpose.msra.mxu0 0
  %468 = vmatprep.subr.bf16.mxu0 0
  %469 = vmatpush1.bf16.xpose.msra.mxu0 0
  %470 = vmatprep.subr.bf16.mxu0 0
  %471 = vmatpush1.bf16.xpose.msra.mxu0 0
  %472 = vmatprep.subr.bf16.mxu0 0
  %473 = vmatpush1.bf16.xpose.msra.mxu0 0
  %474 = vmatprep.subr.bf16.mxu0 0
  %475 = vmatpush1.bf16.xpose.msra.mxu0 0
  %476 = vmatprep.subr.bf16.mxu0 0
  %477 = vmatpush1.bf16.xpose.msra.mxu0 0
  %478 = vmatprep.subr.bf16.mxu0 0
  %479 = vmatpush1.bf16.xpose.msra.mxu0 0
  %480 = vmatprep.subr.bf16.mxu0 0
  %481 = vmatpush1.bf16.xpose.msra.mxu0 0
  %482 = vmatprep.subr.bf16.mxu0 0
  %483 = vmatpush1.bf16.xpose.msra.mxu0 0
  %484 = vmatprep.subr.bf16.mxu0 0
  %485 = vmatpush1.bf16.xpose.msra.mxu0 0
  %486 = vmatprep.mubr.bf16.mxu0 %v184
  %487 = vmatmul.mubr.bf16.gmra.mrb[0].mxu0 %v183
  %v488 = vpop.f32.mrb[0].mxu0
  %v489 = vadd.f32 %v58, %v488
  %v490 = vpop.f32.mrb[0].mxu0
  %v491 = vpop.f32.mrb[0].mxu0
  %v492 = vadd.f32 %v63, %v491
  %v493 = vpop.f32.mrb[0].mxu0
  %494 = vmatprep.mubr.bf16.mxu0 %v186
  %495 = vmatmul.mubr.bf16.gmra.mrb[0].mxu0 %v185
  %v496 = vpop.f32.mrb[0].mxu0
  %v497 = vadd.f32 %v68, %v496
  %v498 = vpop.f32.mrb[0].mxu0
  %v499 = vpop.f32.mrb[0].mxu0
  %v500 = vadd.f32 %v73, %v499
  %v501 = vpop.f32.mrb[0].mxu0
  %502 = vmatprep.mubr.bf16.mxu0 %v188
  %503 = vmatmul.mubr.bf16.gmra.mrb[0].mxu0 %v187
  %v504 = vpop.f32.mrb[0].mxu0
  %v505 = vadd.f32 %v78, %v504
  %v506 = vpop.f32.mrb[0].mxu0
  %v507 = vpop.f32.mrb[0].mxu0
  %v508 = vadd.f32 %v83, %v507
  %v509 = vpop.f32.mrb[0].mxu0
  %510 = vmatprep.mubr.bf16.mxu0 %v190
  %511 = vmatmul.mubr.bf16.gmra.mrb[0].mxu0 %v189
  %v512 = vpop.f32.mrb[0].mxu0
  %v513 = vadd.f32 %v88, %v512
  %v514 = vpop.f32.mrb[0].mxu0
  %v515 = vpop.f32.mrb[0].mxu0
  %v516 = vadd.f32 %v93, %v515
  %v517 = vpop.f32.mrb[0].mxu0
  %518 = vmatprep.mubr.bf16.mxu0 %v192
  %519 = vmatmul.mubr.bf16.gmra.mrb[0].mxu0 %v191
  %v520 = vpop.f32.mrb[0].mxu0
  %v521 = vadd.f32 %v98, %v520
  %v522 = vpop.f32.mrb[0].mxu0
  %v523 = vpop.f32.mrb[0].mxu0
  %v524 = vadd.f32 %v103, %v523
  %v525 = vpop.f32.mrb[0].mxu0
  %526 = vmatprep.mubr.bf16.mxu0 %v194
  %527 = vmatmul.mubr.bf16.gmra.mrb[0].mxu0 %v193
  %v528 = vpop.f32.mrb[0].mxu0
  %v529 = vadd.f32 %v108, %v528
  %v530 = vpop.f32.mrb[0].mxu0
  %v531 = vpop.f32.mrb[0].mxu0
  %v532 = vadd.f32 %v113, %v531
  %v533 = vpop.f32.mrb[0].mxu0
  %534 = vmatprep.mubr.bf16.mxu0 %v196
  %535 = vmatmul.mubr.bf16.gmra.mrb[0].mxu0 %v195
  %v536 = vpop.f32.mrb[0].mxu0
  %v537 = vadd.f32 %v118, %v536
  %v538 = vpop.f32.mrb[0].mxu0
  %v539 = vpop.f32.mrb[0].mxu0
  %v540 = vadd.f32 %v123, %v539
  %v541 = vpop.f32.mrb[0].mxu0
  %542 = vmatprep.mubr.bf16.mxu0 %v198
  %543 = vmatmul.mubr.bf16.gmra.mrb[0].mxu0 %v197
  %v544 = vpop.f32.mrb[0].mxu0
  %v545 = vadd.f32 %v128, %v544
  %v546 = vpop.f32.mrb[0].mxu0
  %v547 = vpop.f32.mrb[0].mxu0
  %v548 = vadd.f32 %v133, %v547
  %v549 = vpop.f32.mrb[0].mxu0
  %550 = vdwg.mxu0
  %vm551 = vcmask 64512
  %552 = vst.msk [vmem:[%s3] sm:$0xff] %vm551, %v489
  %553 = vst.msk [vmem:[%s3 + $0x8] sm:$0xff] %vm551, %v492
  %554 = vst.msk [vmem:[%s3 + $0x10] sm:$0xff] %vm551, %v497
  %555 = vst.msk [vmem:[%s3 + $0x18] sm:$0xff] %vm551, %v500
  %556 = vst.msk [vmem:[%s3 + $0x20] sm:$0xff] %vm551, %v505
  %557 = vst.msk [vmem:[%s3 + $0x28] sm:$0xff] %vm551, %v508
  %558 = vst.msk [vmem:[%s3 + $0x30] sm:$0xff] %vm551, %v513
  %559 = vst.msk [vmem:[%s3 + $0x38] sm:$0xff] %vm551, %v516
  %560 = vst.msk [vmem:[%s3 + $0x40] sm:$0xff] %vm551, %v521
  %561 = vst.msk [vmem:[%s3 + $0x48] sm:$0xff] %vm551, %v524
  %562 = vst.msk [vmem:[%s3 + $0x50] sm:$0xff] %vm551, %v529
  %563 = vst.msk [vmem:[%s3 + $0x58] sm:$0xff] %vm551, %v532
  %564 = vst.msk [vmem:[%s3 + $0x60] sm:$0xff] %vm551, %v537
  %565 = vst.msk [vmem:[%s3 + $0x68] sm:$0xff] %vm551, %v540
  %566 = vst.msk [vmem:[%s3 + $0x70] sm:$0xff] %vm551, %v545
  %567 = vst.msk [vmem:[%s3 + $0x78] sm:$0xff] %vm551, %v548
  %v568 = vld [vmem:[%s0] sm:$0x3]
  %v569 = vld [vmem:[%s0 + $0x2] sm:$0x3]
  %v570 = vld [vmem:[%s0 + $0x4] sm:$0x3]
  %v571 = vld [vmem:[%s0 + $0x6] sm:$0x3]
  %v572 = vld [vmem:[%s0 + $0x8] sm:$0x3]
  %v573 = vld [vmem:[%s0 + $0xa] sm:$0x3]
  %v574 = vld [vmem:[%s0 + $0xc] sm:$0x3]
  %v575 = vld [vmem:[%s0 + $0xe] sm:$0x3]
  %v585 = vunpack.c.l.s4 1966171168
  %v586 = vunpack.c.0.s8 %v585
  %v587 = vlaneseq
  %v588 = vshrl.u32 %v587, 7
  %v589 = vsub.s32 %v586, %v588
  %v590 = vrot.slane %v568, %v589
  %v591 = vcombine.high %v590, %v590
  %v593 = vunpack.c.l.s4 1966171168
  %v594 = vunpack.c.0.s8 %v593
  %v595 = vlaneseq
  %v596 = vshrl.u32 %v595, 7
  %v597 = vsub.s32 %v594, %v596
  %v598 = vrot.slane %v590, %v597
  %v600 = vunpack.c.l.s4 1966171168
  %v601 = vunpack.c.0.s8 %v600
  %v602 = vlaneseq
  %v603 = vshrl.u32 %v602, 7
  %v604 = vsub.s32 %v601, %v603
  %v605 = vrot.slane %v591, %v604
  %v607 = vunpack.c.l.s4 1966171168
  %v608 = vunpack.c.0.s8 %v607
  %v609 = vlaneseq
  %v610 = vshrl.u32 %v609, 7
  %v611 = vsub.s32 %v608, %v610
  %v612 = vrot.slane %v569, %v611
  %v613 = vcombine.high %v612, %v612
  %v615 = vunpack.c.l.s4 1966171168
  %v616 = vunpack.c.0.s8 %v615
  %v617 = vlaneseq
  %v618 = vshrl.u32 %v617, 7
  %v619 = vsub.s32 %v616, %v618
  %v620 = vrot.slane %v612, %v619
  %v622 = vunpack.c.l.s4 1966171168
  %v623 = vunpack.c.0.s8 %v622
  %v624 = vlaneseq
  %v625 = vshrl.u32 %v624, 7
  %v626 = vsub.s32 %v623, %v625
  %v627 = vrot.slane %v613, %v626
  %v629 = vunpack.c.l.s4 1966171168
  %v630 = vunpack.c.0.s8 %v629
  %v631 = vlaneseq
  %v632 = vshrl.u32 %v631, 7
  %v633 = vsub.s32 %v630, %v632
  %v634 = vrot.slane %v570, %v633
  %v635 = vcombine.high %v634, %v634
  %v637 = vunpack.c.l.s4 1966171168
  %v638 = vunpack.c.0.s8 %v637
  %v639 = vlaneseq
  %v640 = vshrl.u32 %v639, 7
  %v641 = vsub.s32 %v638, %v640
  %v642 = vrot.slane %v634, %v641
  %v644 = vunpack.c.l.s4 1966171168
  %v645 = vunpack.c.0.s8 %v644
  %v646 = vlaneseq
  %v647 = vshrl.u32 %v646, 7
  %v648 = vsub.s32 %v645, %v647
  %v649 = vrot.slane %v635, %v648
  %v651 = vunpack.c.l.s4 1966171168
  %v652 = vunpack.c.0.s8 %v651
  %v653 = vlaneseq
  %v654 = vshrl.u32 %v653, 7
  %v655 = vsub.s32 %v652, %v654
  %v656 = vrot.slane %v571, %v655
  %v657 = vcombine.high %v656, %v656
  %v659 = vunpack.c.l.s4 1966171168
  %v660 = vunpack.c.0.s8 %v659
  %v661 = vlaneseq
  %v662 = vshrl.u32 %v661, 7
  %v663 = vsub.s32 %v660, %v662
  %v664 = vrot.slane %v656, %v663
  %v666 = vunpack.c.l.s4 1966171168
  %v667 = vunpack.c.0.s8 %v666
  %v668 = vlaneseq
  %v669 = vshrl.u32 %v668, 7
  %v670 = vsub.s32 %v667, %v669
  %v671 = vrot.slane %v657, %v670
  %v673 = vunpack.c.l.s4 1966171168
  %v674 = vunpack.c.0.s8 %v673
  %v675 = vlaneseq
  %v676 = vshrl.u32 %v675, 7
  %v677 = vsub.s32 %v674, %v676
  %v678 = vrot.slane %v572, %v677
  %v679 = vcombine.high %v678, %v678
  %v681 = vunpack.c.l.s4 1966171168
  %v682 = vunpack.c.0.s8 %v681
  %v683 = vlaneseq
  %v684 = vshrl.u32 %v683, 7
  %v685 = vsub.s32 %v682, %v684
  %v686 = vrot.slane %v678, %v685
  %v688 = vunpack.c.l.s4 1966171168
  %v689 = vunpack.c.0.s8 %v688
  %v690 = vlaneseq
  %v691 = vshrl.u32 %v690, 7
  %v692 = vsub.s32 %v689, %v691
  %v693 = vrot.slane %v679, %v692
  %v695 = vunpack.c.l.s4 1966171168
  %v696 = vunpack.c.0.s8 %v695
  %v697 = vlaneseq
  %v698 = vshrl.u32 %v697, 7
  %v699 = vsub.s32 %v696, %v698
  %v700 = vrot.slane %v573, %v699
  %v701 = vcombine.high %v700, %v700
  %v703 = vunpack.c.l.s4 1966171168
  %v704 = vunpack.c.0.s8 %v703
  %v705 = vlaneseq
  %v706 = vshrl.u32 %v705, 7
  %v707 = vsub.s32 %v704, %v706
  %v708 = vrot.slane %v700, %v707
  %v710 = vunpack.c.l.s4 1966171168
  %v711 = vunpack.c.0.s8 %v710
  %v712 = vlaneseq
  %v713 = vshrl.u32 %v712, 7
  %v714 = vsub.s32 %v711, %v713
  %v715 = vrot.slane %v701, %v714
  %v717 = vunpack.c.l.s4 1966171168
  %v718 = vunpack.c.0.s8 %v717
  %v719 = vlaneseq
  %v720 = vshrl.u32 %v719, 7
  %v721 = vsub.s32 %v718, %v720
  %v722 = vrot.slane %v574, %v721
  %v723 = vcombine.high %v722, %v722
  %v725 = vunpack.c.l.s4 1966171168
  %v726 = vunpack.c.0.s8 %v725
  %v727 = vlaneseq
  %v728 = vshrl.u32 %v727, 7
  %v729 = vsub.s32 %v726, %v728
  %v730 = vrot.slane %v722, %v729
  %v732 = vunpack.c.l.s4 1966171168
  %v733 = vunpack.c.0.s8 %v732
  %v734 = vlaneseq
  %v735 = vshrl.u32 %v734, 7
  %v736 = vsub.s32 %v733, %v735
  %v737 = vrot.slane %v723, %v736
  %v739 = vunpack.c.l.s4 1966171168
  %v740 = vunpack.c.0.s8 %v739
  %v741 = vlaneseq
  %v742 = vshrl.u32 %v741, 7
  %v743 = vsub.s32 %v740, %v742
  %v744 = vrot.slane %v575, %v743
  %v745 = vcombine.high %v744, %v744
  %v747 = vunpack.c.l.s4 1966171168
  %v748 = vunpack.c.0.s8 %v747
  %v749 = vlaneseq
  %v750 = vshrl.u32 %v749, 7
  %v751 = vsub.s32 %v748, %v750
  %v752 = vrot.slane %v744, %v751
  %v754 = vunpack.c.l.s4 1966171168
  %v755 = vunpack.c.0.s8 %v754
  %v756 = vlaneseq
  %v757 = vshrl.u32 %v756, 7
  %v758 = vsub.s32 %v755, %v757
  %v759 = vrot.slane %v745, %v758
  %v760 = vunpack.c.l.b16 %v598
  %v761 = vunpack.c.l.b16 %v605
  %v762 = vunpack.c.l.b16 %v620
  %v763 = vunpack.c.l.b16 %v627
  %v764 = vunpack.c.l.b16 %v642
  %v765 = vunpack.c.l.b16 %v649
  %v766 = vunpack.c.l.b16 %v664
  %v767 = vunpack.c.l.b16 %v671
  %v768 = vunpack.c.l.b16 %v686
  %v769 = vunpack.c.l.b16 %v693
  %v770 = vunpack.c.l.b16 %v708
  %v771 = vunpack.c.l.b16 %v715
  %v772 = vunpack.c.l.b16 %v730
  %v773 = vunpack.c.l.b16 %v737
  %v774 = vunpack.c.l.b16 %v752
  %v775 = vunpack.c.l.b16 %v759
  %v776 = vrot.slane %v760, 1
  %v777 = vsel %vm416, %v762, %v776
  %v778 = vrot.slane %v764, 7
  %v779 = vsel %vm419, %v778, %v777
  %v780 = vrot.slane %v766, 6
  %v781 = vsel %vm422, %v780, %v779
  %v782 = vrot.slane %v768, 5
  %v783 = vsel %vm425, %v782, %v781
  %v784 = vrot.slane %v770, 4
  %v785 = vsel %vm428, %v784, %v783
  %v786 = vrot.slane %v772, 3
  %v787 = vsel %vm431, %v786, %v785
  %v788 = vrot.slane %v774, 2
  %v789 = vsel %vm434, %v788, %v787
  %v790 = vrot.slane %v761, 1
  %v791 = vsel %vm416, %v763, %v790
  %v792 = vrot.slane %v765, 7
  %v793 = vsel %vm419, %v792, %v791
  %v794 = vrot.slane %v767, 6
  %v795 = vsel %vm422, %v794, %v793
  %v796 = vrot.slane %v769, 5
  %v797 = vsel %vm425, %v796, %v795
  %v798 = vrot.slane %v771, 4
  %v799 = vsel %vm428, %v798, %v797
  %v800 = vrot.slane %v773, 3
  %v801 = vsel %vm431, %v800, %v799
  %v802 = vrot.slane %v775, 2
  %v803 = vsel %vm434, %v802, %v801
  %v804 = vpack.c.b16 %v789, %v789
  %v805 = vpack.c.b16 %v803, %v803
  %808 = vmatprep.subr.bf16.mxu0 %v805
  %809 = vmatpush1.bf16.xpose.msra.mxu0 %v804
  %810 = vmatprep.subr.bf16.mxu0 0
  %811 = vmatpush1.bf16.xpose.msra.mxu0 0
  %812 = vmatprep.subr.bf16.mxu0 0
  %813 = vmatpush1.bf16.xpose.msra.mxu0 0
  %814 = vmatprep.subr.bf16.mxu0 0
  %815 = vmatpush1.bf16.xpose.msra.mxu0 0
  %816 = vmatprep.subr.bf16.mxu0 0
  %817 = vmatpush1.bf16.xpose.msra.mxu0 0
  %818 = vmatprep.subr.bf16.mxu0 0
  %819 = vmatpush1.bf16.xpose.msra.mxu0 0
  %820 = vmatprep.subr.bf16.mxu0 0
  %821 = vmatpush1.bf16.xpose.msra.mxu0 0
  %822 = vmatprep.subr.bf16.mxu0 0
  %823 = vmatpush1.bf16.xpose.msra.mxu0 0
  %824 = vmatprep.subr.bf16.mxu0 0
  %825 = vmatpush1.bf16.xpose.msra.mxu0 0
  %826 = vmatprep.subr.bf16.mxu0 0
  %827 = vmatpush1.bf16.xpose.msra.mxu0 0
  %828 = vmatprep.subr.bf16.mxu0 0
  %829 = vmatpush1.bf16.xpose.msra.mxu0 0
  %830 = vmatprep.subr.bf16.mxu0 0
  %831 = vmatpush1.bf16.xpose.msra.mxu0 0
  %832 = vmatprep.subr.bf16.mxu0 0
  %833 = vmatpush1.bf16.xpose.msra.mxu0 0
  %834 = vmatprep.subr.bf16.mxu0 0
  %835 = vmatpush1.bf16.xpose.msra.mxu0 0
  %836 = vmatprep.subr.bf16.mxu0 0
  %837 = vmatpush1.bf16.xpose.msra.mxu0 0
  %838 = vmatprep.subr.bf16.mxu0 0
  %839 = vmatpush1.bf16.xpose.msra.mxu0 0
  %840 = vmatprep.mubr.bf16.mxu0 %v184
  %841 = vmatmul.mubr.bf16.gmra.mrb[0].mxu0 %v183
  %v842 = vpop.f32.mrb[0].mxu0
  %v843 = vadd.f32 %v58, %v842
  %v844 = vpop.f32.mrb[0].mxu0
  %v845 = vpop.f32.mrb[0].mxu0
  %v846 = vadd.f32 %v63, %v845
  %v847 = vpop.f32.mrb[0].mxu0
  %848 = vmatprep.mubr.bf16.mxu0 %v186
  %849 = vmatmul.mubr.bf16.gmra.mrb[0].mxu0 %v185
  %v850 = vpop.f32.mrb[0].mxu0
  %v851 = vadd.f32 %v68, %v850
  %v852 = vpop.f32.mrb[0].mxu0
  %v853 = vpop.f32.mrb[0].mxu0
  %v854 = vadd.f32 %v73, %v853
  %v855 = vpop.f32.mrb[0].mxu0
  %856 = vmatprep.mubr.bf16.mxu0 %v188
  %857 = vmatmul.mubr.bf16.gmra.mrb[0].mxu0 %v187
  %v858 = vpop.f32.mrb[0].mxu0
  %v859 = vadd.f32 %v78, %v858
  %v860 = vpop.f32.mrb[0].mxu0
  %v861 = vpop.f32.mrb[0].mxu0
  %v862 = vadd.f32 %v83, %v861
  %v863 = vpop.f32.mrb[0].mxu0
  %864 = vmatprep.mubr.bf16.mxu0 %v190
  %865 = vmatmul.mubr.bf16.gmra.mrb[0].mxu0 %v189
  %v866 = vpop.f32.mrb[0].mxu0
  %v867 = vadd.f32 %v88, %v866
  %v868 = vpop.f32.mrb[0].mxu0
  %v869 = vpop.f32.mrb[0].mxu0
  %v870 = vadd.f32 %v93, %v869
  %v871 = vpop.f32.mrb[0].mxu0
  %872 = vmatprep.mubr.bf16.mxu0 %v192
  %873 = vmatmul.mubr.bf16.gmra.mrb[0].mxu0 %v191
  %v874 = vpop.f32.mrb[0].mxu0
  %v875 = vadd.f32 %v98, %v874
  %v876 = vpop.f32.mrb[0].mxu0
  %v877 = vpop.f32.mrb[0].mxu0
  %v878 = vadd.f32 %v103, %v877
  %v879 = vpop.f32.mrb[0].mxu0
  %880 = vmatprep.mubr.bf16.mxu0 %v194
  %881 = vmatmul.mubr.bf16.gmra.mrb[0].mxu0 %v193
  %v882 = vpop.f32.mrb[0].mxu0
  %v883 = vadd.f32 %v108, %v882
  %v884 = vpop.f32.mrb[0].mxu0
  %v885 = vpop.f32.mrb[0].mxu0
  %v886 = vadd.f32 %v113, %v885
  %v887 = vpop.f32.mrb[0].mxu0
  %888 = vmatprep.mubr.bf16.mxu0 %v196
  %889 = vmatmul.mubr.bf16.gmra.mrb[0].mxu0 %v195
  %v890 = vpop.f32.mrb[0].mxu0
  %v891 = vadd.f32 %v118, %v890
  %v892 = vpop.f32.mrb[0].mxu0
  %v893 = vpop.f32.mrb[0].mxu0
  %v894 = vadd.f32 %v123, %v893
  %v895 = vpop.f32.mrb[0].mxu0
  %896 = vmatprep.mubr.bf16.mxu0 %v198
  %897 = vmatmul.mubr.bf16.gmra.mrb[0].mxu0 %v197
  %v898 = vpop.f32.mrb[0].mxu0
  %v899 = vadd.f32 %v128, %v898
  %v900 = vpop.f32.mrb[0].mxu0
  %v901 = vpop.f32.mrb[0].mxu0
  %v902 = vadd.f32 %v133, %v901
  %v903 = vpop.f32.mrb[0].mxu0
  %904 = vdwg.mxu0
  %s905 = scalar_lea.vmem %s3, 128
  %906 = vst.msk [vmem:[%s905] sm:$0xff] %vm551, %v843
  %907 = vst.msk [vmem:[%s905 + $0x8] sm:$0xff] %vm551, %v846
  %908 = vst.msk [vmem:[%s905 + $0x10] sm:$0xff] %vm551, %v851
  %909 = vst.msk [vmem:[%s905 + $0x18] sm:$0xff] %vm551, %v854
  %910 = vst.msk [vmem:[%s905 + $0x20] sm:$0xff] %vm551, %v859
  %911 = vst.msk [vmem:[%s905 + $0x28] sm:$0xff] %vm551, %v862
  %912 = vst.msk [vmem:[%s905 + $0x30] sm:$0xff] %vm551, %v867
  %913 = vst.msk [vmem:[%s905 + $0x38] sm:$0xff] %vm551, %v870
  %914 = vst.msk [vmem:[%s905 + $0x40] sm:$0xff] %vm551, %v875
  %915 = vst.msk [vmem:[%s905 + $0x48] sm:$0xff] %vm551, %v878
  %916 = vst.msk [vmem:[%s905 + $0x50] sm:$0xff] %vm551, %v883
  %917 = vst.msk [vmem:[%s905 + $0x58] sm:$0xff] %vm551, %v886
  %918 = vst.msk [vmem:[%s905 + $0x60] sm:$0xff] %vm551, %v891
  %919 = vst.msk [vmem:[%s905 + $0x68] sm:$0xff] %vm551, %v894
  %920 = vst.msk [vmem:[%s905 + $0x70] sm:$0xff] %vm551, %v899
  %921 = vst.msk [vmem:[%s905 + $0x78] sm:$0xff] %vm551, %v902
  // Predicated region
  $region14: #{vocal_separation_hybrid_forward.11} parent=0 // pred_check
    _
  $region15: #{vocal_separation_hybrid_forward.11} parent=0 // pred_check_branch
    %923 = sbr.rel (0) target = $region17
  $region16: #{vocal_separation_hybrid_forward.11} parent=0 // pred_region
    _
  $region17: #{vocal_separation_hybrid_forward.11} parent=0 // pred_fallthru
    _
  // Predicated region
  $region18: #{vocal_separation_hybrid_forward.11} parent=0 // pred_check
    _
  $region19: #{vocal_separation_hybrid_forward.11} parent=0 // pred_check_branch
    %925 = sbr.rel (0) target = $region21
  $region20: #{vocal_separation_hybrid_forward.11} parent=0 // pred_region
    _
  $region21: #{vocal_separation_hybrid_forward.11} parent=0 // pred_fallthru
    _

</llo_original>
